<compile_context>
chip_gen: v6e
topology: v6e:2x2x1
jax: 0.10.0
libtpu: 0.0.40
codegen_flags: <defaults>
</compile_context>

<pallas_src>
import numpy as np
import jax
import jax.numpy as jnp
from jax import lax
from jax.experimental import pallas as pl
from jax.experimental.pallas import tpu as pltpu


# ---------------------------------------------------------------------------
# helpers
# ---------------------------------------------------------------------------
def _triple(v):
    return (v, v, v) if isinstance(v, int) else tuple(v)


def _round_up(x, m):
    return (x + m - 1) // m * m


def _conv_out_sizes(spatial, k, s, p):
    return tuple((d + 2 * pp - kk) // ss + 1
                 for d, kk, ss, pp in zip(spatial, k, s, p))


# ---------------------------------------------------------------------------
# XLA-side prep: ONE cheap layout pass (transpose + pad + parity split, bf16).
# No im2col expansion is ever materialized in HBM.
# ---------------------------------------------------------------------------
def _to_parity_grid(x, k, s, p, q_sz):
    """(B,Cin,D,H,W) f32 -> (B, Dq, sd*sh*sw, Hq, Wq, Cin) bf16 with
       xg[b, dq, (pz*sh+py)*sw+px, hq, wq, c]
         == xpad[b, sd*dq+pz, sh*hq+py, sw*wq+px, c]
    where xpad is the conv-zero-padded channels-last input."""
    B, C, D, H, W = x.shape
    kd, kh, kw = k
    sd, sh, sw = s
    pd, ph, pw = p
    Dq, Hq, Wq = q_sz
    xcl = jnp.transpose(x, (0, 2, 3, 4, 1)).astype(jnp.bfloat16)
    pads = ((0, 0),
            (pd, sd * Dq - D - pd),
            (ph, sh * Hq - H - ph),
            (pw, sw * Wq - W - pw),
            (0, 0))
    assert all(lo >= 0 and hi >= 0 for lo, hi in pads), pads
    xcl = jnp.pad(xcl, pads)
    xg = xcl.reshape(B, Dq, sd, Hq, sh, Wq, sw, C)
    xg = jnp.transpose(xg, (0, 1, 2, 4, 6, 3, 5, 7))     # (B,Dq,pz,py,px,Hq,Wq,C)
    return xg.reshape(B, Dq, sd * sh * sw, Hq, Wq, C)


# ---------------------------------------------------------------------------
# fused conv (shifted matmuls) + bias + LayerNorm Pallas kernel
# ---------------------------------------------------------------------------
def _make_patch_embed_kernel(k, s, out_hw, cin, cout, n_pad, eps, nslab):
    kd, kh, kw = k
    sd, sh, sw = s
    Ho, Wo = out_hw
    rows = Ho * Wo
    inv_c = 1.0 / float(cout)

    def kernel(*refs):
        x_refs = refs[:nslab]                       # parity-depth slabs in VMEM
        w_ref, bias_ref, g_ref, bt_ref, o_ref = refs[nslab:]

        # conv as a sum of k^3 shifted (rows, Cin) @ (Cin, n_pad) MXU matmuls,
        # f32 accumulation; every slice below is a static, stride-1 window.
        acc = jnp.zeros((rows, n_pad), jnp.float32)
        for a in range(kd):
            src = x_refs[a // sd]
            pz = a % sd
            for bh in range(kh):
                py, dy = bh % sh, bh // sh
                for cw in range(kw):
                    px, dx = cw % sw, cw // sw
                    koff = (a * kh + bh) * kw + cw
                    par = (pz * sh + py) * sw + px
                    v = src[par, dy:dy + Ho, dx:dx + Wo, :]
                    acc = acc + jnp.dot(v.reshape(rows, cin), w_ref[koff],
                                        preferred_element_type=jnp.float32)

        # fused bias + LayerNorm epilogue.  Padded lanes of acc are exactly 0
        # (zero weight columns / zero bias), so plain sums / cout are exact.
        acc = acc + bias_ref[...]
        mean = jnp.sum(acc, axis=-1, keepdims=True) * inv_c
        ex2 = jnp.sum(acc * acc, axis=-1, keepdims=True) * inv_c
        var = jnp.maximum(ex2 - mean * mean, 0.0)
        y = (acc[:, :cout] - mean) * lax.rsqrt(var + eps)
        o_ref[...] = (y * g_ref[...] + bt_ref[...]).astype(o_ref.dtype)

    return kernel


# ---------------------------------------------------------------------------
# PatchEmbed module (weights pre-packed once, outside the jitted forward)
# ---------------------------------------------------------------------------
class PatchEmbedTPU:
    """JAX/Pallas port of PatchEmbed (Conv3d proj + flatten + LayerNorm)."""

    def __init__(self, conv_w, conv_b, ln_w, ln_b, stride, eps=1e-5,
                 out_dtype=jnp.bfloat16):
        cout, cin, kd, kh, kw = (int(d) for d in conv_w.shape)
        self.cout, self.cin = cout, cin
        self.k = (kd, kh, kw)
        self.stride = _triple(stride)
        self.pad = ((kd - 1) // 2, (kh - 1) // 2, (kw - 1) // 2)
        self.eps = float(eps)
        self.out_dtype = out_dtype
        # pad output channels to 128 lanes for the matmul/accumulator only;
        # HBM writeback stays at the true `cout` width (bf16).
        self.n_pad = _round_up(cout, 128)

        koffs = kd * kh * kw
        w = conv_w.astype(jnp.float32).transpose(2, 3, 4, 1, 0)  # (kd,kh,kw,Cin,Cout)
        w = w.reshape(koffs, cin, cout)
        self.w = jnp.pad(w, ((0, 0), (0, 0), (0, self.n_pad - cout))
                         ).astype(jnp.bfloat16)
        self.bias = jnp.pad(conv_b.astype(jnp.float32),
                            (0, self.n_pad - cout)).reshape(1, self.n_pad)
        self.gamma = ln_w.astype(jnp.float32).reshape(1, cout)
        self.beta = ln_b.astype(jnp.float32).reshape(1, cout)

    def __call__(self, x):
        B, cin, D, H, W = x.shape
        assert cin == self.cin
        kd, kh, kw = self.k
        sd, sh, sw = self.stride
        Do, Ho, Wo = _conv_out_sizes((D, H, W), self.k, self.stride, self.pad)
        nslab = (kd - 1) // sd + 1                 # depth slabs needed per step
        Dq = Do + (kd - 1) // sd
        Hq = Ho + (kh - 1) // sh
        Wq = Wo + (kw - 1) // sw
        P = sd * sh * sw
        rows = Ho * Wo
        koffs = kd * kh * kw

        xg = _to_parity_grid(x, self.k, self.stride, self.pad, (Dq, Hq, Wq))

        # depth halo: pass xg `nslab` times with blocked index maps d, d+1, ...
        def x_spec(j):
            return pl.BlockSpec((None, None, P, Hq, Wq, cin),
                                lambda b, d, j=j: (b, d + j, 0, 0, 0, 0))

        in_specs = [x_spec(j) for j in range(nslab)] + [
            pl.BlockSpec((koffs, cin, self.n_pad), lambda b, d: (0, 0, 0)),
            pl.BlockSpec((1, self.n_pad), lambda b, d: (0, 0)),
            pl.BlockSpec((1, self.cout), lambda b, d: (0, 0)),
            pl.BlockSpec((1, self.cout), lambda b, d: (0, 0)),
        ]
        out_spec = pl.BlockSpec((None, None, rows, self.cout),
                                lambda b, d: (b, d, 0, 0))

        kernel = _make_patch_embed_kernel(self.k, self.stride, (Ho, Wo), cin,
                                          self.cout, self.n_pad, self.eps,
                                          nslab)

        m_total = B * Do * rows
        itemsize = np.dtype(self.out_dtype).itemsize
        cost = pl.CostEstimate(
            flops=2 * m_total * koffs * cin * self.n_pad,
            transcendentals=m_total,
            bytes_accessed=int(nslab * xg.size * 2 + self.w.size * 2
                               + m_total * self.cout * itemsize))

        out = pl.pallas_call(
            kernel,
            out_shape=jax.ShapeDtypeStruct((B, Do, rows, self.cout),
                                           self.out_dtype),
            grid=(B, Do),
            in_specs=in_specs,
            out_specs=out_spec,
            compiler_params=pltpu.CompilerParams(
                dimension_semantics=("parallel", "parallel")),
            cost_estimate=cost,
        )(*([xg] * nslab), self.w, self.bias, self.gamma, self.beta)

        tokens = out.reshape(B, Do * rows, self.cout)     # free (contiguous)
        return tokens, (Do, Ho, Wo)


# ---------------------------------------------------------------------------
# plain-JAX reference (f32) for a sanity check
# ---------------------------------------------------------------------------
def _reference_forward(conv_w, conv_b, ln_w, ln_b, x, stride, eps=1e-5):
    pad = tuple((int(k) - 1) // 2 for k in conv_w.shape[2:])
    y = lax.conv_general_dilated(
        x.astype(jnp.float32), conv_w.astype(jnp.float32),
        window_strides=_triple(stride),
        padding=[(p, p) for p in pad],
        dimension_numbers=("NCDHW", "OIDHW", "NCDHW"),
        precision=lax.Precision.HIGHEST)
    y = y + conv_b.reshape(1, -1, 1, 1, 1)
    B, C = y.shape[:2]
    size = y.shape[2:]
    tokens = y.reshape(B, C, -1).transpose(0, 2, 1)
    mean = tokens.mean(-1, keepdims=True)
    var = ((tokens - mean) ** 2).mean(-1, keepdims=True)
    tokens = (tokens - mean) * lax.rsqrt(var + eps) * ln_w + ln_b
    return tokens, size


# ---------------------------------------------------------------------------
if __name__ == "__main__":
    key = jax.random.PRNGKey(0)
    B, Cin, Cout = 2, 32, 48
    D = H = W = 16
    patch_size, stride = 3, 2

    k_x, k_w, k_b = jax.random.split(key, 3)
    x = jax.random.normal(k_x, (B, Cin, D, H, W), jnp.float32)
    fan_out = patch_size ** 3 * Cout
    conv_w = jax.random.normal(
        k_w, (Cout, Cin, patch_size, patch_size, patch_size),
        jnp.float32) * (2.0 / fan_out) ** 0.5
    conv_b = 0.01 * jax.random.normal(k_b, (Cout,), jnp.float32)
    ln_w = jnp.ones((Cout,), jnp.float32)
    ln_b = jnp.zeros((Cout,), jnp.float32)

    pe = PatchEmbedTPU(conv_w, conv_b, ln_w, ln_b, stride=stride)
    fwd = jax.jit(pe.__call__)

    tokens, size = fwd(x)
    jax.block_until_ready(tokens)
    size = tuple(int(s) for s in size)

    n_tok = (D // stride) * (H // stride) * (W // stride)
    assert tokens.shape == (B, n_tok, Cout), tokens.shape
    assert size == (D // stride, H // stride, W // stride), size
    assert bool(jnp.all(jnp.isfinite(tokens.astype(jnp.float32))))

    ref_tokens, _ = _reference_forward(conv_w, conv_b, ln_w, ln_b, x, stride)
    max_err = float(jnp.max(jnp.abs(tokens.astype(jnp.float32) - ref_tokens)))
    assert max_err < 0.2, f"max abs err vs f32 reference: {max_err}"

    print("KERNEL_OK")
</pallas_src>

<mosaic_0001>
module attributes {stable_mosaic.version = 11 : i64} {
  func.func @kernel(%arg0: i32, %arg1: i32, %arg2: memref<1x1x8x9x9x32xbf16, #tpu.memory_space<vmem>>, %arg3: memref<1x1x8x9x9x32xbf16, #tpu.memory_space<vmem>>, %arg4: memref<27x32x128xbf16, #tpu.memory_space<vmem>>, %arg5: memref<1x128xf32, #tpu.memory_space<vmem>>, %arg6: memref<1x48xf32, #tpu.memory_space<vmem>>, %arg7: memref<1x48xf32, #tpu.memory_space<vmem>>, %arg8: memref<1x1x64x48xbf16, #tpu.memory_space<vmem>>) attributes {dimension_semantics = [#tpu.dimension_semantics<parallel>, #tpu.dimension_semantics<parallel>], iteration_bounds = array<i64: 2, 8>, scalar_prefetch = 0 : i64, scratch_operands = 0 : i64, tpu.core_type = #tpu.core_type<tc>, window_params = [{transform_indices = @transform_0, window_bounds = array<i64: 1, 1, 8, 9, 9, 32>}, {transform_indices = @transform_1, window_bounds = array<i64: 1, 1, 8, 9, 9, 32>}, {pipeline_mode = #tpu.pipeline_mode<synchronous>, transform_indices = @transform_2, window_bounds = array<i64: 27, 32, 128>}, {pipeline_mode = #tpu.pipeline_mode<synchronous>, transform_indices = @transform_3, window_bounds = array<i64: 1, 128>}, {pipeline_mode = #tpu.pipeline_mode<synchronous>, transform_indices = @transform_4, window_bounds = array<i64: 1, 48>}, {pipeline_mode = #tpu.pipeline_mode<synchronous>, transform_indices = @transform_5, window_bounds = array<i64: 1, 48>}, {transform_indices = @transform_6, window_bounds = array<i64: 1, 1, 64, 48>}]} {
    %cst = arith.constant 0.000000e+00 : f32
    %0 = vector.broadcast %cst : f32 to vector<64x128xf32>
    %c0 = arith.constant 0 : index
    %c0_0 = arith.constant 0 : index
    %c0_1 = arith.constant 0 : index
    %c0_2 = arith.constant 0 : index
    %c0_3 = arith.constant 0 : index
    %c0_4 = arith.constant 0 : index
    %1 = vector.load %arg2[%c0, %c0_0, %c0_1, %c0_2, %c0_3, %c0_4] : memref<1x1x8x9x9x32xbf16, #tpu.memory_space<vmem>>, vector<1x1x1x8x8x32xbf16>
    %2 = vector.shape_cast %1 : vector<1x1x1x8x8x32xbf16> to vector<8x8x32xbf16>
    %3 = vector.shape_cast %2 : vector<8x8x32xbf16> to vector<64x32xbf16>
    %c0_5 = arith.constant 0 : index
    %c0_6 = arith.constant 0 : index
    %c0_7 = arith.constant 0 : index
    %4 = vector.load %arg4[%c0_5, %c0_6, %c0_7] : memref<27x32x128xbf16, #tpu.memory_space<vmem>>, vector<1x32x128xbf16>
    %5 = vector.shape_cast %4 : vector<1x32x128xbf16> to vector<32x128xbf16>
    %cst_8 = arith.constant dense<0.000000e+00> : vector<64x128xf32>
    %6 = tpu.matmul %3, %5, %cst_8 {dimension_numbers = #tpu.dot_dimension_numbers<[1], [0], [0], [1], [0, 0, 1, 1], [], []>} : vector<64x32xbf16>, vector<32x128xbf16>, vector<64x128xf32> -> vector<64x128xf32>
    %7 = arith.addf %0, %6 : vector<64x128xf32>
    %c0_9 = arith.constant 0 : index
    %c0_10 = arith.constant 0 : index
    %c1 = arith.constant 1 : index
    %c0_11 = arith.constant 0 : index
    %c0_12 = arith.constant 0 : index
    %c0_13 = arith.constant 0 : index
    %8 = vector.load %arg2[%c0_9, %c0_10, %c1, %c0_11, %c0_12, %c0_13] : memref<1x1x8x9x9x32xbf16, #tpu.memory_space<vmem>>, vector<1x1x1x8x8x32xbf16>
    %9 = vector.shape_cast %8 : vector<1x1x1x8x8x32xbf16> to vector<8x8x32xbf16>
    %10 = vector.shape_cast %9 : vector<8x8x32xbf16> to vector<64x32xbf16>
    %c1_14 = arith.constant 1 : index
    %c0_15 = arith.constant 0 : index
    %c0_16 = arith.constant 0 : index
    %11 = vector.load %arg4[%c1_14, %c0_15, %c0_16] : memref<27x32x128xbf16, #tpu.memory_space<vmem>>, vector<1x32x128xbf16>
    %12 = vector.shape_cast %11 : vector<1x32x128xbf16> to vector<32x128xbf16>
    %cst_17 = arith.constant dense<0.000000e+00> : vector<64x128xf32>
    %13 = tpu.matmul %10, %12, %cst_17 {dimension_numbers = #tpu.dot_dimension_numbers<[1], [0], [0], [1], [0, 0, 1, 1], [], []>} : vector<64x32xbf16>, vector<32x128xbf16>, vector<64x128xf32> -> vector<64x128xf32>
    %14 = arith.addf %7, %13 : vector<64x128xf32>
    %c0_18 = arith.constant 0 : index
    %c0_19 = arith.constant 0 : index
    %c0_20 = arith.constant 0 : index
    %c0_21 = arith.constant 0 : index
    %c1_22 = arith.constant 1 : index
    %c0_23 = arith.constant 0 : index
    %15 = vector.load %arg2[%c0_18, %c0_19, %c0_20, %c0_21, %c1_22, %c0_23] : memref<1x1x8x9x9x32xbf16, #tpu.memory_space<vmem>>, vector<1x1x1x8x8x32xbf16>
    %16 = vector.shape_cast %15 : vector<1x1x1x8x8x32xbf16> to vector<8x8x32xbf16>
    %17 = vector.shape_cast %16 : vector<8x8x32xbf16> to vector<64x32xbf16>
    %c2 = arith.constant 2 : index
    %c0_24 = arith.constant 0 : index
    %c0_25 = arith.constant 0 : index
    %18 = vector.load %arg4[%c2, %c0_24, %c0_25] : memref<27x32x128xbf16, #tpu.memory_space<vmem>>, vector<1x32x128xbf16>
    %19 = vector.shape_cast %18 : vector<1x32x128xbf16> to vector<32x128xbf16>
    %cst_26 = arith.constant dense<0.000000e+00> : vector<64x128xf32>
    %20 = tpu.matmul %17, %19, %cst_26 {dimension_numbers = #tpu.dot_dimension_numbers<[1], [0], [0], [1], [0, 0, 1, 1], [], []>} : vector<64x32xbf16>, vector<32x128xbf16>, vector<64x128xf32> -> vector<64x128xf32>
    %21 = arith.addf %14, %20 : vector<64x128xf32>
    %c0_27 = arith.constant 0 : index
    %c0_28 = arith.constant 0 : index
    %c2_29 = arith.constant 2 : index
    %c0_30 = arith.constant 0 : index
    %c0_31 = arith.constant 0 : index
    %c0_32 = arith.constant 0 : index
    %22 = vector.load %arg2[%c0_27, %c0_28, %c2_29, %c0_30, %c0_31, %c0_32] : memref<1x1x8x9x9x32xbf16, #tpu.memory_space<vmem>>, vector<1x1x1x8x8x32xbf16>
    %23 = vector.shape_cast %22 : vector<1x1x1x8x8x32xbf16> to vector<8x8x32xbf16>
    %24 = vector.shape_cast %23 : vector<8x8x32xbf16> to vector<64x32xbf16>
    %c3 = arith.constant 3 : index
    %c0_33 = arith.constant 0 : index
    %c0_34 = arith.constant 0 : index
    %25 = vector.load %arg4[%c3, %c0_33, %c0_34] : memref<27x32x128xbf16, #tpu.memory_space<vmem>>, vector<1x32x128xbf16>
    %26 = vector.shape_cast %25 : vector<1x32x128xbf16> to vector<32x128xbf16>
    %cst_35 = arith.constant dense<0.000000e+00> : vector<64x128xf32>
    %27 = tpu.matmul %24, %26, %cst_35 {dimension_numbers = #tpu.dot_dimension_numbers<[1], [0], [0], [1], [0, 0, 1, 1], [], []>} : vector<64x32xbf16>, vector<32x128xbf16>, vector<64x128xf32> -> vector<64x128xf32>
    %28 = arith.addf %21, %27 : vector<64x128xf32>
    %c0_36 = arith.constant 0 : index
    %c0_37 = arith.constant 0 : index
    %c3_38 = arith.constant 3 : index
    %c0_39 = arith.constant 0 : index
    %c0_40 = arith.constant 0 : index
    %c0_41 = arith.constant 0 : index
    %29 = vector.load %arg2[%c0_36, %c0_37, %c3_38, %c0_39, %c0_40, %c0_41] : memref<1x1x8x9x9x32xbf16, #tpu.memory_space<vmem>>, vector<1x1x1x8x8x32xbf16>
    %30 = vector.shape_cast %29 : vector<1x1x1x8x8x32xbf16> to vector<8x8x32xbf16>
    %31 = vector.shape_cast %30 : vector<8x8x32xbf16> to vector<64x32xbf16>
    %c4 = arith.constant 4 : index
    %c0_42 = arith.constant 0 : index
    %c0_43 = arith.constant 0 : index
    %32 = vector.load %arg4[%c4, %c0_42, %c0_43] : memref<27x32x128xbf16, #tpu.memory_space<vmem>>, vector<1x32x128xbf16>
    %33 = vector.shape_cast %32 : vector<1x32x128xbf16> to vector<32x128xbf16>
    %cst_44 = arith.constant dense<0.000000e+00> : vector<64x128xf32>
    %34 = tpu.matmul %31, %33, %cst_44 {dimension_numbers = #tpu.dot_dimension_numbers<[1], [0], [0], [1], [0, 0, 1, 1], [], []>} : vector<64x32xbf16>, vector<32x128xbf16>, vector<64x128xf32> -> vector<64x128xf32>
    %35 = arith.addf %28, %34 : vector<64x128xf32>
    %c0_45 = arith.constant 0 : index
    %c0_46 = arith.constant 0 : index
    %c2_47 = arith.constant 2 : index
    %c0_48 = arith.constant 0 : index
    %c1_49 = arith.constant 1 : index
    %c0_50 = arith.constant 0 : index
    %36 = vector.load %arg2[%c0_45, %c0_46, %c2_47, %c0_48, %c1_49, %c0_50] : memref<1x1x8x9x9x32xbf16, #tpu.memory_space<vmem>>, vector<1x1x1x8x8x32xbf16>
    %37 = vector.shape_cast %36 : vector<1x1x1x8x8x32xbf16> to vector<8x8x32xbf16>
    %38 = vector.shape_cast %37 : vector<8x8x32xbf16> to vector<64x32xbf16>
    %c5 = arith.constant 5 : index
    %c0_51 = arith.constant 0 : index
    %c0_52 = arith.constant 0 : index
    %39 = vector.load %arg4[%c5, %c0_51, %c0_52] : memref<27x32x128xbf16, #tpu.memory_space<vmem>>, vector<1x32x128xbf16>
    %40 = vector.shape_cast %39 : vector<1x32x128xbf16> to vector<32x128xbf16>
    %cst_53 = arith.constant dense<0.000000e+00> : vector<64x128xf32>
    %41 = tpu.matmul %38, %40, %cst_53 {dimension_numbers = #tpu.dot_dimension_numbers<[1], [0], [0], [1], [0, 0, 1, 1], [], []>} : vector<64x32xbf16>, vector<32x128xbf16>, vector<64x128xf32> -> vector<64x128xf32>
    %42 = arith.addf %35, %41 : vector<64x128xf32>
    %c0_54 = arith.constant 0 : index
    %c0_55 = arith.constant 0 : index
    %c0_56 = arith.constant 0 : index
    %c1_57 = arith.constant 1 : index
    %c0_58 = arith.constant 0 : index
    %c0_59 = arith.constant 0 : index
    %43 = vector.load %arg2[%c0_54, %c0_55, %c0_56, %c1_57, %c0_58, %c0_59] : memref<1x1x8x9x9x32xbf16, #tpu.memory_space<vmem>>, vector<1x1x1x8x8x32xbf16>
    %44 = vector.shape_cast %43 : vector<1x1x1x8x8x32xbf16> to vector<8x8x32xbf16>
    %45 = vector.shape_cast %44 : vector<8x8x32xbf16> to vector<64x32xbf16>
    %c6 = arith.constant 6 : index
    %c0_60 = arith.constant 0 : index
    %c0_61 = arith.constant 0 : index
    %46 = vector.load %arg4[%c6, %c0_60, %c0_61] : memref<27x32x128xbf16, #tpu.memory_space<vmem>>, vector<1x32x128xbf16>
    %47 = vector.shape_cast %46 : vector<1x32x128xbf16> to vector<32x128xbf16>
    %cst_62 = arith.constant dense<0.000000e+00> : vector<64x128xf32>
    %48 = tpu.matmul %45, %47, %cst_62 {dimension_numbers = #tpu.dot_dimension_numbers<[1], [0], [0], [1], [0, 0, 1, 1], [], []>} : vector<64x32xbf16>, vector<32x128xbf16>, vector<64x128xf32> -> vector<64x128xf32>
    %49 = arith.addf %42, %48 : vector<64x128xf32>
    %c0_63 = arith.constant 0 : index
    %c0_64 = arith.constant 0 : index
    %c1_65 = arith.constant 1 : index
    %c1_66 = arith.constant 1 : index
    %c0_67 = arith.constant 0 : index
    %c0_68 = arith.constant 0 : index
    %50 = vector.load %arg2[%c0_63, %c0_64, %c1_65, %c1_66, %c0_67, %c0_68] : memref<1x1x8x9x9x32xbf16, #tpu.memory_space<vmem>>, vector<1x1x1x8x8x32xbf16>
    %51 = vector.shape_cast %50 : vector<1x1x1x8x8x32xbf16> to vector<8x8x32xbf16>
    %52 = vector.shape_cast %51 : vector<8x8x32xbf16> to vector<64x32xbf16>
    %c7 = arith.constant 7 : index
    %c0_69 = arith.constant 0 : index
    %c0_70 = arith.constant 0 : index
    %53 = vector.load %arg4[%c7, %c0_69, %c0_70] : memref<27x32x128xbf16, #tpu.memory_space<vmem>>, vector<1x32x128xbf16>
    %54 = vector.shape_cast %53 : vector<1x32x128xbf16> to vector<32x128xbf16>
    %cst_71 = arith.constant dense<0.000000e+00> : vector<64x128xf32>
    %55 = tpu.matmul %52, %54, %cst_71 {dimension_numbers = #tpu.dot_dimension_numbers<[1], [0], [0], [1], [0, 0, 1, 1], [], []>} : vector<64x32xbf16>, vector<32x128xbf16>, vector<64x128xf32> -> vector<64x128xf32>
    %56 = arith.addf %49, %55 : vector<64x128xf32>
    %c0_72 = arith.constant 0 : index
    %c0_73 = arith.constant 0 : index
    %c0_74 = arith.constant 0 : index
    %c1_75 = arith.constant 1 : index
    %c1_76 = arith.constant 1 : index
    %c0_77 = arith.constant 0 : index
    %57 = vector.load %arg2[%c0_72, %c0_73, %c0_74, %c1_75, %c1_76, %c0_77] : memref<1x1x8x9x9x32xbf16, #tpu.memory_space<vmem>>, vector<1x1x1x8x8x32xbf16>
    %58 = vector.shape_cast %57 : vector<1x1x1x8x8x32xbf16> to vector<8x8x32xbf16>
    %59 = vector.shape_cast %58 : vector<8x8x32xbf16> to vector<64x32xbf16>
    %c8 = arith.constant 8 : index
    %c0_78 = arith.constant 0 : index
    %c0_79 = arith.constant 0 : index
    %60 = vector.load %arg4[%c8, %c0_78, %c0_79] : memref<27x32x128xbf16, #tpu.memory_space<vmem>>, vector<1x32x128xbf16>
    %61 = vector.shape_cast %60 : vector<1x32x128xbf16> to vector<32x128xbf16>
    %cst_80 = arith.constant dense<0.000000e+00> : vector<64x128xf32>
    %62 = tpu.matmul %59, %61, %cst_80 {dimension_numbers = #tpu.dot_dimension_numbers<[1], [0], [0], [1], [0, 0, 1, 1], [], []>} : vector<64x32xbf16>, vector<32x128xbf16>, vector<64x128xf32> -> vector<64x128xf32>
    %63 = arith.addf %56, %62 : vector<64x128xf32>
    %c0_81 = arith.constant 0 : index
    %c0_82 = arith.constant 0 : index
    %c4_83 = arith.constant 4 : index
    %c0_84 = arith.constant 0 : index
    %c0_85 = arith.constant 0 : index
    %c0_86 = arith.constant 0 : index
    %64 = vector.load %arg2[%c0_81, %c0_82, %c4_83, %c0_84, %c0_85, %c0_86] : memref<1x1x8x9x9x32xbf16, #tpu.memory_space<vmem>>, vector<1x1x1x8x8x32xbf16>
    %65 = vector.shape_cast %64 : vector<1x1x1x8x8x32xbf16> to vector<8x8x32xbf16>
    %66 = vector.shape_cast %65 : vector<8x8x32xbf16> to vector<64x32xbf16>
    %c9 = arith.constant 9 : index
    %c0_87 = arith.constant 0 : index
    %c0_88 = arith.constant 0 : index
    %67 = vector.load %arg4[%c9, %c0_87, %c0_88] : memref<27x32x128xbf16, #tpu.memory_space<vmem>>, vector<1x32x128xbf16>
    %68 = vector.shape_cast %67 : vector<1x32x128xbf16> to vector<32x128xbf16>
    %cst_89 = arith.constant dense<0.000000e+00> : vector<64x128xf32>
    %69 = tpu.matmul %66, %68, %cst_89 {dimension_numbers = #tpu.dot_dimension_numbers<[1], [0], [0], [1], [0, 0, 1, 1], [], []>} : vector<64x32xbf16>, vector<32x128xbf16>, vector<64x128xf32> -> vector<64x128xf32>
    %70 = arith.addf %63, %69 : vector<64x128xf32>
    %c0_90 = arith.constant 0 : index
    %c0_91 = arith.constant 0 : index
    %c5_92 = arith.constant 5 : index
    %c0_93 = arith.constant 0 : index
    %c0_94 = arith.constant 0 : index
    %c0_95 = arith.constant 0 : index
    %71 = vector.load %arg2[%c0_90, %c0_91, %c5_92, %c0_93, %c0_94, %c0_95] : memref<1x1x8x9x9x32xbf16, #tpu.memory_space<vmem>>, vector<1x1x1x8x8x32xbf16>
    %72 = vector.shape_cast %71 : vector<1x1x1x8x8x32xbf16> to vector<8x8x32xbf16>
    %73 = vector.shape_cast %72 : vector<8x8x32xbf16> to vector<64x32xbf16>
    %c10 = arith.constant 10 : index
    %c0_96 = arith.constant 0 : index
    %c0_97 = arith.constant 0 : index
    %74 = vector.load %arg4[%c10, %c0_96, %c0_97] : memref<27x32x128xbf16, #tpu.memory_space<vmem>>, vector<1x32x128xbf16>
    %75 = vector.shape_cast %74 : vector<1x32x128xbf16> to vector<32x128xbf16>
    %cst_98 = arith.constant dense<0.000000e+00> : vector<64x128xf32>
    %76 = tpu.matmul %73, %75, %cst_98 {dimension_numbers = #tpu.dot_dimension_numbers<[1], [0], [0], [1], [0, 0, 1, 1], [], []>} : vector<64x32xbf16>, vector<32x128xbf16>, vector<64x128xf32> -> vector<64x128xf32>
    %77 = arith.addf %70, %76 : vector<64x128xf32>
    %c0_99 = arith.constant 0 : index
    %c0_100 = arith.constant 0 : index
    %c4_101 = arith.constant 4 : index
    %c0_102 = arith.constant 0 : index
    %c1_103 = arith.constant 1 : index
    %c0_104 = arith.constant 0 : index
    %78 = vector.load %arg2[%c0_99, %c0_100, %c4_101, %c0_102, %c1_103, %c0_104] : memref<1x1x8x9x9x32xbf16, #tpu.memory_space<vmem>>, vector<1x1x1x8x8x32xbf16>
    %79 = vector.shape_cast %78 : vector<1x1x1x8x8x32xbf16> to vector<8x8x32xbf16>
    %80 = vector.shape_cast %79 : vector<8x8x32xbf16> to vector<64x32xbf16>
    %c11 = arith.constant 11 : index
    %c0_105 = arith.constant 0 : index
    %c0_106 = arith.constant 0 : index
    %81 = vector.load %arg4[%c11, %c0_105, %c0_106] : memref<27x32x128xbf16, #tpu.memory_space<vmem>>, vector<1x32x128xbf16>
    %82 = vector.shape_cast %81 : vector<1x32x128xbf16> to vector<32x128xbf16>
    %cst_107 = arith.constant dense<0.000000e+00> : vector<64x128xf32>
    %83 = tpu.matmul %80, %82, %cst_107 {dimension_numbers = #tpu.dot_dimension_numbers<[1], [0], [0], [1], [0, 0, 1, 1], [], []>} : vector<64x32xbf16>, vector<32x128xbf16>, vector<64x128xf32> -> vector<64x128xf32>
    %84 = arith.addf %77, %83 : vector<64x128xf32>
    %c0_108 = arith.constant 0 : index
    %c0_109 = arith.constant 0 : index
    %c6_110 = arith.constant 6 : index
    %c0_111 = arith.constant 0 : index
    %c0_112 = arith.constant 0 : index
    %c0_113 = arith.constant 0 : index
    %85 = vector.load %arg2[%c0_108, %c0_109, %c6_110, %c0_111, %c0_112, %c0_113] : memref<1x1x8x9x9x32xbf16, #tpu.memory_space<vmem>>, vector<1x1x1x8x8x32xbf16>
    %86 = vector.shape_cast %85 : vector<1x1x1x8x8x32xbf16> to vector<8x8x32xbf16>
    %87 = vector.shape_cast %86 : vector<8x8x32xbf16> to vector<64x32xbf16>
    %c12 = arith.constant 12 : index
    %c0_114 = arith.constant 0 : index
    %c0_115 = arith.constant 0 : index
    %88 = vector.load %arg4[%c12, %c0_114, %c0_115] : memref<27x32x128xbf16, #tpu.memory_space<vmem>>, vector<1x32x128xbf16>
    %89 = vector.shape_cast %88 : vector<1x32x128xbf16> to vector<32x128xbf16>
    %cst_116 = arith.constant dense<0.000000e+00> : vector<64x128xf32>
    %90 = tpu.matmul %87, %89, %cst_116 {dimension_numbers = #tpu.dot_dimension_numbers<[1], [0], [0], [1], [0, 0, 1, 1], [], []>} : vector<64x32xbf16>, vector<32x128xbf16>, vector<64x128xf32> -> vector<64x128xf32>
    %91 = arith.addf %84, %90 : vector<64x128xf32>
    %c0_117 = arith.constant 0 : index
    %c0_118 = arith.constant 0 : index
    %c7_119 = arith.constant 7 : index
    %c0_120 = arith.constant 0 : index
    %c0_121 = arith.constant 0 : index
    %c0_122 = arith.constant 0 : index
    %92 = vector.load %arg2[%c0_117, %c0_118, %c7_119, %c0_120, %c0_121, %c0_122] : memref<1x1x8x9x9x32xbf16, #tpu.memory_space<vmem>>, vector<1x1x1x8x8x32xbf16>
    %93 = vector.shape_cast %92 : vector<1x1x1x8x8x32xbf16> to vector<8x8x32xbf16>
    %94 = vector.shape_cast %93 : vector<8x8x32xbf16> to vector<64x32xbf16>
    %c13 = arith.constant 13 : index
    %c0_123 = arith.constant 0 : index
    %c0_124 = arith.constant 0 : index
    %95 = vector.load %arg4[%c13, %c0_123, %c0_124] : memref<27x32x128xbf16, #tpu.memory_space<vmem>>, vector<1x32x128xbf16>
    %96 = vector.shape_cast %95 : vector<1x32x128xbf16> to vector<32x128xbf16>
    %cst_125 = arith.constant dense<0.000000e+00> : vector<64x128xf32>
    %97 = tpu.matmul %94, %96, %cst_125 {dimension_numbers = #tpu.dot_dimension_numbers<[1], [0], [0], [1], [0, 0, 1, 1], [], []>} : vector<64x32xbf16>, vector<32x128xbf16>, vector<64x128xf32> -> vector<64x128xf32>
    %98 = arith.addf %91, %97 : vector<64x128xf32>
    %c0_126 = arith.constant 0 : index
    %c0_127 = arith.constant 0 : index
    %c6_128 = arith.constant 6 : index
    %c0_129 = arith.constant 0 : index
    %c1_130 = arith.constant 1 : index
    %c0_131 = arith.constant 0 : index
    %99 = vector.load %arg2[%c0_126, %c0_127, %c6_128, %c0_129, %c1_130, %c0_131] : memref<1x1x8x9x9x32xbf16, #tpu.memory_space<vmem>>, vector<1x1x1x8x8x32xbf16>
    %100 = vector.shape_cast %99 : vector<1x1x1x8x8x32xbf16> to vector<8x8x32xbf16>
    %101 = vector.shape_cast %100 : vector<8x8x32xbf16> to vector<64x32xbf16>
    %c14 = arith.constant 14 : index
    %c0_132 = arith.constant 0 : index
    %c0_133 = arith.constant 0 : index
    %102 = vector.load %arg4[%c14, %c0_132, %c0_133] : memref<27x32x128xbf16, #tpu.memory_space<vmem>>, vector<1x32x128xbf16>
    %103 = vector.shape_cast %102 : vector<1x32x128xbf16> to vector<32x128xbf16>
    %cst_134 = arith.constant dense<0.000000e+00> : vector<64x128xf32>
    %104 = tpu.matmul %101, %103, %cst_134 {dimension_numbers = #tpu.dot_dimension_numbers<[1], [0], [0], [1], [0, 0, 1, 1], [], []>} : vector<64x32xbf16>, vector<32x128xbf16>, vector<64x128xf32> -> vector<64x128xf32>
    %105 = arith.addf %98, %104 : vector<64x128xf32>
    %c0_135 = arith.constant 0 : index
    %c0_136 = arith.constant 0 : index
    %c4_137 = arith.constant 4 : index
    %c1_138 = arith.constant 1 : index
    %c0_139 = arith.constant 0 : index
    %c0_140 = arith.constant 0 : index
    %106 = vector.load %arg2[%c0_135, %c0_136, %c4_137, %c1_138, %c0_139, %c0_140] : memref<1x1x8x9x9x32xbf16, #tpu.memory_space<vmem>>, vector<1x1x1x8x8x32xbf16>
    %107 = vector.shape_cast %106 : vector<1x1x1x8x8x32xbf16> to vector<8x8x32xbf16>
    %108 = vector.shape_cast %107 : vector<8x8x32xbf16> to vector<64x32xbf16>
    %c15 = arith.constant 15 : index
    %c0_141 = arith.constant 0 : index
    %c0_142 = arith.constant 0 : index
    %109 = vector.load %arg4[%c15, %c0_141, %c0_142] : memref<27x32x128xbf16, #tpu.memory_space<vmem>>, vector<1x32x128xbf16>
    %110 = vector.shape_cast %109 : vector<1x32x128xbf16> to vector<32x128xbf16>
    %cst_143 = arith.constant dense<0.000000e+00> : vector<64x128xf32>
    %111 = tpu.matmul %108, %110, %cst_143 {dimension_numbers = #tpu.dot_dimension_numbers<[1], [0], [0], [1], [0, 0, 1, 1], [], []>} : vector<64x32xbf16>, vector<32x128xbf16>, vector<64x128xf32> -> vector<64x128xf32>
    %112 = arith.addf %105, %111 : vector<64x128xf32>
    %c0_144 = arith.constant 0 : index
    %c0_145 = arith.constant 0 : index
    %c5_146 = arith.constant 5 : index
    %c1_147 = arith.constant 1 : index
    %c0_148 = arith.constant 0 : index
    %c0_149 = arith.constant 0 : index
    %113 = vector.load %arg2[%c0_144, %c0_145, %c5_146, %c1_147, %c0_148, %c0_149] : memref<1x1x8x9x9x32xbf16, #tpu.memory_space<vmem>>, vector<1x1x1x8x8x32xbf16>
    %114 = vector.shape_cast %113 : vector<1x1x1x8x8x32xbf16> to vector<8x8x32xbf16>
    %115 = vector.shape_cast %114 : vector<8x8x32xbf16> to vector<64x32xbf16>
    %c16 = arith.constant 16 : index
    %c0_150 = arith.constant 0 : index
    %c0_151 = arith.constant 0 : index
    %116 = vector.load %arg4[%c16, %c0_150, %c0_151] : memref<27x32x128xbf16, #tpu.memory_space<vmem>>, vector<1x32x128xbf16>
    %117 = vector.shape_cast %116 : vector<1x32x128xbf16> to vector<32x128xbf16>
    %cst_152 = arith.constant dense<0.000000e+00> : vector<64x128xf32>
    %118 = tpu.matmul %115, %117, %cst_152 {dimension_numbers = #tpu.dot_dimension_numbers<[1], [0], [0], [1], [0, 0, 1, 1], [], []>} : vector<64x32xbf16>, vector<32x128xbf16>, vector<64x128xf32> -> vector<64x128xf32>
    %119 = arith.addf %112, %118 : vector<64x128xf32>
    %c0_153 = arith.constant 0 : index
    %c0_154 = arith.constant 0 : index
    %c4_155 = arith.constant 4 : index
    %c1_156 = arith.constant 1 : index
    %c1_157 = arith.constant 1 : index
    %c0_158 = arith.constant 0 : index
    %120 = vector.load %arg2[%c0_153, %c0_154, %c4_155, %c1_156, %c1_157, %c0_158] : memref<1x1x8x9x9x32xbf16, #tpu.memory_space<vmem>>, vector<1x1x1x8x8x32xbf16>
    %121 = vector.shape_cast %120 : vector<1x1x1x8x8x32xbf16> to vector<8x8x32xbf16>
    %122 = vector.shape_cast %121 : vector<8x8x32xbf16> to vector<64x32xbf16>
    %c17 = arith.constant 17 : index
    %c0_159 = arith.constant 0 : index
    %c0_160 = arith.constant 0 : index
    %123 = vector.load %arg4[%c17, %c0_159, %c0_160] : memref<27x32x128xbf16, #tpu.memory_space<vmem>>, vector<1x32x128xbf16>
    %124 = vector.shape_cast %123 : vector<1x32x128xbf16> to vector<32x128xbf16>
    %cst_161 = arith.constant dense<0.000000e+00> : vector<64x128xf32>
    %125 = tpu.matmul %122, %124, %cst_161 {dimension_numbers = #tpu.dot_dimension_numbers<[1], [0], [0], [1], [0, 0, 1, 1], [], []>} : vector<64x32xbf16>, vector<32x128xbf16>, vector<64x128xf32> -> vector<64x128xf32>
    %126 = arith.addf %119, %125 : vector<64x128xf32>
    %c0_162 = arith.constant 0 : index
    %c0_163 = arith.constant 0 : index
    %c0_164 = arith.constant 0 : index
    %c0_165 = arith.constant 0 : index
    %c0_166 = arith.constant 0 : index
    %c0_167 = arith.constant 0 : index
    %127 = vector.load %arg3[%c0_162, %c0_163, %c0_164, %c0_165, %c0_166, %c0_167] : memref<1x1x8x9x9x32xbf16, #tpu.memory_space<vmem>>, vector<1x1x1x8x8x32xbf16>
    %128 = vector.shape_cast %127 : vector<1x1x1x8x8x32xbf16> to vector<8x8x32xbf16>
    %129 = vector.shape_cast %128 : vector<8x8x32xbf16> to vector<64x32xbf16>
    %c18 = arith.constant 18 : index
    %c0_168 = arith.constant 0 : index
    %c0_169 = arith.constant 0 : index
    %130 = vector.load %arg4[%c18, %c0_168, %c0_169] : memref<27x32x128xbf16, #tpu.memory_space<vmem>>, vector<1x32x128xbf16>
    %131 = vector.shape_cast %130 : vector<1x32x128xbf16> to vector<32x128xbf16>
    %cst_170 = arith.constant dense<0.000000e+00> : vector<64x128xf32>
    %132 = tpu.matmul %129, %131, %cst_170 {dimension_numbers = #tpu.dot_dimension_numbers<[1], [0], [0], [1], [0, 0, 1, 1], [], []>} : vector<64x32xbf16>, vector<32x128xbf16>, vector<64x128xf32> -> vector<64x128xf32>
    %133 = arith.addf %126, %132 : vector<64x128xf32>
    %c0_171 = arith.constant 0 : index
    %c0_172 = arith.constant 0 : index
    %c1_173 = arith.constant 1 : index
    %c0_174 = arith.constant 0 : index
    %c0_175 = arith.constant 0 : index
    %c0_176 = arith.constant 0 : index
    %134 = vector.load %arg3[%c0_171, %c0_172, %c1_173, %c0_174, %c0_175, %c0_176] : memref<1x1x8x9x9x32xbf16, #tpu.memory_space<vmem>>, vector<1x1x1x8x8x32xbf16>
    %135 = vector.shape_cast %134 : vector<1x1x1x8x8x32xbf16> to vector<8x8x32xbf16>
    %136 = vector.shape_cast %135 : vector<8x8x32xbf16> to vector<64x32xbf16>
    %c19 = arith.constant 19 : index
    %c0_177 = arith.constant 0 : index
    %c0_178 = arith.constant 0 : index
    %137 = vector.load %arg4[%c19, %c0_177, %c0_178] : memref<27x32x128xbf16, #tpu.memory_space<vmem>>, vector<1x32x128xbf16>
    %138 = vector.shape_cast %137 : vector<1x32x128xbf16> to vector<32x128xbf16>
    %cst_179 = arith.constant dense<0.000000e+00> : vector<64x128xf32>
    %139 = tpu.matmul %136, %138, %cst_179 {dimension_numbers = #tpu.dot_dimension_numbers<[1], [0], [0], [1], [0, 0, 1, 1], [], []>} : vector<64x32xbf16>, vector<32x128xbf16>, vector<64x128xf32> -> vector<64x128xf32>
    %140 = arith.addf %133, %139 : vector<64x128xf32>
    %c0_180 = arith.constant 0 : index
    %c0_181 = arith.constant 0 : index
    %c0_182 = arith.constant 0 : index
    %c0_183 = arith.constant 0 : index
    %c1_184 = arith.constant 1 : index
    %c0_185 = arith.constant 0 : index
    %141 = vector.load %arg3[%c0_180, %c0_181, %c0_182, %c0_183, %c1_184, %c0_185] : memref<1x1x8x9x9x32xbf16, #tpu.memory_space<vmem>>, vector<1x1x1x8x8x32xbf16>
    %142 = vector.shape_cast %141 : vector<1x1x1x8x8x32xbf16> to vector<8x8x32xbf16>
    %143 = vector.shape_cast %142 : vector<8x8x32xbf16> to vector<64x32xbf16>
    %c20 = arith.constant 20 : index
    %c0_186 = arith.constant 0 : index
    %c0_187 = arith.constant 0 : index
    %144 = vector.load %arg4[%c20, %c0_186, %c0_187] : memref<27x32x128xbf16, #tpu.memory_space<vmem>>, vector<1x32x128xbf16>
    %145 = vector.shape_cast %144 : vector<1x32x128xbf16> to vector<32x128xbf16>
    %cst_188 = arith.constant dense<0.000000e+00> : vector<64x128xf32>
    %146 = tpu.matmul %143, %145, %cst_188 {dimension_numbers = #tpu.dot_dimension_numbers<[1], [0], [0], [1], [0, 0, 1, 1], [], []>} : vector<64x32xbf16>, vector<32x128xbf16>, vector<64x128xf32> -> vector<64x128xf32>
    %147 = arith.addf %140, %146 : vector<64x128xf32>
    %c0_189 = arith.constant 0 : index
    %c0_190 = arith.constant 0 : index
    %c2_191 = arith.constant 2 : index
    %c0_192 = arith.constant 0 : index
    %c0_193 = arith.constant 0 : index
    %c0_194 = arith.constant 0 : index
    %148 = vector.load %arg3[%c0_189, %c0_190, %c2_191, %c0_192, %c0_193, %c0_194] : memref<1x1x8x9x9x32xbf16, #tpu.memory_space<vmem>>, vector<1x1x1x8x8x32xbf16>
    %149 = vector.shape_cast %148 : vector<1x1x1x8x8x32xbf16> to vector<8x8x32xbf16>
    %150 = vector.shape_cast %149 : vector<8x8x32xbf16> to vector<64x32xbf16>
    %c21 = arith.constant 21 : index
    %c0_195 = arith.constant 0 : index
    %c0_196 = arith.constant 0 : index
    %151 = vector.load %arg4[%c21, %c0_195, %c0_196] : memref<27x32x128xbf16, #tpu.memory_space<vmem>>, vector<1x32x128xbf16>
    %152 = vector.shape_cast %151 : vector<1x32x128xbf16> to vector<32x128xbf16>
    %cst_197 = arith.constant dense<0.000000e+00> : vector<64x128xf32>
    %153 = tpu.matmul %150, %152, %cst_197 {dimension_numbers = #tpu.dot_dimension_numbers<[1], [0], [0], [1], [0, 0, 1, 1], [], []>} : vector<64x32xbf16>, vector<32x128xbf16>, vector<64x128xf32> -> vector<64x128xf32>
    %154 = arith.addf %147, %153 : vector<64x128xf32>
    %c0_198 = arith.constant 0 : index
    %c0_199 = arith.constant 0 : index
    %c3_200 = arith.constant 3 : index
    %c0_201 = arith.constant 0 : index
    %c0_202 = arith.constant 0 : index
    %c0_203 = arith.constant 0 : index
    %155 = vector.load %arg3[%c0_198, %c0_199, %c3_200, %c0_201, %c0_202, %c0_203] : memref<1x1x8x9x9x32xbf16, #tpu.memory_space<vmem>>, vector<1x1x1x8x8x32xbf16>
    %156 = vector.shape_cast %155 : vector<1x1x1x8x8x32xbf16> to vector<8x8x32xbf16>
    %157 = vector.shape_cast %156 : vector<8x8x32xbf16> to vector<64x32xbf16>
    %c22 = arith.constant 22 : index
    %c0_204 = arith.constant 0 : index
    %c0_205 = arith.constant 0 : index
    %158 = vector.load %arg4[%c22, %c0_204, %c0_205] : memref<27x32x128xbf16, #tpu.memory_space<vmem>>, vector<1x32x128xbf16>
    %159 = vector.shape_cast %158 : vector<1x32x128xbf16> to vector<32x128xbf16>
    %cst_206 = arith.constant dense<0.000000e+00> : vector<64x128xf32>
    %160 = tpu.matmul %157, %159, %cst_206 {dimension_numbers = #tpu.dot_dimension_numbers<[1], [0], [0], [1], [0, 0, 1, 1], [], []>} : vector<64x32xbf16>, vector<32x128xbf16>, vector<64x128xf32> -> vector<64x128xf32>
    %161 = arith.addf %154, %160 : vector<64x128xf32>
    %c0_207 = arith.constant 0 : index
    %c0_208 = arith.constant 0 : index
    %c2_209 = arith.constant 2 : index
    %c0_210 = arith.constant 0 : index
    %c1_211 = arith.constant 1 : index
    %c0_212 = arith.constant 0 : index
    %162 = vector.load %arg3[%c0_207, %c0_208, %c2_209, %c0_210, %c1_211, %c0_212] : memref<1x1x8x9x9x32xbf16, #tpu.memory_space<vmem>>, vector<1x1x1x8x8x32xbf16>
    %163 = vector.shape_cast %162 : vector<1x1x1x8x8x32xbf16> to vector<8x8x32xbf16>
    %164 = vector.shape_cast %163 : vector<8x8x32xbf16> to vector<64x32xbf16>
    %c23 = arith.constant 23 : index
    %c0_213 = arith.constant 0 : index
    %c0_214 = arith.constant 0 : index
    %165 = vector.load %arg4[%c23, %c0_213, %c0_214] : memref<27x32x128xbf16, #tpu.memory_space<vmem>>, vector<1x32x128xbf16>
    %166 = vector.shape_cast %165 : vector<1x32x128xbf16> to vector<32x128xbf16>
    %cst_215 = arith.constant dense<0.000000e+00> : vector<64x128xf32>
    %167 = tpu.matmul %164, %166, %cst_215 {dimension_numbers = #tpu.dot_dimension_numbers<[1], [0], [0], [1], [0, 0, 1, 1], [], []>} : vector<64x32xbf16>, vector<32x128xbf16>, vector<64x128xf32> -> vector<64x128xf32>
    %168 = arith.addf %161, %167 : vector<64x128xf32>
    %c0_216 = arith.constant 0 : index
    %c0_217 = arith.constant 0 : index
    %c0_218 = arith.constant 0 : index
    %c1_219 = arith.constant 1 : index
    %c0_220 = arith.constant 0 : index
    %c0_221 = arith.constant 0 : index
    %169 = vector.load %arg3[%c0_216, %c0_217, %c0_218, %c1_219, %c0_220, %c0_221] : memref<1x1x8x9x9x32xbf16, #tpu.memory_space<vmem>>, vector<1x1x1x8x8x32xbf16>
    %170 = vector.shape_cast %169 : vector<1x1x1x8x8x32xbf16> to vector<8x8x32xbf16>
    %171 = vector.shape_cast %170 : vector<8x8x32xbf16> to vector<64x32xbf16>
    %c24 = arith.constant 24 : index
    %c0_222 = arith.constant 0 : index
    %c0_223 = arith.constant 0 : index
    %172 = vector.load %arg4[%c24, %c0_222, %c0_223] : memref<27x32x128xbf16, #tpu.memory_space<vmem>>, vector<1x32x128xbf16>
    %173 = vector.shape_cast %172 : vector<1x32x128xbf16> to vector<32x128xbf16>
    %cst_224 = arith.constant dense<0.000000e+00> : vector<64x128xf32>
    %174 = tpu.matmul %171, %173, %cst_224 {dimension_numbers = #tpu.dot_dimension_numbers<[1], [0], [0], [1], [0, 0, 1, 1], [], []>} : vector<64x32xbf16>, vector<32x128xbf16>, vector<64x128xf32> -> vector<64x128xf32>
    %175 = arith.addf %168, %174 : vector<64x128xf32>
    %c0_225 = arith.constant 0 : index
    %c0_226 = arith.constant 0 : index
    %c1_227 = arith.constant 1 : index
    %c1_228 = arith.constant 1 : index
    %c0_229 = arith.constant 0 : index
    %c0_230 = arith.constant 0 : index
    %176 = vector.load %arg3[%c0_225, %c0_226, %c1_227, %c1_228, %c0_229, %c0_230] : memref<1x1x8x9x9x32xbf16, #tpu.memory_space<vmem>>, vector<1x1x1x8x8x32xbf16>
    %177 = vector.shape_cast %176 : vector<1x1x1x8x8x32xbf16> to vector<8x8x32xbf16>
    %178 = vector.shape_cast %177 : vector<8x8x32xbf16> to vector<64x32xbf16>
    %c25 = arith.constant 25 : index
    %c0_231 = arith.constant 0 : index
    %c0_232 = arith.constant 0 : index
    %179 = vector.load %arg4[%c25, %c0_231, %c0_232] : memref<27x32x128xbf16, #tpu.memory_space<vmem>>, vector<1x32x128xbf16>
    %180 = vector.shape_cast %179 : vector<1x32x128xbf16> to vector<32x128xbf16>
    %cst_233 = arith.constant dense<0.000000e+00> : vector<64x128xf32>
    %181 = tpu.matmul %178, %180, %cst_233 {dimension_numbers = #tpu.dot_dimension_numbers<[1], [0], [0], [1], [0, 0, 1, 1], [], []>} : vector<64x32xbf16>, vector<32x128xbf16>, vector<64x128xf32> -> vector<64x128xf32>
    %182 = arith.addf %175, %181 : vector<64x128xf32>
    %c0_234 = arith.constant 0 : index
    %c0_235 = arith.constant 0 : index
    %c0_236 = arith.constant 0 : index
    %c1_237 = arith.constant 1 : index
    %c1_238 = arith.constant 1 : index
    %c0_239 = arith.constant 0 : index
    %183 = vector.load %arg3[%c0_234, %c0_235, %c0_236, %c1_237, %c1_238, %c0_239] : memref<1x1x8x9x9x32xbf16, #tpu.memory_space<vmem>>, vector<1x1x1x8x8x32xbf16>
    %184 = vector.shape_cast %183 : vector<1x1x1x8x8x32xbf16> to vector<8x8x32xbf16>
    %185 = vector.shape_cast %184 : vector<8x8x32xbf16> to vector<64x32xbf16>
    %c26 = arith.constant 26 : index
    %c0_240 = arith.constant 0 : index
    %c0_241 = arith.constant 0 : index
    %186 = vector.load %arg4[%c26, %c0_240, %c0_241] : memref<27x32x128xbf16, #tpu.memory_space<vmem>>, vector<1x32x128xbf16>
    %187 = vector.shape_cast %186 : vector<1x32x128xbf16> to vector<32x128xbf16>
    %cst_242 = arith.constant dense<0.000000e+00> : vector<64x128xf32>
    %188 = tpu.matmul %185, %187, %cst_242 {dimension_numbers = #tpu.dot_dimension_numbers<[1], [0], [0], [1], [0, 0, 1, 1], [], []>} : vector<64x32xbf16>, vector<32x128xbf16>, vector<64x128xf32> -> vector<64x128xf32>
    %189 = arith.addf %182, %188 : vector<64x128xf32>
    %c0_243 = arith.constant 0 : index
    %c0_244 = arith.constant 0 : index
    %190 = vector.load %arg5[%c0_243, %c0_244] : memref<1x128xf32, #tpu.memory_space<vmem>>, vector<1x128xf32>
    %191 = vector.broadcast %190 : vector<1x128xf32> to vector<64x128xf32>
    %192 = arith.addf %189, %191 : vector<64x128xf32>
    %cst_245 = arith.constant dense<0.000000e+00> : vector<64xf32>
    %193 = vector.multi_reduction <add>, %192, %cst_245 [1] : vector<64x128xf32> to vector<64xf32>
    %194 = vector.shape_cast %193 : vector<64xf32> to vector<64x1xf32>
    %cst_246 = arith.constant 0.020833334 : f32
    %195 = vector.broadcast %cst_246 : f32 to vector<64x1xf32>
    %196 = arith.mulf %194, %195 : vector<64x1xf32>
    %197 = arith.mulf %192, %192 : vector<64x128xf32>
    %cst_247 = arith.constant dense<0.000000e+00> : vector<64xf32>
    %198 = vector.multi_reduction <add>, %197, %cst_247 [1] : vector<64x128xf32> to vector<64xf32>
    %199 = vector.shape_cast %198 : vector<64xf32> to vector<64x1xf32>
    %cst_248 = arith.constant 0.020833334 : f32
    %200 = vector.broadcast %cst_248 : f32 to vector<64x1xf32>
    %201 = arith.mulf %199, %200 : vector<64x1xf32>
    %202 = arith.mulf %196, %196 : vector<64x1xf32>
    %203 = arith.subf %201, %202 : vector<64x1xf32>
    %cst_249 = arith.constant 0.000000e+00 : f32
    %204 = vector.broadcast %cst_249 : f32 to vector<64x1xf32>
    %205 = arith.maximumf %203, %204 : vector<64x1xf32>
    %206 = vector.extract_strided_slice %192 {offsets = [0, 0], sizes = [64, 48], strides = [1, 1]} : vector<64x128xf32> to vector<64x48xf32>
    %207 = vector.broadcast %196 : vector<64x1xf32> to vector<64x48xf32>
    %208 = arith.subf %206, %207 : vector<64x48xf32>
    %cst_250 = arith.constant 9.99999974E-6 : f32
    %209 = vector.broadcast %cst_250 : f32 to vector<64x1xf32>
    %210 = arith.addf %205, %209 : vector<64x1xf32>
    %211 = math.rsqrt %210 : vector<64x1xf32>
    %212 = vector.broadcast %211 : vector<64x1xf32> to vector<64x48xf32>
    %213 = arith.mulf %208, %212 : vector<64x48xf32>
    %c0_251 = arith.constant 0 : index
    %c0_252 = arith.constant 0 : index
    %214 = vector.load %arg6[%c0_251, %c0_252] : memref<1x48xf32, #tpu.memory_space<vmem>>, vector<1x48xf32>
    %215 = vector.broadcast %214 : vector<1x48xf32> to vector<64x48xf32>
    %216 = arith.mulf %213, %215 : vector<64x48xf32>
    %c0_253 = arith.constant 0 : index
    %c0_254 = arith.constant 0 : index
    %217 = vector.load %arg7[%c0_253, %c0_254] : memref<1x48xf32, #tpu.memory_space<vmem>>, vector<1x48xf32>
    %218 = vector.broadcast %217 : vector<1x48xf32> to vector<64x48xf32>
    %219 = arith.addf %216, %218 : vector<64x48xf32>
    %220 = arith.truncf %219 : vector<64x48xf32> to vector<64x48xbf16>
    %c0_255 = arith.constant 0 : index
    %c0_256 = arith.constant 0 : index
    %c0_257 = arith.constant 0 : index
    %c0_258 = arith.constant 0 : index
    %221 = vector.load %arg8[%c0_255, %c0_256, %c0_257, %c0_258] : memref<1x1x64x48xbf16, #tpu.memory_space<vmem>>, vector<1x1x64x48xbf16>
    %222 = vector.shape_cast %221 : vector<1x1x64x48xbf16> to vector<64x48xbf16>
    %223 = vector.shape_cast %220 : vector<64x48xbf16> to vector<1x1x64x48xbf16>
    tpu.vector_store %arg8[%c0_255, %c0_256, %c0_257, %c0_258], %223 {strides = array<i32>} : memref<1x1x64x48xbf16, #tpu.memory_space<vmem>>, vector<1x1x64x48xbf16>,
    return
  }
  func.func @transform_0(%arg0: i32, %arg1: i32) -> (i32, i32, i32, i32, i32, i32) {
    %c0_i32 = arith.constant 0 : i32
    %0 = arith.addi %arg1, %c0_i32 : i32
    %c0_i32_0 = arith.constant 0 : i32
    %c0_i32_1 = arith.constant 0 : i32
    %c0_i32_2 = arith.constant 0 : i32
    %c0_i32_3 = arith.constant 0 : i32
    %c0_i32_4 = arith.constant 0 : i32
    return %arg0, %0, %c0_i32_0, %c0_i32_1, %c0_i32_2, %c0_i32_3 : i32, i32, i32, i32, i32, i32
  }
  func.func @transform_1(%arg0: i32, %arg1: i32) -> (i32, i32, i32, i32, i32, i32) {
    %c1_i32 = arith.constant 1 : i32
    %0 = arith.addi %arg1, %c1_i32 : i32
    %c0_i32 = arith.constant 0 : i32
    %c0_i32_0 = arith.constant 0 : i32
    %c0_i32_1 = arith.constant 0 : i32
    %c0_i32_2 = arith.constant 0 : i32
    %c0_i32_3 = arith.constant 0 : i32
    return %arg0, %0, %c0_i32, %c0_i32_0, %c0_i32_1, %c0_i32_2 : i32, i32, i32, i32, i32, i32
  }
  func.func @transform_2(%arg0: i32, %arg1: i32) -> (i32, i32, i32) {
    %c0_i32 = arith.constant 0 : i32
    %c0_i32_0 = arith.constant 0 : i32
    %c0_i32_1 = arith.constant 0 : i32
    %c0_i32_2 = arith.constant 0 : i32
    return %c0_i32, %c0_i32_0, %c0_i32_1 : i32, i32, i32
  }
  func.func @transform_3(%arg0: i32, %arg1: i32) -> (i32, i32) {
    %c0_i32 = arith.constant 0 : i32
    %c0_i32_0 = arith.constant 0 : i32
    %c0_i32_1 = arith.constant 0 : i32
    return %c0_i32, %c0_i32_0 : i32, i32
  }
  func.func @transform_4(%arg0: i32, %arg1: i32) -> (i32, i32) {
    %c0_i32 = arith.constant 0 : i32
    %c0_i32_0 = arith.constant 0 : i32
    %c0_i32_1 = arith.constant 0 : i32
    return %c0_i32, %c0_i32_0 : i32, i32
  }
  func.func @transform_5(%arg0: i32, %arg1: i32) -> (i32, i32) {
    %c0_i32 = arith.constant 0 : i32
    %c0_i32_0 = arith.constant 0 : i32
    %c0_i32_1 = arith.constant 0 : i32
    return %c0_i32, %c0_i32_0 : i32, i32
  }
  func.func @transform_6(%arg0: i32, %arg1: i32) -> (i32, i32, i32, i32) {
    %c0_i32 = arith.constant 0 : i32
    %c0_i32_0 = arith.constant 0 : i32
    %c0_i32_1 = arith.constant 0 : i32
    return %arg0, %arg1, %c0_i32, %c0_i32_0 : i32, i32, i32, i32
  }
}

</mosaic_0001>

<llo_original>
// kernel: a_call__.1
$region0: #{a_call__.1}
  #allocation0 [shape = 'u32[]', space=smem, size = 0x4, offset = 0x4, fixed_abs, tag = 'smem constant byte address 0x4 - core index']
  #allocation1 [shape = 'u32[144,128]{1,0:T(1,128)}', space=vmem, size = 0x12000, scoped, tag = 'internal scratch']
  %s0 = inlined_call_operand.vmem [shape: bf16[2,9,8,9,9,32], index: 0, kind: input, shape index: {}, may-alias: {0,1}]
  %s1 = inlined_call_operand.vmem [shape: bf16[2,9,8,9,9,32], index: 1, kind: input, shape index: {}, may-alias: {0,1}]
  %s2 = inlined_call_operand.vmem [shape: bf16[27,32,128], index: 2, kind: input, shape index: {}]
  %s3 = inlined_call_operand.vmem [shape: f32[1,128], index: 3, kind: input, shape index: {}]
  %s4 = inlined_call_operand.vmem [shape: f32[1,48], index: 4, kind: input, shape index: {}]
  %s5 = inlined_call_operand.vmem [shape: f32[1,48], index: 5, kind: input, shape index: {}]
  %s6 = inlined_call_operand.vmem [shape: bf16[2,8,64,48], index: 6, kind: output, shape index: {}]
  %s7 = sld [smem:[#allocation0]]
  $region57: #{a_call__.1} parent=0
    _
  %s9 = ssub.s32 1, %s7
  %s10 = scalar_select 0, %s9, %s7
  loop: start=0, step=1, limit=18
  $region2: #{a_call__.1} parent=0 // loop_pre_header
    _
  $region3: #{a_call__.1} parent=0 // loop_header
    %s12 = sphi 0, %s16
    %p13 = scmp.ge.s32.totalorder %s12, 18
    %s19 = sphi 0, %s31
    %s20 = sphi 0, %s27
    %s21 = sphi 0, %s19
    %s22 = sphi 0, %s20
    %s23 = sphi 0, %s21
    %s24 = sphi 0, %s22
    %s36 = sphi 0, %s38
    %s39 = sphi 0, %s36
    %s40 = sphi 0, %s39
    %s56 = sphi 0, %s40
    %s66 = sphi 0, %s68
    %s69 = sphi 0, %s66
    %s70 = sphi 0, %s69
    %s86 = sphi 0, %s70
    %s90 = sphi 0, %s90
    %s92 = sphi 0, %s90
    %s93 = sphi 0, %s92
    %s107 = sphi 0, %s93
    %s111 = sphi 0, %s111
    %s113 = sphi 0, %s111
    %s114 = sphi 0, %s113
    %s128 = sphi 0, %s114
    %s132 = sphi 0, %s132
    %s134 = sphi 0, %s132
    %s135 = sphi 0, %s134
    %s149 = sphi 0, %s135
    %s153 = sphi 0, %s153
    %s155 = sphi 0, %s153
    %s156 = sphi 0, %s155
    %s170 = sphi 0, %s156
    %s178 = sphi 0, %s180
    %s181 = sphi 0, %s178
    %s182 = sphi 0, %s181
    %s198 = sphi 0, %s182
  $region4: #{a_call__.1} parent=0 // loop_header_branch
    %15 = sbr.rel (%p13) target = $region8
  $region5: #{a_call__.1} parent=0 // loop_body
    %s17 = ssub.s32 %s12, 1
    %s18 = ssub.s32 %s12, 2
    %s25 = sadd.s32 1, %s20
    %p26 = scmp.ge.s32.totalorder %s25, 8
    %s27 = scalar_select %p26, 0, %s25
    %s28 = sadd.s32 1, %s19
    %s29 = scalar_select %p26, %s28, %s19
    %p30 = scmp.ge.s32.totalorder %s29, 2
    %s31 = scalar_select %p30, 0, %s29
    %s32 = ssub.s32 %s19, %s31
    %s33 = ssub.s32 %s20, %s27
    %s34 = sor.u32 %s32, %s33
    %p35 = scmp.eq.s32.totalorder %s34, 0
    %s37 = sadd.s32 %s36, 1
    %s38 = scalar_select %p35, %s36, %s37
    %p41 = pneg %p35
    %p42 = scmp.eq.s32.totalorder %s12, 15
    %p43 = por %p41, %p42
    %p44 = scmp.ne.s32.totalorder %s36, %s39
    %p45 = scmp.eq.s32.totalorder %s12, 0
    %p46 = por %p44, %p45
    %p47 = scmp.ne.s32.totalorder %s36, %s39
    %p48 = scmp.eq.s32.totalorder %s17, 15
    %p49 = por %p47, %p48
    %p50 = scmp.ne.s32.totalorder %s39, %s40
    %p51 = scmp.eq.s32.totalorder %s17, 0
    %p52 = por %p50, %p51
    %p53 = scmp.ne.s32.totalorder %s39, %s40
    %p54 = scmp.eq.s32.totalorder %s18, 15
    %p55 = por %p53, %p54
    %p57 = scmp.ne.s32.totalorder %s40, %s56
    %p58 = scmp.eq.s32.totalorder %s18, 0
    %p59 = por %p57, %p58
    %s60 = sadd.s32 %s20, 1
    %s61 = sadd.s32 %s27, 1
    %s62 = ssub.s32 %s19, %s31
    %s63 = ssub.s32 %s60, %s61
    %s64 = sor.u32 %s62, %s63
    %p65 = scmp.eq.s32.totalorder %s64, 0
    %s67 = sadd.s32 %s66, 1
    %s68 = scalar_select %p65, %s66, %s67
    %p71 = pneg %p65
    %p72 = scmp.eq.s32.totalorder %s12, 15
    %p73 = por %p71, %p72
    %p74 = scmp.ne.s32.totalorder %s66, %s69
    %p75 = scmp.eq.s32.totalorder %s12, 0
    %p76 = por %p74, %p75
    %p77 = scmp.ne.s32.totalorder %s66, %s69
    %p78 = scmp.eq.s32.totalorder %s17, 15
    %p79 = por %p77, %p78
    %p80 = scmp.ne.s32.totalorder %s69, %s70
    %p81 = scmp.eq.s32.totalorder %s17, 0
    %p82 = por %p80, %p81
    %p83 = scmp.ne.s32.totalorder %s69, %s70
    %p84 = scmp.eq.s32.totalorder %s18, 15
    %p85 = por %p83, %p84
    %p87 = scmp.ne.s32.totalorder %s70, %s86
    %p88 = scmp.eq.s32.totalorder %s18, 0
    %p89 = por %p87, %p88
    %s91 = sadd.s32 %s90, 1
    %p94 = scmp.eq.s32.totalorder %s12, 15
    %p95 = scmp.ne.s32.totalorder %s90, %s92
    %p96 = scmp.eq.s32.totalorder %s12, 0
    %p97 = por %p95, %p96
    %p98 = scmp.ne.s32.totalorder %s90, %s92
    %p99 = scmp.eq.s32.totalorder %s17, 15
    %p100 = por %p98, %p99
    %p101 = scmp.ne.s32.totalorder %s92, %s93
    %p102 = scmp.eq.s32.totalorder %s17, 0
    %p103 = por %p101, %p102
    %p104 = scmp.ne.s32.totalorder %s92, %s93
    %p105 = scmp.eq.s32.totalorder %s18, 15
    %p106 = por %p104, %p105
    %p108 = scmp.ne.s32.totalorder %s93, %s107
    %p109 = scmp.eq.s32.totalorder %s18, 0
    %p110 = por %p108, %p109
    %s112 = sadd.s32 %s111, 1
    %p115 = scmp.eq.s32.totalorder %s12, 15
    %p116 = scmp.ne.s32.totalorder %s111, %s113
    %p117 = scmp.eq.s32.totalorder %s12, 0
    %p118 = por %p116, %p117
    %p119 = scmp.ne.s32.totalorder %s111, %s113
    %p120 = scmp.eq.s32.totalorder %s17, 15
    %p121 = por %p119, %p120
    %p122 = scmp.ne.s32.totalorder %s113, %s114
    %p123 = scmp.eq.s32.totalorder %s17, 0
    %p124 = por %p122, %p123
    %p125 = scmp.ne.s32.totalorder %s113, %s114
    %p126 = scmp.eq.s32.totalorder %s18, 15
    %p127 = por %p125, %p126
    %p129 = scmp.ne.s32.totalorder %s114, %s128
    %p130 = scmp.eq.s32.totalorder %s18, 0
    %p131 = por %p129, %p130
    %s133 = sadd.s32 %s132, 1
    %p136 = scmp.eq.s32.totalorder %s12, 15
    %p137 = scmp.ne.s32.totalorder %s132, %s134
    %p138 = scmp.eq.s32.totalorder %s12, 0
    %p139 = por %p137, %p138
    %p140 = scmp.ne.s32.totalorder %s132, %s134
    %p141 = scmp.eq.s32.totalorder %s17, 15
    %p142 = por %p140, %p141
    %p143 = scmp.ne.s32.totalorder %s134, %s135
    %p144 = scmp.eq.s32.totalorder %s17, 0
    %p145 = por %p143, %p144
    %p146 = scmp.ne.s32.totalorder %s134, %s135
    %p147 = scmp.eq.s32.totalorder %s18, 15
    %p148 = por %p146, %p147
    %p150 = scmp.ne.s32.totalorder %s135, %s149
    %p151 = scmp.eq.s32.totalorder %s18, 0
    %p152 = por %p150, %p151
    %s154 = sadd.s32 %s153, 1
    %p157 = scmp.eq.s32.totalorder %s12, 15
    %p158 = scmp.ne.s32.totalorder %s153, %s155
    %p159 = scmp.eq.s32.totalorder %s12, 0
    %p160 = por %p158, %p159
    %p161 = scmp.ne.s32.totalorder %s153, %s155
    %p162 = scmp.eq.s32.totalorder %s17, 15
    %p163 = por %p161, %p162
    %p164 = scmp.ne.s32.totalorder %s155, %s156
    %p165 = scmp.eq.s32.totalorder %s17, 0
    %p166 = por %p164, %p165
    %p167 = scmp.ne.s32.totalorder %s155, %s156
    %p168 = scmp.eq.s32.totalorder %s18, 15
    %p169 = por %p167, %p168
    %p171 = scmp.ne.s32.totalorder %s156, %s170
    %p172 = scmp.eq.s32.totalorder %s18, 0
    %p173 = por %p171, %p172
    %s174 = ssub.s32 %s19, %s31
    %s175 = ssub.s32 %s20, %s27
    %s176 = sor.u32 %s174, %s175
    %p177 = scmp.eq.s32.totalorder %s176, 0
    %s179 = sadd.s32 %s178, 1
    %s180 = scalar_select %p177, %s178, %s179
    %p183 = pneg %p177
    %p184 = scmp.eq.s32.totalorder %s12, 15
    %p185 = por %p183, %p184
    %p186 = scmp.ne.s32.totalorder %s178, %s181
    %p187 = scmp.eq.s32.totalorder %s12, 0
    %p188 = por %p186, %p187
    %p189 = scmp.ne.s32.totalorder %s178, %s181
    %p190 = scmp.eq.s32.totalorder %s17, 15
    %p191 = por %p189, %p190
    %p192 = scmp.ne.s32.totalorder %s181, %s182
    %p193 = scmp.eq.s32.totalorder %s17, 0
    %p194 = por %p192, %p193
    %p195 = scmp.ne.s32.totalorder %s181, %s182
    %p196 = scmp.eq.s32.totalorder %s18, 15
    %p197 = por %p195, %p196
    %p199 = scmp.ne.s32.totalorder %s182, %s198
    %p200 = scmp.eq.s32.totalorder %s18, 0
    %p201 = por %p199, %p200
    %p202 = scmp.le.s32.totalorder 1, %s12
    %p203 = scmp.lt.s32.totalorder %s12, 17
    %p204 = pnand %p202, %p203
    %p205 = pneg %p204
    // Predicated region
    $region9: #{a_call__.1} parent=5 // pred_check
      _
    $region10: #{a_call__.1} parent=5 // pred_check_branch
      %207 = sbr.rel (%p204) target = $region12
    $region11: #{a_call__.1} parent=5 // pred_region
      %s208 = ssub.s32 %s12, 1
      // Predicated region
      $region13: #{a_call__.1} parent=11 // pred_check
        %p209 = pneg %p103
      $region14: #{a_call__.1} parent=11 // pred_check_branch
        %211 = sbr.rel (%p209) target = $region16
      $region15: #{a_call__.1} parent=11 // pred_region
        _
      $region16: #{a_call__.1} parent=11 // pred_fallthru
        _
      // Predicated region
      $region17: #{a_call__.1} parent=11 // pred_check
        %p212 = pneg %p124
      $region18: #{a_call__.1} parent=11 // pred_check_branch
        %214 = sbr.rel (%p212) target = $region20
      $region19: #{a_call__.1} parent=11 // pred_region
        _
      $region20: #{a_call__.1} parent=11 // pred_fallthru
        _
      // Predicated region
      $region21: #{a_call__.1} parent=11 // pred_check
        %p215 = pneg %p145
      $region22: #{a_call__.1} parent=11 // pred_check_branch
        %217 = sbr.rel (%p215) target = $region24
      $region23: #{a_call__.1} parent=11 // pred_region
        _
      $region24: #{a_call__.1} parent=11 // pred_fallthru
        _
      // Predicated region
      $region25: #{a_call__.1} parent=11 // pred_check
        %p218 = pneg %p166
      $region26: #{a_call__.1} parent=11 // pred_check_branch
        %220 = sbr.rel (%p218) target = $region28
      $region27: #{a_call__.1} parent=11 // pred_region
        _
      $region28: #{a_call__.1} parent=11 // pred_fallthru
        _
    $region12: #{a_call__.1} parent=5 // pred_fallthru
      _
    %p221 = scmp.lt.s32.totalorder %s12, 16
    // Predicated region
    $region29: #{a_call__.1} parent=5 // pred_check
      %p222 = pneg %p221
    $region30: #{a_call__.1} parent=5 // pred_check_branch
      %224 = sbr.rel (%p222) target = $region32
    $region31: #{a_call__.1} parent=5 // pred_region
      // Predicated region
      $region33: #{a_call__.1} parent=31 // pred_check
        %p225 = pneg %p46
      $region34: #{a_call__.1} parent=31 // pred_check_branch
        %227 = sbr.rel (%p225) target = $region36
      $region35: #{a_call__.1} parent=31 // pred_region
        %p228 = scmp.lt.s32.totalorder %s19, 1
        %s229 = scalar_select %p228, %s19, 1
        %p230 = scmp.lt.s32.totalorder %s20, 8
        %s231 = scalar_select %p230, %s20, 8
        %s232 = smul.addr %s231, 144
        %s233 = smul.addr %s229, 1296
        %s234 = sadd.s32 %s232, %s233
        %s235 = smul.addr %s234, 4
        %s236 = scalar_lea.vmem %s0, %s235
      $region36: #{a_call__.1} parent=31 // pred_fallthru
        _
      // Predicated region
      $region37: #{a_call__.1} parent=31 // pred_check
        %p237 = pneg %p76
      $region38: #{a_call__.1} parent=31 // pred_check_branch
        %239 = sbr.rel (%p237) target = $region40
      $region39: #{a_call__.1} parent=31 // pred_region
        %s240 = sadd.s32 %s20, 1
        %p241 = scmp.lt.s32.totalorder %s19, 1
        %s242 = scalar_select %p241, %s19, 1
        %p243 = scmp.lt.s32.totalorder %s240, 8
        %s244 = scalar_select %p243, %s240, 8
        %s245 = smul.addr %s244, 144
        %s246 = smul.addr %s242, 1296
        %s247 = sadd.s32 %s245, %s246
        %s248 = smul.addr %s247, 4
        %s249 = scalar_lea.vmem %s1, %s248
        %s250 = sadd.s32 %s20, 1
      $region40: #{a_call__.1} parent=31 // pred_fallthru
        _
    $region32: #{a_call__.1} parent=5 // pred_fallthru
      _
    %p251 = scmp.le.s32.totalorder 1, %s12
    %p252 = scmp.lt.s32.totalorder %s12, 17
    %p253 = pnand %p251, %p252
    %p254 = pneg %p253
    // Predicated region
    $region41: #{a_call__.1} parent=5 // pred_check
      _
    $region42: #{a_call__.1} parent=5 // pred_check_branch
      %256 = sbr.rel (%p253) target = $region44
    $region43: #{a_call__.1} parent=5 // pred_region
      %s257 = ssub.s32 %s12, 1
      %p258 = scmp.lt.s32.totalorder %s21, 1
      %s259 = scalar_select %p258, %s21, 1
      %p260 = scmp.lt.s32.totalorder %s22, 8
      %s261 = scalar_select %p260, %s22, 8
      %s262 = smul.addr %s261, 144
      %s263 = smul.addr %s259, 1296
      %s264 = sadd.s32 %s262, %s263
      %s265 = smul.addr %s264, 4
      %s266 = scalar_lea.vmem %s0, %s265
      %p267 = pneg %p52
      %p268 = pneg %p49
      %s269 = sadd.s32 %s22, 1
      %p270 = scmp.lt.s32.totalorder %s21, 1
      %s271 = scalar_select %p270, %s21, 1
      %p272 = scmp.lt.s32.totalorder %s269, 8
      %s273 = scalar_select %p272, %s269, 8
      %s274 = smul.addr %s273, 144
      %s275 = smul.addr %s271, 1296
      %s276 = sadd.s32 %s274, %s275
      %s277 = smul.addr %s276, 4
      %s278 = scalar_lea.vmem %s1, %s277
      %p279 = pneg %p82
      %p280 = pneg %p79
      %p281 = pneg %p103
      %p282 = pneg %p100
      %p283 = pneg %p124
      %p284 = pneg %p121
      %p285 = pneg %p145
      %p286 = pneg %p142
      %p287 = pneg %p166
      %p288 = pneg %p163
      %p289 = pneg %p194
      %p290 = pneg %p191
      %p291 = scmp.lt.s32.totalorder %s21, 1
      %s292 = scalar_select %p291, %s21, 1
      %p293 = scmp.lt.s32.totalorder %s22, 7
      %s294 = scalar_select %p293, %s22, 7
      %s295 = smul.addr %s294, 8
      %s296 = smul.addr %s292, 64
      %s297 = sadd.s32 %s295, %s296
      %s298 = smul.addr %s297, 4
      %s299 = scalar_lea.vmem %s6, %s298
      %p300 = scmp.lt.s32.totalorder %s21, 1
      %s301 = scalar_select %p300, %s21, 1
      %p302 = scmp.lt.s32.totalorder %s22, 8
      %s303 = scalar_select %p302, %s22, 8
      %s304 = smul.addr %s303, 144
      %s305 = smul.addr %s301, 1296
      %s306 = sadd.s32 %s304, %s305
      %s307 = smul.addr %s306, 4
      %s308 = scalar_lea.vmem %s0, %s307
      %s309 = sadd.s32 %s22, 1
      %p310 = scmp.lt.s32.totalorder %s21, 1
      %s311 = scalar_select %p310, %s21, 1
      %p312 = scmp.lt.s32.totalorder %s309, 8
      %s313 = scalar_select %p312, %s309, 8
      %s314 = smul.addr %s313, 144
      %s315 = smul.addr %s311, 1296
      %s316 = sadd.s32 %s314, %s315
      %s317 = smul.addr %s316, 4
      %s318 = scalar_lea.vmem %s1, %s317
      %s319 = sadd.s32 %s22, 1
      %p320 = scmp.lt.s32.totalorder %s21, 1
      %s321 = scalar_select %p320, %s21, 1
      %p322 = scmp.lt.s32.totalorder %s22, 7
      %s323 = scalar_select %p322, %s22, 7
      %s324 = smul.addr %s323, 8
      %s325 = smul.addr %s321, 64
      %s326 = sadd.s32 %s324, %s325
      %s327 = smul.addr %s326, 4
      %s328 = scalar_lea.vmem %s6, %s327
      %v330 = vld [vmem:[%s308] sm:$0xf]
      %v331 = vld [vmem:[%s308 + $0x8] sm:$0xf]
      %v332 = vld [vmem:[%s308 + $0x10] sm:$0xf]
      %v333 = vld [vmem:[%s308 + $0x18] sm:$0xf]
      %v334 = vld [vmem:[%s308 + $0x20] sm:$0xf]
      %v335 = vld [vmem:[%s308 + $0x28] sm:$0xf]
      %v336 = vld [vmem:[%s308 + $0x30] sm:$0xf]
      %v337 = vld [vmem:[%s308 + $0x38] sm:$0xf]
      %v338 = vld [vmem:[%s2] sm:$0xf]
      %v339 = vld [vmem:[%s2 + $0x4] sm:$0xf]
      %v340 = vld [vmem:[%s2 + $0x8] sm:$0xf]
      %v341 = vld [vmem:[%s2 + $0xc] sm:$0xf]
      %s342 = scalar_lea.vmem %s308, 72
      %v343 = vld [vmem:[%s342] sm:$0xf]
      %v344 = vld [vmem:[%s342 + $0x8] sm:$0xf]
      %v345 = vld [vmem:[%s342 + $0x10] sm:$0xf]
      %v346 = vld [vmem:[%s342 + $0x18] sm:$0xf]
      %v347 = vld [vmem:[%s342 + $0x20] sm:$0xf]
      %v348 = vld [vmem:[%s342 + $0x28] sm:$0xf]
      %v349 = vld [vmem:[%s342 + $0x30] sm:$0xf]
      %v350 = vld [vmem:[%s342 + $0x38] sm:$0xf]
      %s351 = scalar_lea.vmem %s2, 16
      %v352 = vld [vmem:[%s351] sm:$0xf]
      %v353 = vld [vmem:[%s351 + $0x4] sm:$0xf]
      %v354 = vld [vmem:[%s351 + $0x8] sm:$0xf]
      %v355 = vld [vmem:[%s351 + $0xc] sm:$0xf]
      %v364 = vunpack.c.l.b16 %v343
      %v365 = vunpack.c.l.b16 %v344
      %v366 = vunpack.c.l.b16 %v345
      %v367 = vunpack.c.l.b16 %v346
      %v368 = vunpack.c.l.b16 %v347
      %v369 = vunpack.c.l.b16 %v348
      %v370 = vunpack.c.l.b16 %v349
      %v371 = vunpack.c.l.b16 %v350
      %v372 = vpack.c.b16 %v365, %v364
      %v373 = vpack.c.b16 %v367, %v366
      %v374 = vpack.c.b16 %v369, %v368
      %v375 = vpack.c.b16 %v371, %v370
      %v380 = vunpack.c.l.b16 %v352
      %v381 = vunpack.c.l.b16 %v353
      %v382 = vunpack.c.l.b16 %v354
      %v383 = vunpack.c.l.b16 %v355
      %v384 = vpack.c.b16 %v381, %v380
      %v385 = vpack.c.b16 %v383, %v382
      %vm388 = vcmask 261120
      %v390 = vsel %vm388, %v372, 0
      %v393 = vsel %vm388, %v373, 0
      %v396 = vsel %vm388, %v374, 0
      %v399 = vsel %vm388, %v375, 0
      %401 = vmatprep.subr.bf16.mxu0 0
      %402 = vmatpush1.bf16.msra.mxu0 0
      %403 = vmatprep.subr.bf16.mxu0 0
      %404 = vmatpush1.bf16.msra.mxu0 0
      %405 = vmatprep.subr.bf16.mxu0 0
      %406 = vmatpush1.bf16.msra.mxu0 0
      %407 = vmatprep.subr.bf16.mxu0 0
      %408 = vmatpush1.bf16.msra.mxu0 0
      %409 = vmatprep.subr.bf16.mxu0 0
      %410 = vmatpush1.bf16.msra.mxu0 0
      %411 = vmatprep.subr.bf16.mxu0 0
      %412 = vmatpush1.bf16.msra.mxu0 0
      %413 = vmatprep.subr.bf16.mxu0 0
      %414 = vmatpush1.bf16.msra.mxu0 %v385
      %415 = vmatprep.subr.bf16.mxu0 0
      %416 = vmatpush1.bf16.msra.mxu0 %v384
      %417 = vmatprep.subr.bf16.mxu0 0
      %418 = vmatpush2.bf16.msra.mxu0 0
      %419 = vmatprep.subr.bf16.mxu0 0
      %420 = vmatpush2.bf16.msra.mxu0 0
      %421 = vmatprep.subr.bf16.mxu0 0
      %422 = vmatpush2.bf16.msra.mxu0 0
      %423 = vmatprep.subr.bf16.mxu0 0
      %424 = vmatpush2.bf16.msra.mxu0 0
      %425 = vmatprep.subr.bf16.mxu0 0
      %426 = vmatpush2.bf16.msra.mxu0 0
      %427 = vmatprep.subr.bf16.mxu0 0
      %428 = vmatpush2.bf16.msra.mxu0 0
      %429 = vmatprep.subr.bf16.mxu0 0
      %430 = vmatpush2.bf16.msra.mxu0 0
      %431 = vmatprep.subr.bf16.mxu0 0
      %432 = vmatpush2.bf16.msra.mxu0 0
      %433 = vmatprep.mubr.bf16.mxu0 0
      %434 = vmatmul.mubr.bf16.gmra.mxu0 %v390
      %v435 = vpop.f32.mrf.mxu0
      %v436 = vadd.f32 0.0, %v435
      %v437 = vpop.f32.mrf.mxu0
      %v438 = vpop.f32.mrf.mxu0
      %v439 = vadd.f32 0.0, %v438
      %v440 = vpop.f32.mrf.mxu0
      %441 = vmatprep.mubr.bf16.mxu0 0
      %442 = vmatmul.mubr.bf16.gmra.mxu0 %v393
      %v443 = vpop.f32.mrf.mxu0
      %v444 = vadd.f32 0.0, %v443
      %v445 = vpop.f32.mrf.mxu0
      %v446 = vpop.f32.mrf.mxu0
      %v447 = vadd.f32 0.0, %v446
      %v448 = vpop.f32.mrf.mxu0
      %449 = vmatprep.mubr.bf16.mxu0 0
      %450 = vmatmul.mubr.bf16.gmra.mxu0 %v396
      %v451 = vpop.f32.mrf.mxu0
      %v452 = vadd.f32 0.0, %v451
      %v453 = vpop.f32.mrf.mxu0
      %v454 = vpop.f32.mrf.mxu0
      %v455 = vadd.f32 0.0, %v454
      %v456 = vpop.f32.mrf.mxu0
      %457 = vmatprep.mubr.bf16.mxu0 0
      %458 = vmatmul.mubr.bf16.gmra.mxu0 %v399
      %v459 = vpop.f32.mrf.mxu0
      %v460 = vadd.f32 0.0, %v459
      %v461 = vpop.f32.mrf.mxu0
      %v462 = vpop.f32.mrf.mxu0
      %v463 = vadd.f32 0.0, %v462
      %v464 = vpop.f32.mrf.mxu0
      %465 = vdwg.mxu0
      %v474 = vunpack.c.l.b16 %v330
      %v475 = vunpack.c.l.b16 %v331
      %v476 = vunpack.c.l.b16 %v332
      %v477 = vunpack.c.l.b16 %v333
      %v478 = vunpack.c.l.b16 %v334
      %v479 = vunpack.c.l.b16 %v335
      %v480 = vunpack.c.l.b16 %v336
      %v481 = vunpack.c.l.b16 %v337
      %v482 = vpack.c.b16 %v475, %v474
      %v483 = vpack.c.b16 %v477, %v476
      %v484 = vpack.c.b16 %v479, %v478
      %v485 = vpack.c.b16 %v481, %v480
      %v490 = vunpack.c.l.b16 %v338
      %v491 = vunpack.c.l.b16 %v339
      %v492 = vunpack.c.l.b16 %v340
      %v493 = vunpack.c.l.b16 %v341
      %v494 = vpack.c.b16 %v491, %v490
      %v495 = vpack.c.b16 %v493, %v492
      %v499 = vsel %vm388, %v482, 0
      %v502 = vsel %vm388, %v483, 0
      %v505 = vsel %vm388, %v484, 0
      %v508 = vsel %vm388, %v485, 0
      %510 = vmatprep.subr.bf16.mxu0 0
      %511 = vmatpush1.bf16.msra.mxu0 0
      %512 = vmatprep.subr.bf16.mxu0 0
      %513 = vmatpush1.bf16.msra.mxu0 0
      %514 = vmatprep.subr.bf16.mxu0 0
      %515 = vmatpush1.bf16.msra.mxu0 0
      %516 = vmatprep.subr.bf16.mxu0 0
      %517 = vmatpush1.bf16.msra.mxu0 0
      %518 = vmatprep.subr.bf16.mxu0 0
      %519 = vmatpush1.bf16.msra.mxu0 0
      %520 = vmatprep.subr.bf16.mxu0 0
      %521 = vmatpush1.bf16.msra.mxu0 0
      %522 = vmatprep.subr.bf16.mxu0 0
      %523 = vmatpush1.bf16.msra.mxu0 %v495
      %524 = vmatprep.subr.bf16.mxu0 0
      %525 = vmatpush1.bf16.msra.mxu0 %v494
      %526 = vmatprep.subr.bf16.mxu0 0
      %527 = vmatpush2.bf16.msra.mxu0 0
      %528 = vmatprep.subr.bf16.mxu0 0
      %529 = vmatpush2.bf16.msra.mxu0 0
      %530 = vmatprep.subr.bf16.mxu0 0
      %531 = vmatpush2.bf16.msra.mxu0 0
      %532 = vmatprep.subr.bf16.mxu0 0
      %533 = vmatpush2.bf16.msra.mxu0 0
      %534 = vmatprep.subr.bf16.mxu0 0
      %535 = vmatpush2.bf16.msra.mxu0 0
      %536 = vmatprep.subr.bf16.mxu0 0
      %537 = vmatpush2.bf16.msra.mxu0 0
      %538 = vmatprep.subr.bf16.mxu0 0
      %539 = vmatpush2.bf16.msra.mxu0 0
      %540 = vmatprep.subr.bf16.mxu0 0
      %541 = vmatpush2.bf16.msra.mxu0 0
      %542 = vmatprep.mubr.bf16.mxu0 0
      %543 = vmatmul.mubr.bf16.gmra.mxu0 %v499
      %v544 = vpop.f32.mrf.mxu0
      %v545 = vadd.f32 %v436, %v544
      %v546 = vpop.f32.mrf.mxu0
      %v547 = vpop.f32.mrf.mxu0
      %v548 = vadd.f32 %v439, %v547
      %v549 = vpop.f32.mrf.mxu0
      %550 = vmatprep.mubr.bf16.mxu0 0
      %551 = vmatmul.mubr.bf16.gmra.mxu0 %v502
      %v552 = vpop.f32.mrf.mxu0
      %v553 = vadd.f32 %v444, %v552
      %v554 = vpop.f32.mrf.mxu0
      %v555 = vpop.f32.mrf.mxu0
      %v556 = vadd.f32 %v447, %v555
      %v557 = vpop.f32.mrf.mxu0
      %558 = vmatprep.mubr.bf16.mxu0 0
      %559 = vmatmul.mubr.bf16.gmra.mxu0 %v505
      %v560 = vpop.f32.mrf.mxu0
      %v561 = vadd.f32 %v452, %v560
      %v562 = vpop.f32.mrf.mxu0
      %v563 = vpop.f32.mrf.mxu0
      %v564 = vadd.f32 %v455, %v563
      %v565 = vpop.f32.mrf.mxu0
      %566 = vmatprep.mubr.bf16.mxu0 0
      %567 = vmatmul.mubr.bf16.gmra.mxu0 %v508
      %v568 = vpop.f32.mrf.mxu0
      %v569 = vadd.f32 %v460, %v568
      %v570 = vpop.f32.mrf.mxu0
      %v571 = vpop.f32.mrf.mxu0
      %v572 = vadd.f32 %v463, %v571
      %v573 = vpop.f32.mrf.mxu0
      %574 = vdwg.mxu0
      %v575 = vld [vmem:[%s308] sm:$0xf]
      %v576 = vld [vmem:[%s308 + $0x4] sm:$0x1]
      %v577 = vld [vmem:[%s308 + $0x8] sm:$0xf]
      %v578 = vld [vmem:[%s308 + $0xc] sm:$0x1]
      %v579 = vld [vmem:[%s308 + $0x10] sm:$0xf]
      %v580 = vld [vmem:[%s308 + $0x14] sm:$0x1]
      %v581 = vld [vmem:[%s308 + $0x18] sm:$0xf]
      %v582 = vld [vmem:[%s308 + $0x1c] sm:$0x1]
      %v583 = vld [vmem:[%s308 + $0x20] sm:$0xf]
      %v584 = vld [vmem:[%s308 + $0x24] sm:$0x1]
      %v585 = vld [vmem:[%s308 + $0x28] sm:$0xf]
      %v586 = vld [vmem:[%s308 + $0x2c] sm:$0x1]
      %v587 = vld [vmem:[%s308 + $0x30] sm:$0xf]
      %v588 = vld [vmem:[%s308 + $0x34] sm:$0x1]
      %v589 = vld [vmem:[%s308 + $0x38] sm:$0xf]
      %v590 = vld [vmem:[%s308 + $0x3c] sm:$0x1]
      %vm591 = vsmask.f32 3328
      %vm592 = vsmask.f32 7440
      %vm593 = vmor %vm591, %vm592
      %v595 = vshrl.u32 %v575, 16
      %v597 = vrot.slane %v595, 4
      %v598 = vshll.u32 %v575, 16
      %v600 = vrot.slane %v598, 5
      %v601 = vor.u32 %v597, %v600
      %v602 = vrot.slane %v601, 4
      %v604 = vshll.u32 %v576, 16
      %v606 = vrot.slane %v604, 5
      %v607 = vsel %vm593, %v602, %v606
      %v609 = vshrl.u32 %v577, 16
      %v611 = vrot.slane %v609, 4
      %v612 = vshll.u32 %v577, 16
      %v614 = vrot.slane %v612, 5
      %v615 = vor.u32 %v611, %v614
      %v616 = vrot.slane %v615, 4
      %v618 = vshll.u32 %v578, 16
      %v620 = vrot.slane %v618, 5
      %v621 = vsel %vm593, %v616, %v620
      %v623 = vshrl.u32 %v579, 16
      %v625 = vrot.slane %v623, 4
      %v626 = vshll.u32 %v579, 16
      %v628 = vrot.slane %v626, 5
      %v629 = vor.u32 %v625, %v628
      %v630 = vrot.slane %v629, 4
      %v632 = vshll.u32 %v580, 16
      %v634 = vrot.slane %v632, 5
      %v635 = vsel %vm593, %v630, %v634
      %v637 = vshrl.u32 %v581, 16
      %v639 = vrot.slane %v637, 4
      %v640 = vshll.u32 %v581, 16
      %v642 = vrot.slane %v640, 5
      %v643 = vor.u32 %v639, %v642
      %v644 = vrot.slane %v643, 4
      %v646 = vshll.u32 %v582, 16
      %v648 = vrot.slane %v646, 5
      %v649 = vsel %vm593, %v644, %v648
      %v651 = vshrl.u32 %v583, 16
      %v653 = vrot.slane %v651, 4
      %v654 = vshll.u32 %v583, 16
      %v656 = vrot.slane %v654, 5
      %v657 = vor.u32 %v653, %v656
      %v658 = vrot.slane %v657, 4
      %v660 = vshll.u32 %v584, 16
      %v662 = vrot.slane %v660, 5
      %v663 = vsel %vm593, %v658, %v662
      %v665 = vshrl.u32 %v585, 16
      %v667 = vrot.slane %v665, 4
      %v668 = vshll.u32 %v585, 16
      %v670 = vrot.slane %v668, 5
      %v671 = vor.u32 %v667, %v670
      %v672 = vrot.slane %v671, 4
      %v674 = vshll.u32 %v586, 16
      %v676 = vrot.slane %v674, 5
      %v677 = vsel %vm593, %v672, %v676
      %v679 = vshrl.u32 %v587, 16
      %v681 = vrot.slane %v679, 4
      %v682 = vshll.u32 %v587, 16
      %v684 = vrot.slane %v682, 5
      %v685 = vor.u32 %v681, %v684
      %v686 = vrot.slane %v685, 4
      %v688 = vshll.u32 %v588, 16
      %v690 = vrot.slane %v688, 5
      %v691 = vsel %vm593, %v686, %v690
      %v693 = vshrl.u32 %v589, 16
      %v695 = vrot.slane %v693, 4
      %v696 = vshll.u32 %v589, 16
      %v698 = vrot.slane %v696, 5
      %v699 = vor.u32 %v695, %v698
      %v700 = vrot.slane %v699, 4
      %v702 = vshll.u32 %v590, 16
      %v704 = vrot.slane %v702, 5
      %v705 = vsel %vm593, %v700, %v704
      %s706 = scalar_lea.vmem %s2, 32
      %v707 = vld [vmem:[%s706] sm:$0xf]
      %v708 = vld [vmem:[%s706 + $0x4] sm:$0xf]
      %v709 = vld [vmem:[%s706 + $0x8] sm:$0xf]
      %v710 = vld [vmem:[%s706 + $0xc] sm:$0xf]
      %v711 = vunpack.c.l.b16 %v607
      %v712 = vunpack.c.l.b16 %v621
      %v713 = vunpack.c.l.b16 %v635
      %v714 = vunpack.c.l.b16 %v649
      %v715 = vunpack.c.l.b16 %v663
      %v716 = vunpack.c.l.b16 %v677
      %v717 = vunpack.c.l.b16 %v691
      %v718 = vunpack.c.l.b16 %v705
      %v719 = vpack.c.b16 %v712, %v711
      %v720 = vpack.c.b16 %v714, %v713
      %v721 = vpack.c.b16 %v716, %v715
      %v722 = vpack.c.b16 %v718, %v717
      %v727 = vunpack.c.l.b16 %v707
      %v728 = vunpack.c.l.b16 %v708
      %v729 = vunpack.c.l.b16 %v709
      %v730 = vunpack.c.l.b16 %v710
      %v731 = vpack.c.b16 %v728, %v727
      %v732 = vpack.c.b16 %v730, %v729
      %v736 = vsel %vm388, %v719, 0
      %v739 = vsel %vm388, %v720, 0
      %v742 = vsel %vm388, %v721, 0
      %v745 = vsel %vm388, %v722, 0
      %747 = vmatprep.subr.bf16.mxu0 0
      %748 = vmatpush1.bf16.msra.mxu0 0
      %749 = vmatprep.subr.bf16.mxu0 0
      %750 = vmatpush1.bf16.msra.mxu0 0
      %751 = vmatprep.subr.bf16.mxu0 0
      %752 = vmatpush1.bf16.msra.mxu0 0
      %753 = vmatprep.subr.bf16.mxu0 0
      %754 = vmatpush1.bf16.msra.mxu0 0
      %755 = vmatprep.subr.bf16.mxu0 0
      %756 = vmatpush1.bf16.msra.mxu0 0
      %757 = vmatprep.subr.bf16.mxu0 0
      %758 = vmatpush1.bf16.msra.mxu0 0
      %759 = vmatprep.subr.bf16.mxu0 0
      %760 = vmatpush1.bf16.msra.mxu0 %v732
      %761 = vmatprep.subr.bf16.mxu0 0
      %762 = vmatpush1.bf16.msra.mxu0 %v731
      %763 = vmatprep.subr.bf16.mxu0 0
      %764 = vmatpush2.bf16.msra.mxu0 0
      %765 = vmatprep.subr.bf16.mxu0 0
      %766 = vmatpush2.bf16.msra.mxu0 0
      %767 = vmatprep.subr.bf16.mxu0 0
      %768 = vmatpush2.bf16.msra.mxu0 0
      %769 = vmatprep.subr.bf16.mxu0 0
      %770 = vmatpush2.bf16.msra.mxu0 0
      %771 = vmatprep.subr.bf16.mxu0 0
      %772 = vmatpush2.bf16.msra.mxu0 0
      %773 = vmatprep.subr.bf16.mxu0 0
      %774 = vmatpush2.bf16.msra.mxu0 0
      %775 = vmatprep.subr.bf16.mxu0 0
      %776 = vmatpush2.bf16.msra.mxu0 0
      %777 = vmatprep.subr.bf16.mxu0 0
      %778 = vmatpush2.bf16.msra.mxu0 0
      %779 = vmatprep.mubr.bf16.mxu0 0
      %780 = vmatmul.mubr.bf16.gmra.mxu0 %v736
      %v781 = vpop.f32.mrf.mxu0
      %v782 = vadd.f32 0.0, %v781
      %v783 = vpop.f32.mrf.mxu0
      %v784 = vpop.f32.mrf.mxu0
      %v785 = vadd.f32 0.0, %v784
      %v786 = vpop.f32.mrf.mxu0
      %787 = vmatprep.mubr.bf16.mxu0 0
      %788 = vmatmul.mubr.bf16.gmra.mxu0 %v739
      %v789 = vpop.f32.mrf.mxu0
      %v790 = vadd.f32 0.0, %v789
      %v791 = vpop.f32.mrf.mxu0
      %v792 = vpop.f32.mrf.mxu0
      %v793 = vadd.f32 0.0, %v792
      %v794 = vpop.f32.mrf.mxu0
      %795 = vmatprep.mubr.bf16.mxu0 0
      %796 = vmatmul.mubr.bf16.gmra.mxu0 %v742
      %v797 = vpop.f32.mrf.mxu0
      %v798 = vadd.f32 0.0, %v797
      %v799 = vpop.f32.mrf.mxu0
      %v800 = vpop.f32.mrf.mxu0
      %v801 = vadd.f32 0.0, %v800
      %v802 = vpop.f32.mrf.mxu0
      %803 = vmatprep.mubr.bf16.mxu0 0
      %804 = vmatmul.mubr.bf16.gmra.mxu0 %v745
      %v805 = vpop.f32.mrf.mxu0
      %v806 = vadd.f32 0.0, %v805
      %v807 = vpop.f32.mrf.mxu0
      %v808 = vpop.f32.mrf.mxu0
      %v809 = vadd.f32 0.0, %v808
      %v810 = vpop.f32.mrf.mxu0
      %811 = vdwg.mxu0
      %v812 = vadd.f32 %v545, %v782
      %v813 = vadd.f32 %v548, %v785
      %v814 = vadd.f32 %v553, %v790
      %v815 = vadd.f32 %v556, %v793
      %v816 = vadd.f32 %v561, %v798
      %v817 = vadd.f32 %v564, %v801
      %v818 = vadd.f32 %v569, %v806
      %v819 = vadd.f32 %v572, %v809
      %s820 = scalar_lea.vmem %s308, 144
      %v821 = vld [vmem:[%s820] sm:$0xf]
      %v822 = vld [vmem:[%s820 + $0x8] sm:$0xf]
      %v823 = vld [vmem:[%s820 + $0x10] sm:$0xf]
      %v824 = vld [vmem:[%s820 + $0x18] sm:$0xf]
      %v825 = vld [vmem:[%s820 + $0x20] sm:$0xf]
      %v826 = vld [vmem:[%s820 + $0x28] sm:$0xf]
      %v827 = vld [vmem:[%s820 + $0x30] sm:$0xf]
      %v828 = vld [vmem:[%s820 + $0x38] sm:$0xf]
      %s829 = scalar_lea.vmem %s2, 48
      %v830 = vld [vmem:[%s829] sm:$0xf]
      %v831 = vld [vmem:[%s829 + $0x4] sm:$0xf]
      %v832 = vld [vmem:[%s829 + $0x8] sm:$0xf]
      %v833 = vld [vmem:[%s829 + $0xc] sm:$0xf]
      %v842 = vunpack.c.l.b16 %v821
      %v843 = vunpack.c.l.b16 %v822
      %v844 = vunpack.c.l.b16 %v823
      %v845 = vunpack.c.l.b16 %v824
      %v846 = vunpack.c.l.b16 %v825
      %v847 = vunpack.c.l.b16 %v826
      %v848 = vunpack.c.l.b16 %v827
      %v849 = vunpack.c.l.b16 %v828
      %v850 = vpack.c.b16 %v843, %v842
      %v851 = vpack.c.b16 %v845, %v844
      %v852 = vpack.c.b16 %v847, %v846
      %v853 = vpack.c.b16 %v849, %v848
      %v858 = vunpack.c.l.b16 %v830
      %v859 = vunpack.c.l.b16 %v831
      %v860 = vunpack.c.l.b16 %v832
      %v861 = vunpack.c.l.b16 %v833
      %v862 = vpack.c.b16 %v859, %v858
      %v863 = vpack.c.b16 %v861, %v860
      %v867 = vsel %vm388, %v850, 0
      %v870 = vsel %vm388, %v851, 0
      %v873 = vsel %vm388, %v852, 0
      %v876 = vsel %vm388, %v853, 0
      %878 = vmatprep.subr.bf16.mxu0 0
      %879 = vmatpush1.bf16.msra.mxu0 0
      %880 = vmatprep.subr.bf16.mxu0 0
      %881 = vmatpush1.bf16.msra.mxu0 0
      %882 = vmatprep.subr.bf16.mxu0 0
      %883 = vmatpush1.bf16.msra.mxu0 0
      %884 = vmatprep.subr.bf16.mxu0 0
      %885 = vmatpush1.bf16.msra.mxu0 0
      %886 = vmatprep.subr.bf16.mxu0 0
      %887 = vmatpush1.bf16.msra.mxu0 0
      %888 = vmatprep.subr.bf16.mxu0 0
      %889 = vmatpush1.bf16.msra.mxu0 0
      %890 = vmatprep.subr.bf16.mxu0 0
      %891 = vmatpush1.bf16.msra.mxu0 %v863
      %892 = vmatprep.subr.bf16.mxu0 0
      %893 = vmatpush1.bf16.msra.mxu0 %v862
      %894 = vmatprep.subr.bf16.mxu0 0
      %895 = vmatpush2.bf16.msra.mxu0 0
      %896 = vmatprep.subr.bf16.mxu0 0
      %897 = vmatpush2.bf16.msra.mxu0 0
      %898 = vmatprep.subr.bf16.mxu0 0
      %899 = vmatpush2.bf16.msra.mxu0 0
      %900 = vmatprep.subr.bf16.mxu0 0
      %901 = vmatpush2.bf16.msra.mxu0 0
      %902 = vmatprep.subr.bf16.mxu0 0
      %903 = vmatpush2.bf16.msra.mxu0 0
      %904 = vmatprep.subr.bf16.mxu0 0
      %905 = vmatpush2.bf16.msra.mxu0 0
      %906 = vmatprep.subr.bf16.mxu0 0
      %907 = vmatpush2.bf16.msra.mxu0 0
      %908 = vmatprep.subr.bf16.mxu0 0
      %909 = vmatpush2.bf16.msra.mxu0 0
      %910 = vmatprep.mubr.bf16.mxu0 0
      %911 = vmatmul.mubr.bf16.gmra.mxu0 %v867
      %v912 = vpop.f32.mrf.mxu0
      %v913 = vadd.f32 0.0, %v912
      %v914 = vpop.f32.mrf.mxu0
      %v915 = vpop.f32.mrf.mxu0
      %v916 = vadd.f32 0.0, %v915
      %v917 = vpop.f32.mrf.mxu0
      %918 = vmatprep.mubr.bf16.mxu0 0
      %919 = vmatmul.mubr.bf16.gmra.mxu0 %v870
      %v920 = vpop.f32.mrf.mxu0
      %v921 = vadd.f32 0.0, %v920
      %v922 = vpop.f32.mrf.mxu0
      %v923 = vpop.f32.mrf.mxu0
      %v924 = vadd.f32 0.0, %v923
      %v925 = vpop.f32.mrf.mxu0
      %926 = vmatprep.mubr.bf16.mxu0 0
      %927 = vmatmul.mubr.bf16.gmra.mxu0 %v873
      %v928 = vpop.f32.mrf.mxu0
      %v929 = vadd.f32 0.0, %v928
      %v930 = vpop.f32.mrf.mxu0
      %v931 = vpop.f32.mrf.mxu0
      %v932 = vadd.f32 0.0, %v931
      %v933 = vpop.f32.mrf.mxu0
      %934 = vmatprep.mubr.bf16.mxu0 0
      %935 = vmatmul.mubr.bf16.gmra.mxu0 %v876
      %v936 = vpop.f32.mrf.mxu0
      %v937 = vadd.f32 0.0, %v936
      %v938 = vpop.f32.mrf.mxu0
      %v939 = vpop.f32.mrf.mxu0
      %v940 = vadd.f32 0.0, %v939
      %v941 = vpop.f32.mrf.mxu0
      %942 = vdwg.mxu0
      %v943 = vadd.f32 %v812, %v913
      %v944 = vadd.f32 %v813, %v916
      %v945 = vadd.f32 %v814, %v921
      %v946 = vadd.f32 %v815, %v924
      %v947 = vadd.f32 %v816, %v929
      %v948 = vadd.f32 %v817, %v932
      %v949 = vadd.f32 %v818, %v937
      %v950 = vadd.f32 %v819, %v940
      %s951 = scalar_lea.vmem %s308, 216
      %v952 = vld [vmem:[%s951] sm:$0xf]
      %v953 = vld [vmem:[%s951 + $0x8] sm:$0xf]
      %v954 = vld [vmem:[%s951 + $0x10] sm:$0xf]
      %v955 = vld [vmem:[%s951 + $0x18] sm:$0xf]
      %v956 = vld [vmem:[%s951 + $0x20] sm:$0xf]
      %v957 = vld [vmem:[%s951 + $0x28] sm:$0xf]
      %v958 = vld [vmem:[%s951 + $0x30] sm:$0xf]
      %v959 = vld [vmem:[%s951 + $0x38] sm:$0xf]
      %s960 = scalar_lea.vmem %s2, 64
      %v961 = vld [vmem:[%s960] sm:$0xf]
      %v962 = vld [vmem:[%s960 + $0x4] sm:$0xf]
      %v963 = vld [vmem:[%s960 + $0x8] sm:$0xf]
      %v964 = vld [vmem:[%s960 + $0xc] sm:$0xf]
      %v973 = vunpack.c.l.b16 %v952
      %v974 = vunpack.c.l.b16 %v953
      %v975 = vunpack.c.l.b16 %v954
      %v976 = vunpack.c.l.b16 %v955
      %v977 = vunpack.c.l.b16 %v956
      %v978 = vunpack.c.l.b16 %v957
      %v979 = vunpack.c.l.b16 %v958
      %v980 = vunpack.c.l.b16 %v959
      %v981 = vpack.c.b16 %v974, %v973
      %v982 = vpack.c.b16 %v976, %v975
      %v983 = vpack.c.b16 %v978, %v977
      %v984 = vpack.c.b16 %v980, %v979
      %v989 = vunpack.c.l.b16 %v961
      %v990 = vunpack.c.l.b16 %v962
      %v991 = vunpack.c.l.b16 %v963
      %v992 = vunpack.c.l.b16 %v964
      %v993 = vpack.c.b16 %v990, %v989
      %v994 = vpack.c.b16 %v992, %v991
      %v998 = vsel %vm388, %v981, 0
      %v1001 = vsel %vm388, %v982, 0
      %v1004 = vsel %vm388, %v983, 0
      %v1007 = vsel %vm388, %v984, 0
      %1009 = vmatprep.subr.bf16.mxu0 0
      %1010 = vmatpush1.bf16.msra.mxu0 0
      %1011 = vmatprep.subr.bf16.mxu0 0
      %1012 = vmatpush1.bf16.msra.mxu0 0
      %1013 = vmatprep.subr.bf16.mxu0 0
      %1014 = vmatpush1.bf16.msra.mxu0 0
      %1015 = vmatprep.subr.bf16.mxu0 0
      %1016 = vmatpush1.bf16.msra.mxu0 0
      %1017 = vmatprep.subr.bf16.mxu0 0
      %1018 = vmatpush1.bf16.msra.mxu0 0
      %1019 = vmatprep.subr.bf16.mxu0 0
      %1020 = vmatpush1.bf16.msra.mxu0 0
      %1021 = vmatprep.subr.bf16.mxu0 0
      %1022 = vmatpush1.bf16.msra.mxu0 %v994
      %1023 = vmatprep.subr.bf16.mxu0 0
      %1024 = vmatpush1.bf16.msra.mxu0 %v993
      %1025 = vmatprep.subr.bf16.mxu0 0
      %1026 = vmatpush2.bf16.msra.mxu0 0
      %1027 = vmatprep.subr.bf16.mxu0 0
      %1028 = vmatpush2.bf16.msra.mxu0 0
      %1029 = vmatprep.subr.bf16.mxu0 0
      %1030 = vmatpush2.bf16.msra.mxu0 0
      %1031 = vmatprep.subr.bf16.mxu0 0
      %1032 = vmatpush2.bf16.msra.mxu0 0
      %1033 = vmatprep.subr.bf16.mxu0 0
      %1034 = vmatpush2.bf16.msra.mxu0 0
      %1035 = vmatprep.subr.bf16.mxu0 0
      %1036 = vmatpush2.bf16.msra.mxu0 0
      %1037 = vmatprep.subr.bf16.mxu0 0
      %1038 = vmatpush2.bf16.msra.mxu0 0
      %1039 = vmatprep.subr.bf16.mxu0 0
      %1040 = vmatpush2.bf16.msra.mxu0 0
      %1041 = vmatprep.mubr.bf16.mxu0 0
      %1042 = vmatmul.mubr.bf16.gmra.mxu0 %v998
      %v1043 = vpop.f32.mrf.mxu0
      %v1044 = vadd.f32 0.0, %v1043
      %v1045 = vpop.f32.mrf.mxu0
      %v1046 = vpop.f32.mrf.mxu0
      %v1047 = vadd.f32 0.0, %v1046
      %v1048 = vpop.f32.mrf.mxu0
      %1049 = vmatprep.mubr.bf16.mxu0 0
      %1050 = vmatmul.mubr.bf16.gmra.mxu0 %v1001
      %v1051 = vpop.f32.mrf.mxu0
      %v1052 = vadd.f32 0.0, %v1051
      %v1053 = vpop.f32.mrf.mxu0
      %v1054 = vpop.f32.mrf.mxu0
      %v1055 = vadd.f32 0.0, %v1054
      %v1056 = vpop.f32.mrf.mxu0
      %1057 = vmatprep.mubr.bf16.mxu0 0
      %1058 = vmatmul.mubr.bf16.gmra.mxu0 %v1004
      %v1059 = vpop.f32.mrf.mxu0
      %v1060 = vadd.f32 0.0, %v1059
      %v1061 = vpop.f32.mrf.mxu0
      %v1062 = vpop.f32.mrf.mxu0
      %v1063 = vadd.f32 0.0, %v1062
      %v1064 = vpop.f32.mrf.mxu0
      %1065 = vmatprep.mubr.bf16.mxu0 0
      %1066 = vmatmul.mubr.bf16.gmra.mxu0 %v1007
      %v1067 = vpop.f32.mrf.mxu0
      %v1068 = vadd.f32 0.0, %v1067
      %v1069 = vpop.f32.mrf.mxu0
      %v1070 = vpop.f32.mrf.mxu0
      %v1071 = vadd.f32 0.0, %v1070
      %v1072 = vpop.f32.mrf.mxu0
      %1073 = vdwg.mxu0
      %v1074 = vadd.f32 %v943, %v1044
      %v1075 = vadd.f32 %v944, %v1047
      %v1076 = vadd.f32 %v945, %v1052
      %v1077 = vadd.f32 %v946, %v1055
      %v1078 = vadd.f32 %v947, %v1060
      %v1079 = vadd.f32 %v948, %v1063
      %v1080 = vadd.f32 %v949, %v1068
      %v1081 = vadd.f32 %v950, %v1071
      %v1082 = vld [vmem:[%s820] sm:$0xf]
      %v1083 = vld [vmem:[%s820 + $0x4] sm:$0x1]
      %v1084 = vld [vmem:[%s820 + $0x8] sm:$0xf]
      %v1085 = vld [vmem:[%s820 + $0xc] sm:$0x1]
      %v1086 = vld [vmem:[%s820 + $0x10] sm:$0xf]
      %v1087 = vld [vmem:[%s820 + $0x14] sm:$0x1]
      %v1088 = vld [vmem:[%s820 + $0x18] sm:$0xf]
      %v1089 = vld [vmem:[%s820 + $0x1c] sm:$0x1]
      %v1090 = vld [vmem:[%s820 + $0x20] sm:$0xf]
      %v1091 = vld [vmem:[%s820 + $0x24] sm:$0x1]
      %v1092 = vld [vmem:[%s820 + $0x28] sm:$0xf]
      %v1093 = vld [vmem:[%s820 + $0x2c] sm:$0x1]
      %v1094 = vld [vmem:[%s820 + $0x30] sm:$0xf]
      %v1095 = vld [vmem:[%s820 + $0x34] sm:$0x1]
      %v1096 = vld [vmem:[%s820 + $0x38] sm:$0xf]
      %v1097 = vld [vmem:[%s820 + $0x3c] sm:$0x1]
      %v1099 = vshrl.u32 %v1082, 16
      %v1101 = vrot.slane %v1099, 4
      %v1102 = vshll.u32 %v1082, 16
      %v1104 = vrot.slane %v1102, 5
      %v1105 = vor.u32 %v1101, %v1104
      %v1106 = vrot.slane %v1105, 4
      %v1108 = vshll.u32 %v1083, 16
      %v1110 = vrot.slane %v1108, 5
      %v1111 = vsel %vm593, %v1106, %v1110
      %v1113 = vshrl.u32 %v1084, 16
      %v1115 = vrot.slane %v1113, 4
      %v1116 = vshll.u32 %v1084, 16
      %v1118 = vrot.slane %v1116, 5
      %v1119 = vor.u32 %v1115, %v1118
      %v1120 = vrot.slane %v1119, 4
      %v1122 = vshll.u32 %v1085, 16
      %v1124 = vrot.slane %v1122, 5
      %v1125 = vsel %vm593, %v1120, %v1124
      %v1127 = vshrl.u32 %v1086, 16
      %v1129 = vrot.slane %v1127, 4
      %v1130 = vshll.u32 %v1086, 16
      %v1132 = vrot.slane %v1130, 5
      %v1133 = vor.u32 %v1129, %v1132
      %v1134 = vrot.slane %v1133, 4
      %v1136 = vshll.u32 %v1087, 16
      %v1138 = vrot.slane %v1136, 5
      %v1139 = vsel %vm593, %v1134, %v1138
      %v1141 = vshrl.u32 %v1088, 16
      %v1143 = vrot.slane %v1141, 4
      %v1144 = vshll.u32 %v1088, 16
      %v1146 = vrot.slane %v1144, 5
      %v1147 = vor.u32 %v1143, %v1146
      %v1148 = vrot.slane %v1147, 4
      %v1150 = vshll.u32 %v1089, 16
      %v1152 = vrot.slane %v1150, 5
      %v1153 = vsel %vm593, %v1148, %v1152
      %v1155 = vshrl.u32 %v1090, 16
      %v1157 = vrot.slane %v1155, 4
      %v1158 = vshll.u32 %v1090, 16
      %v1160 = vrot.slane %v1158, 5
      %v1161 = vor.u32 %v1157, %v1160
      %v1162 = vrot.slane %v1161, 4
      %v1164 = vshll.u32 %v1091, 16
      %v1166 = vrot.slane %v1164, 5
      %v1167 = vsel %vm593, %v1162, %v1166
      %v1169 = vshrl.u32 %v1092, 16
      %v1171 = vrot.slane %v1169, 4
      %v1172 = vshll.u32 %v1092, 16
      %v1174 = vrot.slane %v1172, 5
      %v1175 = vor.u32 %v1171, %v1174
      %v1176 = vrot.slane %v1175, 4
      %v1178 = vshll.u32 %v1093, 16
      %v1180 = vrot.slane %v1178, 5
      %v1181 = vsel %vm593, %v1176, %v1180
      %v1183 = vshrl.u32 %v1094, 16
      %v1185 = vrot.slane %v1183, 4
      %v1186 = vshll.u32 %v1094, 16
      %v1188 = vrot.slane %v1186, 5
      %v1189 = vor.u32 %v1185, %v1188
      %v1190 = vrot.slane %v1189, 4
      %v1192 = vshll.u32 %v1095, 16
      %v1194 = vrot.slane %v1192, 5
      %v1195 = vsel %vm593, %v1190, %v1194
      %v1197 = vshrl.u32 %v1096, 16
      %v1199 = vrot.slane %v1197, 4
      %v1200 = vshll.u32 %v1096, 16
      %v1202 = vrot.slane %v1200, 5
      %v1203 = vor.u32 %v1199, %v1202
      %v1204 = vrot.slane %v1203, 4
      %v1206 = vshll.u32 %v1097, 16
      %v1208 = vrot.slane %v1206, 5
      %v1209 = vsel %vm593, %v1204, %v1208
      %s1210 = scalar_lea.vmem %s2, 80
      %v1211 = vld [vmem:[%s1210] sm:$0xf]
      %v1212 = vld [vmem:[%s1210 + $0x4] sm:$0xf]
      %v1213 = vld [vmem:[%s1210 + $0x8] sm:$0xf]
      %v1214 = vld [vmem:[%s1210 + $0xc] sm:$0xf]
      %v1215 = vunpack.c.l.b16 %v1111
      %v1216 = vunpack.c.l.b16 %v1125
      %v1217 = vunpack.c.l.b16 %v1139
      %v1218 = vunpack.c.l.b16 %v1153
      %v1219 = vunpack.c.l.b16 %v1167
      %v1220 = vunpack.c.l.b16 %v1181
      %v1221 = vunpack.c.l.b16 %v1195
      %v1222 = vunpack.c.l.b16 %v1209
      %v1223 = vpack.c.b16 %v1216, %v1215
      %v1224 = vpack.c.b16 %v1218, %v1217
      %v1225 = vpack.c.b16 %v1220, %v1219
      %v1226 = vpack.c.b16 %v1222, %v1221
      %v1231 = vunpack.c.l.b16 %v1211
      %v1232 = vunpack.c.l.b16 %v1212
      %v1233 = vunpack.c.l.b16 %v1213
      %v1234 = vunpack.c.l.b16 %v1214
      %v1235 = vpack.c.b16 %v1232, %v1231
      %v1236 = vpack.c.b16 %v1234, %v1233
      %v1240 = vsel %vm388, %v1223, 0
      %v1243 = vsel %vm388, %v1224, 0
      %v1246 = vsel %vm388, %v1225, 0
      %v1249 = vsel %vm388, %v1226, 0
      %1251 = vmatprep.subr.bf16.mxu0 0
      %1252 = vmatpush1.bf16.msra.mxu0 0
      %1253 = vmatprep.subr.bf16.mxu0 0
      %1254 = vmatpush1.bf16.msra.mxu0 0
      %1255 = vmatprep.subr.bf16.mxu0 0
      %1256 = vmatpush1.bf16.msra.mxu0 0
      %1257 = vmatprep.subr.bf16.mxu0 0
      %1258 = vmatpush1.bf16.msra.mxu0 0
      %1259 = vmatprep.subr.bf16.mxu0 0
      %1260 = vmatpush1.bf16.msra.mxu0 0
      %1261 = vmatprep.subr.bf16.mxu0 0
      %1262 = vmatpush1.bf16.msra.mxu0 0
      %1263 = vmatprep.subr.bf16.mxu0 0
      %1264 = vmatpush1.bf16.msra.mxu0 %v1236
      %1265 = vmatprep.subr.bf16.mxu0 0
      %1266 = vmatpush1.bf16.msra.mxu0 %v1235
      %1267 = vmatprep.subr.bf16.mxu0 0
      %1268 = vmatpush2.bf16.msra.mxu0 0
      %1269 = vmatprep.subr.bf16.mxu0 0
      %1270 = vmatpush2.bf16.msra.mxu0 0
      %1271 = vmatprep.subr.bf16.mxu0 0
      %1272 = vmatpush2.bf16.msra.mxu0 0
      %1273 = vmatprep.subr.bf16.mxu0 0
      %1274 = vmatpush2.bf16.msra.mxu0 0
      %1275 = vmatprep.subr.bf16.mxu0 0
      %1276 = vmatpush2.bf16.msra.mxu0 0
      %1277 = vmatprep.subr.bf16.mxu0 0
      %1278 = vmatpush2.bf16.msra.mxu0 0
      %1279 = vmatprep.subr.bf16.mxu0 0
      %1280 = vmatpush2.bf16.msra.mxu0 0
      %1281 = vmatprep.subr.bf16.mxu0 0
      %1282 = vmatpush2.bf16.msra.mxu0 0
      %1283 = vmatprep.mubr.bf16.mxu0 0
      %1284 = vmatmul.mubr.bf16.gmra.mxu0 %v1240
      %v1285 = vpop.f32.mrf.mxu0
      %v1286 = vadd.f32 0.0, %v1285
      %v1287 = vpop.f32.mrf.mxu0
      %v1288 = vpop.f32.mrf.mxu0
      %v1289 = vadd.f32 0.0, %v1288
      %v1290 = vpop.f32.mrf.mxu0
      %1291 = vmatprep.mubr.bf16.mxu0 0
      %1292 = vmatmul.mubr.bf16.gmra.mxu0 %v1243
      %v1293 = vpop.f32.mrf.mxu0
      %v1294 = vadd.f32 0.0, %v1293
      %v1295 = vpop.f32.mrf.mxu0
      %v1296 = vpop.f32.mrf.mxu0
      %v1297 = vadd.f32 0.0, %v1296
      %v1298 = vpop.f32.mrf.mxu0
      %1299 = vmatprep.mubr.bf16.mxu0 0
      %1300 = vmatmul.mubr.bf16.gmra.mxu0 %v1246
      %v1301 = vpop.f32.mrf.mxu0
      %v1302 = vadd.f32 0.0, %v1301
      %v1303 = vpop.f32.mrf.mxu0
      %v1304 = vpop.f32.mrf.mxu0
      %v1305 = vadd.f32 0.0, %v1304
      %v1306 = vpop.f32.mrf.mxu0
      %1307 = vmatprep.mubr.bf16.mxu0 0
      %1308 = vmatmul.mubr.bf16.gmra.mxu0 %v1249
      %v1309 = vpop.f32.mrf.mxu0
      %v1310 = vadd.f32 0.0, %v1309
      %v1311 = vpop.f32.mrf.mxu0
      %v1312 = vpop.f32.mrf.mxu0
      %v1313 = vadd.f32 0.0, %v1312
      %v1314 = vpop.f32.mrf.mxu0
      %1315 = vdwg.mxu0
      %v1316 = vadd.f32 %v1074, %v1286
      %v1317 = vadd.f32 %v1075, %v1289
      %v1318 = vadd.f32 %v1076, %v1294
      %v1319 = vadd.f32 %v1077, %v1297
      %v1320 = vadd.f32 %v1078, %v1302
      %v1321 = vadd.f32 %v1079, %v1305
      %v1322 = vadd.f32 %v1080, %v1310
      %v1323 = vadd.f32 %v1081, %v1313
      %s1324 = scalar_lea.vmem %s308, 8
      %v1325 = vld [vmem:[%s1324] sm:$0xf]
      %v1326 = vld [vmem:[%s1324 + $0x8] sm:$0xf]
      %v1327 = vld [vmem:[%s1324 + $0x10] sm:$0xf]
      %v1328 = vld [vmem:[%s1324 + $0x18] sm:$0xf]
      %v1329 = vld [vmem:[%s1324 + $0x20] sm:$0xf]
      %v1330 = vld [vmem:[%s1324 + $0x28] sm:$0xf]
      %v1331 = vld [vmem:[%s1324 + $0x30] sm:$0xf]
      %v1332 = vld [vmem:[%s1324 + $0x38] sm:$0xf]
      %s1333 = scalar_lea.vmem %s2, 96
      %v1334 = vld [vmem:[%s1333] sm:$0xf]
      %v1335 = vld [vmem:[%s1333 + $0x4] sm:$0xf]
      %v1336 = vld [vmem:[%s1333 + $0x8] sm:$0xf]
      %v1337 = vld [vmem:[%s1333 + $0xc] sm:$0xf]
      %v1346 = vunpack.c.l.b16 %v1325
      %v1347 = vunpack.c.l.b16 %v1326
      %v1348 = vunpack.c.l.b16 %v1327
      %v1349 = vunpack.c.l.b16 %v1328
      %v1350 = vunpack.c.l.b16 %v1329
      %v1351 = vunpack.c.l.b16 %v1330
      %v1352 = vunpack.c.l.b16 %v1331
      %v1353 = vunpack.c.l.b16 %v1332
      %v1354 = vpack.c.b16 %v1347, %v1346
      %v1355 = vpack.c.b16 %v1349, %v1348
      %v1356 = vpack.c.b16 %v1351, %v1350
      %v1357 = vpack.c.b16 %v1353, %v1352
      %v1362 = vunpack.c.l.b16 %v1334
      %v1363 = vunpack.c.l.b16 %v1335
      %v1364 = vunpack.c.l.b16 %v1336
      %v1365 = vunpack.c.l.b16 %v1337
      %v1366 = vpack.c.b16 %v1363, %v1362
      %v1367 = vpack.c.b16 %v1365, %v1364
      %v1371 = vsel %vm388, %v1354, 0
      %v1374 = vsel %vm388, %v1355, 0
      %v1377 = vsel %vm388, %v1356, 0
      %v1380 = vsel %vm388, %v1357, 0
      %1382 = vmatprep.subr.bf16.mxu0 0
      %1383 = vmatpush1.bf16.msra.mxu0 0
      %1384 = vmatprep.subr.bf16.mxu0 0
      %1385 = vmatpush1.bf16.msra.mxu0 0
      %1386 = vmatprep.subr.bf16.mxu0 0
      %1387 = vmatpush1.bf16.msra.mxu0 0
      %1388 = vmatprep.subr.bf16.mxu0 0
      %1389 = vmatpush1.bf16.msra.mxu0 0
      %1390 = vmatprep.subr.bf16.mxu0 0
      %1391 = vmatpush1.bf16.msra.mxu0 0
      %1392 = vmatprep.subr.bf16.mxu0 0
      %1393 = vmatpush1.bf16.msra.mxu0 0
      %1394 = vmatprep.subr.bf16.mxu0 0
      %1395 = vmatpush1.bf16.msra.mxu0 %v1367
      %1396 = vmatprep.subr.bf16.mxu0 0
      %1397 = vmatpush1.bf16.msra.mxu0 %v1366
      %1398 = vmatprep.subr.bf16.mxu0 0
      %1399 = vmatpush2.bf16.msra.mxu0 0
      %1400 = vmatprep.subr.bf16.mxu0 0
      %1401 = vmatpush2.bf16.msra.mxu0 0
      %1402 = vmatprep.subr.bf16.mxu0 0
      %1403 = vmatpush2.bf16.msra.mxu0 0
      %1404 = vmatprep.subr.bf16.mxu0 0
      %1405 = vmatpush2.bf16.msra.mxu0 0
      %1406 = vmatprep.subr.bf16.mxu0 0
      %1407 = vmatpush2.bf16.msra.mxu0 0
      %1408 = vmatprep.subr.bf16.mxu0 0
      %1409 = vmatpush2.bf16.msra.mxu0 0
      %1410 = vmatprep.subr.bf16.mxu0 0
      %1411 = vmatpush2.bf16.msra.mxu0 0
      %1412 = vmatprep.subr.bf16.mxu0 0
      %1413 = vmatpush2.bf16.msra.mxu0 0
      %1414 = vmatprep.mubr.bf16.mxu0 0
      %1415 = vmatmul.mubr.bf16.gmra.mxu0 %v1371
      %v1416 = vpop.f32.mrf.mxu0
      %v1417 = vadd.f32 0.0, %v1416
      %v1418 = vpop.f32.mrf.mxu0
      %v1419 = vpop.f32.mrf.mxu0
      %v1420 = vadd.f32 0.0, %v1419
      %v1421 = vpop.f32.mrf.mxu0
      %1422 = vmatprep.mubr.bf16.mxu0 0
      %1423 = vmatmul.mubr.bf16.gmra.mxu0 %v1374
      %v1424 = vpop.f32.mrf.mxu0
      %v1425 = vadd.f32 0.0, %v1424
      %v1426 = vpop.f32.mrf.mxu0
      %v1427 = vpop.f32.mrf.mxu0
      %v1428 = vadd.f32 0.0, %v1427
      %v1429 = vpop.f32.mrf.mxu0
      %1430 = vmatprep.mubr.bf16.mxu0 0
      %1431 = vmatmul.mubr.bf16.gmra.mxu0 %v1377
      %v1432 = vpop.f32.mrf.mxu0
      %v1433 = vadd.f32 0.0, %v1432
      %v1434 = vpop.f32.mrf.mxu0
      %v1435 = vpop.f32.mrf.mxu0
      %v1436 = vadd.f32 0.0, %v1435
      %v1437 = vpop.f32.mrf.mxu0
      %1438 = vmatprep.mubr.bf16.mxu0 0
      %1439 = vmatmul.mubr.bf16.gmra.mxu0 %v1380
      %v1440 = vpop.f32.mrf.mxu0
      %v1441 = vadd.f32 0.0, %v1440
      %v1442 = vpop.f32.mrf.mxu0
      %v1443 = vpop.f32.mrf.mxu0
      %v1444 = vadd.f32 0.0, %v1443
      %v1445 = vpop.f32.mrf.mxu0
      %1446 = vdwg.mxu0
      %v1447 = vadd.f32 %v1316, %v1417
      %v1448 = vadd.f32 %v1317, %v1420
      %v1449 = vadd.f32 %v1318, %v1425
      %v1450 = vadd.f32 %v1319, %v1428
      %v1451 = vadd.f32 %v1320, %v1433
      %v1452 = vadd.f32 %v1321, %v1436
      %v1453 = vadd.f32 %v1322, %v1441
      %v1454 = vadd.f32 %v1323, %v1444
      %s1455 = scalar_lea.vmem %s308, 80
      %v1456 = vld [vmem:[%s1455] sm:$0xf]
      %v1457 = vld [vmem:[%s1455 + $0x8] sm:$0xf]
      %v1458 = vld [vmem:[%s1455 + $0x10] sm:$0xf]
      %v1459 = vld [vmem:[%s1455 + $0x18] sm:$0xf]
      %v1460 = vld [vmem:[%s1455 + $0x20] sm:$0xf]
      %v1461 = vld [vmem:[%s1455 + $0x28] sm:$0xf]
      %v1462 = vld [vmem:[%s1455 + $0x30] sm:$0xf]
      %v1463 = vld [vmem:[%s1455 + $0x38] sm:$0xf]
      %s1464 = scalar_lea.vmem %s2, 112
      %v1465 = vld [vmem:[%s1464] sm:$0xf]
      %v1466 = vld [vmem:[%s1464 + $0x4] sm:$0xf]
      %v1467 = vld [vmem:[%s1464 + $0x8] sm:$0xf]
      %v1468 = vld [vmem:[%s1464 + $0xc] sm:$0xf]
      %v1477 = vunpack.c.l.b16 %v1456
      %v1478 = vunpack.c.l.b16 %v1457
      %v1479 = vunpack.c.l.b16 %v1458
      %v1480 = vunpack.c.l.b16 %v1459
      %v1481 = vunpack.c.l.b16 %v1460
      %v1482 = vunpack.c.l.b16 %v1461
      %v1483 = vunpack.c.l.b16 %v1462
      %v1484 = vunpack.c.l.b16 %v1463
      %v1485 = vpack.c.b16 %v1478, %v1477
      %v1486 = vpack.c.b16 %v1480, %v1479
      %v1487 = vpack.c.b16 %v1482, %v1481
      %v1488 = vpack.c.b16 %v1484, %v1483
      %v1493 = vunpack.c.l.b16 %v1465
      %v1494 = vunpack.c.l.b16 %v1466
      %v1495 = vunpack.c.l.b16 %v1467
      %v1496 = vunpack.c.l.b16 %v1468
      %v1497 = vpack.c.b16 %v1494, %v1493
      %v1498 = vpack.c.b16 %v1496, %v1495
      %v1502 = vsel %vm388, %v1485, 0
      %v1505 = vsel %vm388, %v1486, 0
      %v1508 = vsel %vm388, %v1487, 0
      %v1511 = vsel %vm388, %v1488, 0
      %1513 = vmatprep.subr.bf16.mxu0 0
      %1514 = vmatpush1.bf16.msra.mxu0 0
      %1515 = vmatprep.subr.bf16.mxu0 0
      %1516 = vmatpush1.bf16.msra.mxu0 0
      %1517 = vmatprep.subr.bf16.mxu0 0
      %1518 = vmatpush1.bf16.msra.mxu0 0
      %1519 = vmatprep.subr.bf16.mxu0 0
      %1520 = vmatpush1.bf16.msra.mxu0 0
      %1521 = vmatprep.subr.bf16.mxu0 0
      %1522 = vmatpush1.bf16.msra.mxu0 0
      %1523 = vmatprep.subr.bf16.mxu0 0
      %1524 = vmatpush1.bf16.msra.mxu0 0
      %1525 = vmatprep.subr.bf16.mxu0 0
      %1526 = vmatpush1.bf16.msra.mxu0 %v1498
      %1527 = vmatprep.subr.bf16.mxu0 0
      %1528 = vmatpush1.bf16.msra.mxu0 %v1497
      %1529 = vmatprep.subr.bf16.mxu0 0
      %1530 = vmatpush2.bf16.msra.mxu0 0
      %1531 = vmatprep.subr.bf16.mxu0 0
      %1532 = vmatpush2.bf16.msra.mxu0 0
      %1533 = vmatprep.subr.bf16.mxu0 0
      %1534 = vmatpush2.bf16.msra.mxu0 0
      %1535 = vmatprep.subr.bf16.mxu0 0
      %1536 = vmatpush2.bf16.msra.mxu0 0
      %1537 = vmatprep.subr.bf16.mxu0 0
      %1538 = vmatpush2.bf16.msra.mxu0 0
      %1539 = vmatprep.subr.bf16.mxu0 0
      %1540 = vmatpush2.bf16.msra.mxu0 0
      %1541 = vmatprep.subr.bf16.mxu0 0
      %1542 = vmatpush2.bf16.msra.mxu0 0
      %1543 = vmatprep.subr.bf16.mxu0 0
      %1544 = vmatpush2.bf16.msra.mxu0 0
      %1545 = vmatprep.mubr.bf16.mxu0 0
      %1546 = vmatmul.mubr.bf16.gmra.mxu0 %v1502
      %v1547 = vpop.f32.mrf.mxu0
      %v1548 = vadd.f32 0.0, %v1547
      %v1549 = vpop.f32.mrf.mxu0
      %v1550 = vpop.f32.mrf.mxu0
      %v1551 = vadd.f32 0.0, %v1550
      %v1552 = vpop.f32.mrf.mxu0
      %1553 = vmatprep.mubr.bf16.mxu0 0
      %1554 = vmatmul.mubr.bf16.gmra.mxu0 %v1505
      %v1555 = vpop.f32.mrf.mxu0
      %v1556 = vadd.f32 0.0, %v1555
      %v1557 = vpop.f32.mrf.mxu0
      %v1558 = vpop.f32.mrf.mxu0
      %v1559 = vadd.f32 0.0, %v1558
      %v1560 = vpop.f32.mrf.mxu0
      %1561 = vmatprep.mubr.bf16.mxu0 0
      %1562 = vmatmul.mubr.bf16.gmra.mxu0 %v1508
      %v1563 = vpop.f32.mrf.mxu0
      %v1564 = vadd.f32 0.0, %v1563
      %v1565 = vpop.f32.mrf.mxu0
      %v1566 = vpop.f32.mrf.mxu0
      %v1567 = vadd.f32 0.0, %v1566
      %v1568 = vpop.f32.mrf.mxu0
      %1569 = vmatprep.mubr.bf16.mxu0 0
      %1570 = vmatmul.mubr.bf16.gmra.mxu0 %v1511
      %v1571 = vpop.f32.mrf.mxu0
      %v1572 = vadd.f32 0.0, %v1571
      %v1573 = vpop.f32.mrf.mxu0
      %v1574 = vpop.f32.mrf.mxu0
      %v1575 = vadd.f32 0.0, %v1574
      %v1576 = vpop.f32.mrf.mxu0
      %1577 = vdwg.mxu0
      %v1578 = vadd.f32 %v1447, %v1548
      %v1579 = vadd.f32 %v1448, %v1551
      %v1580 = vadd.f32 %v1449, %v1556
      %v1581 = vadd.f32 %v1450, %v1559
      %v1582 = vadd.f32 %v1451, %v1564
      %v1583 = vadd.f32 %v1452, %v1567
      %v1584 = vadd.f32 %v1453, %v1572
      %v1585 = vadd.f32 %v1454, %v1575
      %v1586 = vld [vmem:[%s1324] sm:$0xf]
      %v1587 = vld [vmem:[%s1324 + $0x4] sm:$0x1]
      %v1588 = vld [vmem:[%s1324 + $0x8] sm:$0xf]
      %v1589 = vld [vmem:[%s1324 + $0xc] sm:$0x1]
      %v1590 = vld [vmem:[%s1324 + $0x10] sm:$0xf]
      %v1591 = vld [vmem:[%s1324 + $0x14] sm:$0x1]
      %v1592 = vld [vmem:[%s1324 + $0x18] sm:$0xf]
      %v1593 = vld [vmem:[%s1324 + $0x1c] sm:$0x1]
      %v1594 = vld [vmem:[%s1324 + $0x20] sm:$0xf]
      %v1595 = vld [vmem:[%s1324 + $0x24] sm:$0x1]
      %v1596 = vld [vmem:[%s1324 + $0x28] sm:$0xf]
      %v1597 = vld [vmem:[%s1324 + $0x2c] sm:$0x1]
      %v1598 = vld [vmem:[%s1324 + $0x30] sm:$0xf]
      %v1599 = vld [vmem:[%s1324 + $0x34] sm:$0x1]
      %v1600 = vld [vmem:[%s1324 + $0x38] sm:$0xf]
      %v1601 = vld [vmem:[%s1324 + $0x3c] sm:$0x1]
      %v1603 = vshrl.u32 %v1586, 16
      %v1605 = vrot.slane %v1603, 4
      %v1606 = vshll.u32 %v1586, 16
      %v1608 = vrot.slane %v1606, 5
      %v1609 = vor.u32 %v1605, %v1608
      %v1610 = vrot.slane %v1609, 4
      %v1612 = vshll.u32 %v1587, 16
      %v1614 = vrot.slane %v1612, 5
      %v1615 = vsel %vm593, %v1610, %v1614
      %v1617 = vshrl.u32 %v1588, 16
      %v1619 = vrot.slane %v1617, 4
      %v1620 = vshll.u32 %v1588, 16
      %v1622 = vrot.slane %v1620, 5
      %v1623 = vor.u32 %v1619, %v1622
      %v1624 = vrot.slane %v1623, 4
      %v1626 = vshll.u32 %v1589, 16
      %v1628 = vrot.slane %v1626, 5
      %v1629 = vsel %vm593, %v1624, %v1628
      %v1631 = vshrl.u32 %v1590, 16
      %v1633 = vrot.slane %v1631, 4
      %v1634 = vshll.u32 %v1590, 16
      %v1636 = vrot.slane %v1634, 5
      %v1637 = vor.u32 %v1633, %v1636
      %v1638 = vrot.slane %v1637, 4
      %v1640 = vshll.u32 %v1591, 16
      %v1642 = vrot.slane %v1640, 5
      %v1643 = vsel %vm593, %v1638, %v1642
      %v1645 = vshrl.u32 %v1592, 16
      %v1647 = vrot.slane %v1645, 4
      %v1648 = vshll.u32 %v1592, 16
      %v1650 = vrot.slane %v1648, 5
      %v1651 = vor.u32 %v1647, %v1650
      %v1652 = vrot.slane %v1651, 4
      %v1654 = vshll.u32 %v1593, 16
      %v1656 = vrot.slane %v1654, 5
      %v1657 = vsel %vm593, %v1652, %v1656
      %v1659 = vshrl.u32 %v1594, 16
      %v1661 = vrot.slane %v1659, 4
      %v1662 = vshll.u32 %v1594, 16
      %v1664 = vrot.slane %v1662, 5
      %v1665 = vor.u32 %v1661, %v1664
      %v1666 = vrot.slane %v1665, 4
      %v1668 = vshll.u32 %v1595, 16
      %v1670 = vrot.slane %v1668, 5
      %v1671 = vsel %vm593, %v1666, %v1670
      %v1673 = vshrl.u32 %v1596, 16
      %v1675 = vrot.slane %v1673, 4
      %v1676 = vshll.u32 %v1596, 16
      %v1678 = vrot.slane %v1676, 5
      %v1679 = vor.u32 %v1675, %v1678
      %v1680 = vrot.slane %v1679, 4
      %v1682 = vshll.u32 %v1597, 16
      %v1684 = vrot.slane %v1682, 5
      %v1685 = vsel %vm593, %v1680, %v1684
      %v1687 = vshrl.u32 %v1598, 16
      %v1689 = vrot.slane %v1687, 4
      %v1690 = vshll.u32 %v1598, 16
      %v1692 = vrot.slane %v1690, 5
      %v1693 = vor.u32 %v1689, %v1692
      %v1694 = vrot.slane %v1693, 4
      %v1696 = vshll.u32 %v1599, 16
      %v1698 = vrot.slane %v1696, 5
      %v1699 = vsel %vm593, %v1694, %v1698
      %v1701 = vshrl.u32 %v1600, 16
      %v1703 = vrot.slane %v1701, 4
      %v1704 = vshll.u32 %v1600, 16
      %v1706 = vrot.slane %v1704, 5
      %v1707 = vor.u32 %v1703, %v1706
      %v1708 = vrot.slane %v1707, 4
      %v1710 = vshll.u32 %v1601, 16
      %v1712 = vrot.slane %v1710, 5
      %v1713 = vsel %vm593, %v1708, %v1712
      %s1714 = scalar_lea.vmem %s2, 128
      %v1715 = vld [vmem:[%s1714] sm:$0xf]
      %v1716 = vld [vmem:[%s1714 + $0x4] sm:$0xf]
      %v1717 = vld [vmem:[%s1714 + $0x8] sm:$0xf]
      %v1718 = vld [vmem:[%s1714 + $0xc] sm:$0xf]
      %v1719 = vunpack.c.l.b16 %v1615
      %v1720 = vunpack.c.l.b16 %v1629
      %v1721 = vunpack.c.l.b16 %v1643
      %v1722 = vunpack.c.l.b16 %v1657
      %v1723 = vunpack.c.l.b16 %v1671
      %v1724 = vunpack.c.l.b16 %v1685
      %v1725 = vunpack.c.l.b16 %v1699
      %v1726 = vunpack.c.l.b16 %v1713
      %v1727 = vpack.c.b16 %v1720, %v1719
      %v1728 = vpack.c.b16 %v1722, %v1721
      %v1729 = vpack.c.b16 %v1724, %v1723
      %v1730 = vpack.c.b16 %v1726, %v1725
      %v1735 = vunpack.c.l.b16 %v1715
      %v1736 = vunpack.c.l.b16 %v1716
      %v1737 = vunpack.c.l.b16 %v1717
      %v1738 = vunpack.c.l.b16 %v1718
      %v1739 = vpack.c.b16 %v1736, %v1735
      %v1740 = vpack.c.b16 %v1738, %v1737
      %v1744 = vsel %vm388, %v1727, 0
      %v1747 = vsel %vm388, %v1728, 0
      %v1750 = vsel %vm388, %v1729, 0
      %v1753 = vsel %vm388, %v1730, 0
      %1755 = vmatprep.subr.bf16.mxu0 0
      %1756 = vmatpush1.bf16.msra.mxu0 0
      %1757 = vmatprep.subr.bf16.mxu0 0
      %1758 = vmatpush1.bf16.msra.mxu0 0
      %1759 = vmatprep.subr.bf16.mxu0 0
      %1760 = vmatpush1.bf16.msra.mxu0 0
      %1761 = vmatprep.subr.bf16.mxu0 0
      %1762 = vmatpush1.bf16.msra.mxu0 0
      %1763 = vmatprep.subr.bf16.mxu0 0
      %1764 = vmatpush1.bf16.msra.mxu0 0
      %1765 = vmatprep.subr.bf16.mxu0 0
      %1766 = vmatpush1.bf16.msra.mxu0 0
      %1767 = vmatprep.subr.bf16.mxu0 0
      %1768 = vmatpush1.bf16.msra.mxu0 %v1740
      %1769 = vmatprep.subr.bf16.mxu0 0
      %1770 = vmatpush1.bf16.msra.mxu0 %v1739
      %1771 = vmatprep.subr.bf16.mxu0 0
      %1772 = vmatpush2.bf16.msra.mxu0 0
      %1773 = vmatprep.subr.bf16.mxu0 0
      %1774 = vmatpush2.bf16.msra.mxu0 0
      %1775 = vmatprep.subr.bf16.mxu0 0
      %1776 = vmatpush2.bf16.msra.mxu0 0
      %1777 = vmatprep.subr.bf16.mxu0 0
      %1778 = vmatpush2.bf16.msra.mxu0 0
      %1779 = vmatprep.subr.bf16.mxu0 0
      %1780 = vmatpush2.bf16.msra.mxu0 0
      %1781 = vmatprep.subr.bf16.mxu0 0
      %1782 = vmatpush2.bf16.msra.mxu0 0
      %1783 = vmatprep.subr.bf16.mxu0 0
      %1784 = vmatpush2.bf16.msra.mxu0 0
      %1785 = vmatprep.subr.bf16.mxu0 0
      %1786 = vmatpush2.bf16.msra.mxu0 0
      %1787 = vmatprep.mubr.bf16.mxu0 0
      %1788 = vmatmul.mubr.bf16.gmra.mxu0 %v1744
      %v1789 = vpop.f32.mrf.mxu0
      %v1790 = vadd.f32 0.0, %v1789
      %v1791 = vpop.f32.mrf.mxu0
      %v1792 = vpop.f32.mrf.mxu0
      %v1793 = vadd.f32 0.0, %v1792
      %v1794 = vpop.f32.mrf.mxu0
      %1795 = vmatprep.mubr.bf16.mxu0 0
      %1796 = vmatmul.mubr.bf16.gmra.mxu0 %v1747
      %v1797 = vpop.f32.mrf.mxu0
      %v1798 = vadd.f32 0.0, %v1797
      %v1799 = vpop.f32.mrf.mxu0
      %v1800 = vpop.f32.mrf.mxu0
      %v1801 = vadd.f32 0.0, %v1800
      %v1802 = vpop.f32.mrf.mxu0
      %1803 = vmatprep.mubr.bf16.mxu0 0
      %1804 = vmatmul.mubr.bf16.gmra.mxu0 %v1750
      %v1805 = vpop.f32.mrf.mxu0
      %v1806 = vadd.f32 0.0, %v1805
      %v1807 = vpop.f32.mrf.mxu0
      %v1808 = vpop.f32.mrf.mxu0
      %v1809 = vadd.f32 0.0, %v1808
      %v1810 = vpop.f32.mrf.mxu0
      %1811 = vmatprep.mubr.bf16.mxu0 0
      %1812 = vmatmul.mubr.bf16.gmra.mxu0 %v1753
      %v1813 = vpop.f32.mrf.mxu0
      %v1814 = vadd.f32 0.0, %v1813
      %v1815 = vpop.f32.mrf.mxu0
      %v1816 = vpop.f32.mrf.mxu0
      %v1817 = vadd.f32 0.0, %v1816
      %v1818 = vpop.f32.mrf.mxu0
      %1819 = vdwg.mxu0
      %v1820 = vadd.f32 %v1578, %v1790
      %v1821 = vadd.f32 %v1579, %v1793
      %v1822 = vadd.f32 %v1580, %v1798
      %v1823 = vadd.f32 %v1581, %v1801
      %v1824 = vadd.f32 %v1582, %v1806
      %v1825 = vadd.f32 %v1583, %v1809
      %v1826 = vadd.f32 %v1584, %v1814
      %v1827 = vadd.f32 %v1585, %v1817
      %s1828 = scalar_lea.vmem %s308, 288
      %v1829 = vld [vmem:[%s1828] sm:$0xf]
      %v1830 = vld [vmem:[%s1828 + $0x8] sm:$0xf]
      %v1831 = vld [vmem:[%s1828 + $0x10] sm:$0xf]
      %v1832 = vld [vmem:[%s1828 + $0x18] sm:$0xf]
      %v1833 = vld [vmem:[%s1828 + $0x20] sm:$0xf]
      %v1834 = vld [vmem:[%s1828 + $0x28] sm:$0xf]
      %v1835 = vld [vmem:[%s1828 + $0x30] sm:$0xf]
      %v1836 = vld [vmem:[%s1828 + $0x38] sm:$0xf]
      %s1837 = scalar_lea.vmem %s2, 144
      %v1838 = vld [vmem:[%s1837] sm:$0xf]
      %v1839 = vld [vmem:[%s1837 + $0x4] sm:$0xf]
      %v1840 = vld [vmem:[%s1837 + $0x8] sm:$0xf]
      %v1841 = vld [vmem:[%s1837 + $0xc] sm:$0xf]
      %v1850 = vunpack.c.l.b16 %v1829
      %v1851 = vunpack.c.l.b16 %v1830
      %v1852 = vunpack.c.l.b16 %v1831
      %v1853 = vunpack.c.l.b16 %v1832
      %v1854 = vunpack.c.l.b16 %v1833
      %v1855 = vunpack.c.l.b16 %v1834
      %v1856 = vunpack.c.l.b16 %v1835
      %v1857 = vunpack.c.l.b16 %v1836
      %v1858 = vpack.c.b16 %v1851, %v1850
      %v1859 = vpack.c.b16 %v1853, %v1852
      %v1860 = vpack.c.b16 %v1855, %v1854
      %v1861 = vpack.c.b16 %v1857, %v1856
      %v1866 = vunpack.c.l.b16 %v1838
      %v1867 = vunpack.c.l.b16 %v1839
      %v1868 = vunpack.c.l.b16 %v1840
      %v1869 = vunpack.c.l.b16 %v1841
      %v1870 = vpack.c.b16 %v1867, %v1866
      %v1871 = vpack.c.b16 %v1869, %v1868
      %v1875 = vsel %vm388, %v1858, 0
      %v1878 = vsel %vm388, %v1859, 0
      %v1881 = vsel %vm388, %v1860, 0
      %v1884 = vsel %vm388, %v1861, 0
      %1886 = vmatprep.subr.bf16.mxu0 0
      %1887 = vmatpush1.bf16.msra.mxu0 0
      %1888 = vmatprep.subr.bf16.mxu0 0
      %1889 = vmatpush1.bf16.msra.mxu0 0
      %1890 = vmatprep.subr.bf16.mxu0 0
      %1891 = vmatpush1.bf16.msra.mxu0 0
      %1892 = vmatprep.subr.bf16.mxu0 0
      %1893 = vmatpush1.bf16.msra.mxu0 0
      %1894 = vmatprep.subr.bf16.mxu0 0
      %1895 = vmatpush1.bf16.msra.mxu0 0
      %1896 = vmatprep.subr.bf16.mxu0 0
      %1897 = vmatpush1.bf16.msra.mxu0 0
      %1898 = vmatprep.subr.bf16.mxu0 0
      %1899 = vmatpush1.bf16.msra.mxu0 %v1871
      %1900 = vmatprep.subr.bf16.mxu0 0
      %1901 = vmatpush1.bf16.msra.mxu0 %v1870
      %1902 = vmatprep.subr.bf16.mxu0 0
      %1903 = vmatpush2.bf16.msra.mxu0 0
      %1904 = vmatprep.subr.bf16.mxu0 0
      %1905 = vmatpush2.bf16.msra.mxu0 0
      %1906 = vmatprep.subr.bf16.mxu0 0
      %1907 = vmatpush2.bf16.msra.mxu0 0
      %1908 = vmatprep.subr.bf16.mxu0 0
      %1909 = vmatpush2.bf16.msra.mxu0 0
      %1910 = vmatprep.subr.bf16.mxu0 0
      %1911 = vmatpush2.bf16.msra.mxu0 0
      %1912 = vmatprep.subr.bf16.mxu0 0
      %1913 = vmatpush2.bf16.msra.mxu0 0
      %1914 = vmatprep.subr.bf16.mxu0 0
      %1915 = vmatpush2.bf16.msra.mxu0 0
      %1916 = vmatprep.subr.bf16.mxu0 0
      %1917 = vmatpush2.bf16.msra.mxu0 0
      %1918 = vmatprep.mubr.bf16.mxu0 0
      %1919 = vmatmul.mubr.bf16.gmra.mxu0 %v1875
      %v1920 = vpop.f32.mrf.mxu0
      %v1921 = vadd.f32 0.0, %v1920
      %v1922 = vpop.f32.mrf.mxu0
      %v1923 = vpop.f32.mrf.mxu0
      %v1924 = vadd.f32 0.0, %v1923
      %v1925 = vpop.f32.mrf.mxu0
      %1926 = vmatprep.mubr.bf16.mxu0 0
      %1927 = vmatmul.mubr.bf16.gmra.mxu0 %v1878
      %v1928 = vpop.f32.mrf.mxu0
      %v1929 = vadd.f32 0.0, %v1928
      %v1930 = vpop.f32.mrf.mxu0
      %v1931 = vpop.f32.mrf.mxu0
      %v1932 = vadd.f32 0.0, %v1931
      %v1933 = vpop.f32.mrf.mxu0
      %1934 = vmatprep.mubr.bf16.mxu0 0
      %1935 = vmatmul.mubr.bf16.gmra.mxu0 %v1881
      %v1936 = vpop.f32.mrf.mxu0
      %v1937 = vadd.f32 0.0, %v1936
      %v1938 = vpop.f32.mrf.mxu0
      %v1939 = vpop.f32.mrf.mxu0
      %v1940 = vadd.f32 0.0, %v1939
      %v1941 = vpop.f32.mrf.mxu0
      %1942 = vmatprep.mubr.bf16.mxu0 0
      %1943 = vmatmul.mubr.bf16.gmra.mxu0 %v1884
      %v1944 = vpop.f32.mrf.mxu0
      %v1945 = vadd.f32 0.0, %v1944
      %v1946 = vpop.f32.mrf.mxu0
      %v1947 = vpop.f32.mrf.mxu0
      %v1948 = vadd.f32 0.0, %v1947
      %v1949 = vpop.f32.mrf.mxu0
      %1950 = vdwg.mxu0
      %v1951 = vadd.f32 %v1820, %v1921
      %v1952 = vadd.f32 %v1821, %v1924
      %v1953 = vadd.f32 %v1822, %v1929
      %v1954 = vadd.f32 %v1823, %v1932
      %v1955 = vadd.f32 %v1824, %v1937
      %v1956 = vadd.f32 %v1825, %v1940
      %v1957 = vadd.f32 %v1826, %v1945
      %v1958 = vadd.f32 %v1827, %v1948
      %s1959 = scalar_lea.vmem %s308, 360
      %v1960 = vld [vmem:[%s1959] sm:$0xf]
      %v1961 = vld [vmem:[%s1959 + $0x8] sm:$0xf]
      %v1962 = vld [vmem:[%s1959 + $0x10] sm:$0xf]
      %v1963 = vld [vmem:[%s1959 + $0x18] sm:$0xf]
      %v1964 = vld [vmem:[%s1959 + $0x20] sm:$0xf]
      %v1965 = vld [vmem:[%s1959 + $0x28] sm:$0xf]
      %v1966 = vld [vmem:[%s1959 + $0x30] sm:$0xf]
      %v1967 = vld [vmem:[%s1959 + $0x38] sm:$0xf]
      %s1968 = scalar_lea.vmem %s2, 160
      %v1969 = vld [vmem:[%s1968] sm:$0xf]
      %v1970 = vld [vmem:[%s1968 + $0x4] sm:$0xf]
      %v1971 = vld [vmem:[%s1968 + $0x8] sm:$0xf]
      %v1972 = vld [vmem:[%s1968 + $0xc] sm:$0xf]
      %v1981 = vunpack.c.l.b16 %v1960
      %v1982 = vunpack.c.l.b16 %v1961
      %v1983 = vunpack.c.l.b16 %v1962
      %v1984 = vunpack.c.l.b16 %v1963
      %v1985 = vunpack.c.l.b16 %v1964
      %v1986 = vunpack.c.l.b16 %v1965
      %v1987 = vunpack.c.l.b16 %v1966
      %v1988 = vunpack.c.l.b16 %v1967
      %v1989 = vpack.c.b16 %v1982, %v1981
      %v1990 = vpack.c.b16 %v1984, %v1983
      %v1991 = vpack.c.b16 %v1986, %v1985
      %v1992 = vpack.c.b16 %v1988, %v1987
      %v1997 = vunpack.c.l.b16 %v1969
      %v1998 = vunpack.c.l.b16 %v1970
      %v1999 = vunpack.c.l.b16 %v1971
      %v2000 = vunpack.c.l.b16 %v1972
      %v2001 = vpack.c.b16 %v1998, %v1997
      %v2002 = vpack.c.b16 %v2000, %v1999
      %v2006 = vsel %vm388, %v1989, 0
      %v2009 = vsel %vm388, %v1990, 0
      %v2012 = vsel %vm388, %v1991, 0
      %v2015 = vsel %vm388, %v1992, 0
      %2017 = vmatprep.subr.bf16.mxu0 0
      %2018 = vmatpush1.bf16.msra.mxu0 0
      %2019 = vmatprep.subr.bf16.mxu0 0
      %2020 = vmatpush1.bf16.msra.mxu0 0
      %2021 = vmatprep.subr.bf16.mxu0 0
      %2022 = vmatpush1.bf16.msra.mxu0 0
      %2023 = vmatprep.subr.bf16.mxu0 0
      %2024 = vmatpush1.bf16.msra.mxu0 0
      %2025 = vmatprep.subr.bf16.mxu0 0
      %2026 = vmatpush1.bf16.msra.mxu0 0
      %2027 = vmatprep.subr.bf16.mxu0 0
      %2028 = vmatpush1.bf16.msra.mxu0 0
      %2029 = vmatprep.subr.bf16.mxu0 0
      %2030 = vmatpush1.bf16.msra.mxu0 %v2002
      %2031 = vmatprep.subr.bf16.mxu0 0
      %2032 = vmatpush1.bf16.msra.mxu0 %v2001
      %2033 = vmatprep.subr.bf16.mxu0 0
      %2034 = vmatpush2.bf16.msra.mxu0 0
      %2035 = vmatprep.subr.bf16.mxu0 0
      %2036 = vmatpush2.bf16.msra.mxu0 0
      %2037 = vmatprep.subr.bf16.mxu0 0
      %2038 = vmatpush2.bf16.msra.mxu0 0
      %2039 = vmatprep.subr.bf16.mxu0 0
      %2040 = vmatpush2.bf16.msra.mxu0 0
      %2041 = vmatprep.subr.bf16.mxu0 0
      %2042 = vmatpush2.bf16.msra.mxu0 0
      %2043 = vmatprep.subr.bf16.mxu0 0
      %2044 = vmatpush2.bf16.msra.mxu0 0
      %2045 = vmatprep.subr.bf16.mxu0 0
      %2046 = vmatpush2.bf16.msra.mxu0 0
      %2047 = vmatprep.subr.bf16.mxu0 0
      %2048 = vmatpush2.bf16.msra.mxu0 0
      %2049 = vmatprep.mubr.bf16.mxu0 0
      %2050 = vmatmul.mubr.bf16.gmra.mxu0 %v2006
      %v2051 = vpop.f32.mrf.mxu0
      %v2052 = vadd.f32 0.0, %v2051
      %v2053 = vpop.f32.mrf.mxu0
      %v2054 = vpop.f32.mrf.mxu0
      %v2055 = vadd.f32 0.0, %v2054
      %v2056 = vpop.f32.mrf.mxu0
      %2057 = vmatprep.mubr.bf16.mxu0 0
      %2058 = vmatmul.mubr.bf16.gmra.mxu0 %v2009
      %v2059 = vpop.f32.mrf.mxu0
      %v2060 = vadd.f32 0.0, %v2059
      %v2061 = vpop.f32.mrf.mxu0
      %v2062 = vpop.f32.mrf.mxu0
      %v2063 = vadd.f32 0.0, %v2062
      %v2064 = vpop.f32.mrf.mxu0
      %2065 = vmatprep.mubr.bf16.mxu0 0
      %2066 = vmatmul.mubr.bf16.gmra.mxu0 %v2012
      %v2067 = vpop.f32.mrf.mxu0
      %v2068 = vadd.f32 0.0, %v2067
      %v2069 = vpop.f32.mrf.mxu0
      %v2070 = vpop.f32.mrf.mxu0
      %v2071 = vadd.f32 0.0, %v2070
      %v2072 = vpop.f32.mrf.mxu0
      %2073 = vmatprep.mubr.bf16.mxu0 0
      %2074 = vmatmul.mubr.bf16.gmra.mxu0 %v2015
      %v2075 = vpop.f32.mrf.mxu0
      %v2076 = vadd.f32 0.0, %v2075
      %v2077 = vpop.f32.mrf.mxu0
      %v2078 = vpop.f32.mrf.mxu0
      %v2079 = vadd.f32 0.0, %v2078
      %v2080 = vpop.f32.mrf.mxu0
      %2081 = vdwg.mxu0
      %v2082 = vadd.f32 %v1951, %v2052
      %v2083 = vadd.f32 %v1952, %v2055
      %v2084 = vadd.f32 %v1953, %v2060
      %v2085 = vadd.f32 %v1954, %v2063
      %v2086 = vadd.f32 %v1955, %v2068
      %v2087 = vadd.f32 %v1956, %v2071
      %v2088 = vadd.f32 %v1957, %v2076
      %v2089 = vadd.f32 %v1958, %v2079
      %v2090 = vld [vmem:[%s1828] sm:$0xf]
      %v2091 = vld [vmem:[%s1828 + $0x4] sm:$0x1]
      %v2092 = vld [vmem:[%s1828 + $0x8] sm:$0xf]
      %v2093 = vld [vmem:[%s1828 + $0xc] sm:$0x1]
      %v2094 = vld [vmem:[%s1828 + $0x10] sm:$0xf]
      %v2095 = vld [vmem:[%s1828 + $0x14] sm:$0x1]
      %v2096 = vld [vmem:[%s1828 + $0x18] sm:$0xf]
      %v2097 = vld [vmem:[%s1828 + $0x1c] sm:$0x1]
      %v2098 = vld [vmem:[%s1828 + $0x20] sm:$0xf]
      %v2099 = vld [vmem:[%s1828 + $0x24] sm:$0x1]
      %v2100 = vld [vmem:[%s1828 + $0x28] sm:$0xf]
      %v2101 = vld [vmem:[%s1828 + $0x2c] sm:$0x1]
      %v2102 = vld [vmem:[%s1828 + $0x30] sm:$0xf]
      %v2103 = vld [vmem:[%s1828 + $0x34] sm:$0x1]
      %v2104 = vld [vmem:[%s1828 + $0x38] sm:$0xf]
      %v2105 = vld [vmem:[%s1828 + $0x3c] sm:$0x1]
      %v2107 = vshrl.u32 %v2090, 16
      %v2109 = vrot.slane %v2107, 4
      %v2110 = vshll.u32 %v2090, 16
      %v2112 = vrot.slane %v2110, 5
      %v2113 = vor.u32 %v2109, %v2112
      %v2114 = vrot.slane %v2113, 4
      %v2116 = vshll.u32 %v2091, 16
      %v2118 = vrot.slane %v2116, 5
      %v2119 = vsel %vm593, %v2114, %v2118
      %v2121 = vshrl.u32 %v2092, 16
      %v2123 = vrot.slane %v2121, 4
      %v2124 = vshll.u32 %v2092, 16
      %v2126 = vrot.slane %v2124, 5
      %v2127 = vor.u32 %v2123, %v2126
      %v2128 = vrot.slane %v2127, 4
      %v2130 = vshll.u32 %v2093, 16
      %v2132 = vrot.slane %v2130, 5
      %v2133 = vsel %vm593, %v2128, %v2132
      %v2135 = vshrl.u32 %v2094, 16
      %v2137 = vrot.slane %v2135, 4
      %v2138 = vshll.u32 %v2094, 16
      %v2140 = vrot.slane %v2138, 5
      %v2141 = vor.u32 %v2137, %v2140
      %v2142 = vrot.slane %v2141, 4
      %v2144 = vshll.u32 %v2095, 16
      %v2146 = vrot.slane %v2144, 5
      %v2147 = vsel %vm593, %v2142, %v2146
      %v2149 = vshrl.u32 %v2096, 16
      %v2151 = vrot.slane %v2149, 4
      %v2152 = vshll.u32 %v2096, 16
      %v2154 = vrot.slane %v2152, 5
      %v2155 = vor.u32 %v2151, %v2154
      %v2156 = vrot.slane %v2155, 4
      %v2158 = vshll.u32 %v2097, 16
      %v2160 = vrot.slane %v2158, 5
      %v2161 = vsel %vm593, %v2156, %v2160
      %v2163 = vshrl.u32 %v2098, 16
      %v2165 = vrot.slane %v2163, 4
      %v2166 = vshll.u32 %v2098, 16
      %v2168 = vrot.slane %v2166, 5
      %v2169 = vor.u32 %v2165, %v2168
      %v2170 = vrot.slane %v2169, 4
      %v2172 = vshll.u32 %v2099, 16
      %v2174 = vrot.slane %v2172, 5
      %v2175 = vsel %vm593, %v2170, %v2174
      %v2177 = vshrl.u32 %v2100, 16
      %v2179 = vrot.slane %v2177, 4
      %v2180 = vshll.u32 %v2100, 16
      %v2182 = vrot.slane %v2180, 5
      %v2183 = vor.u32 %v2179, %v2182
      %v2184 = vrot.slane %v2183, 4
      %v2186 = vshll.u32 %v2101, 16
      %v2188 = vrot.slane %v2186, 5
      %v2189 = vsel %vm593, %v2184, %v2188
      %v2191 = vshrl.u32 %v2102, 16
      %v2193 = vrot.slane %v2191, 4
      %v2194 = vshll.u32 %v2102, 16
      %v2196 = vrot.slane %v2194, 5
      %v2197 = vor.u32 %v2193, %v2196
      %v2198 = vrot.slane %v2197, 4
      %v2200 = vshll.u32 %v2103, 16
      %v2202 = vrot.slane %v2200, 5
      %v2203 = vsel %vm593, %v2198, %v2202
      %v2205 = vshrl.u32 %v2104, 16
      %v2207 = vrot.slane %v2205, 4
      %v2208 = vshll.u32 %v2104, 16
      %v2210 = vrot.slane %v2208, 5
      %v2211 = vor.u32 %v2207, %v2210
      %v2212 = vrot.slane %v2211, 4
      %v2214 = vshll.u32 %v2105, 16
      %v2216 = vrot.slane %v2214, 5
      %v2217 = vsel %vm593, %v2212, %v2216
      %s2218 = scalar_lea.vmem %s2, 176
      %v2219 = vld [vmem:[%s2218] sm:$0xf]
      %v2220 = vld [vmem:[%s2218 + $0x4] sm:$0xf]
      %v2221 = vld [vmem:[%s2218 + $0x8] sm:$0xf]
      %v2222 = vld [vmem:[%s2218 + $0xc] sm:$0xf]
      %v2223 = vunpack.c.l.b16 %v2119
      %v2224 = vunpack.c.l.b16 %v2133
      %v2225 = vunpack.c.l.b16 %v2147
      %v2226 = vunpack.c.l.b16 %v2161
      %v2227 = vunpack.c.l.b16 %v2175
      %v2228 = vunpack.c.l.b16 %v2189
      %v2229 = vunpack.c.l.b16 %v2203
      %v2230 = vunpack.c.l.b16 %v2217
      %v2231 = vpack.c.b16 %v2224, %v2223
      %v2232 = vpack.c.b16 %v2226, %v2225
      %v2233 = vpack.c.b16 %v2228, %v2227
      %v2234 = vpack.c.b16 %v2230, %v2229
      %v2239 = vunpack.c.l.b16 %v2219
      %v2240 = vunpack.c.l.b16 %v2220
      %v2241 = vunpack.c.l.b16 %v2221
      %v2242 = vunpack.c.l.b16 %v2222
      %v2243 = vpack.c.b16 %v2240, %v2239
      %v2244 = vpack.c.b16 %v2242, %v2241
      %v2248 = vsel %vm388, %v2231, 0
      %v2251 = vsel %vm388, %v2232, 0
      %v2254 = vsel %vm388, %v2233, 0
      %v2257 = vsel %vm388, %v2234, 0
      %2259 = vmatprep.subr.bf16.mxu0 0
      %2260 = vmatpush1.bf16.msra.mxu0 0
      %2261 = vmatprep.subr.bf16.mxu0 0
      %2262 = vmatpush1.bf16.msra.mxu0 0
      %2263 = vmatprep.subr.bf16.mxu0 0
      %2264 = vmatpush1.bf16.msra.mxu0 0
      %2265 = vmatprep.subr.bf16.mxu0 0
      %2266 = vmatpush1.bf16.msra.mxu0 0
      %2267 = vmatprep.subr.bf16.mxu0 0
      %2268 = vmatpush1.bf16.msra.mxu0 0
      %2269 = vmatprep.subr.bf16.mxu0 0
      %2270 = vmatpush1.bf16.msra.mxu0 0
      %2271 = vmatprep.subr.bf16.mxu0 0
      %2272 = vmatpush1.bf16.msra.mxu0 %v2244
      %2273 = vmatprep.subr.bf16.mxu0 0
      %2274 = vmatpush1.bf16.msra.mxu0 %v2243
      %2275 = vmatprep.subr.bf16.mxu0 0
      %2276 = vmatpush2.bf16.msra.mxu0 0
      %2277 = vmatprep.subr.bf16.mxu0 0
      %2278 = vmatpush2.bf16.msra.mxu0 0
      %2279 = vmatprep.subr.bf16.mxu0 0
      %2280 = vmatpush2.bf16.msra.mxu0 0
      %2281 = vmatprep.subr.bf16.mxu0 0
      %2282 = vmatpush2.bf16.msra.mxu0 0
      %2283 = vmatprep.subr.bf16.mxu0 0
      %2284 = vmatpush2.bf16.msra.mxu0 0
      %2285 = vmatprep.subr.bf16.mxu0 0
      %2286 = vmatpush2.bf16.msra.mxu0 0
      %2287 = vmatprep.subr.bf16.mxu0 0
      %2288 = vmatpush2.bf16.msra.mxu0 0
      %2289 = vmatprep.subr.bf16.mxu0 0
      %2290 = vmatpush2.bf16.msra.mxu0 0
      %2291 = vmatprep.mubr.bf16.mxu0 0
      %2292 = vmatmul.mubr.bf16.gmra.mxu0 %v2248
      %v2293 = vpop.f32.mrf.mxu0
      %v2294 = vadd.f32 0.0, %v2293
      %v2295 = vpop.f32.mrf.mxu0
      %v2296 = vpop.f32.mrf.mxu0
      %v2297 = vadd.f32 0.0, %v2296
      %v2298 = vpop.f32.mrf.mxu0
      %2299 = vmatprep.mubr.bf16.mxu0 0
      %2300 = vmatmul.mubr.bf16.gmra.mxu0 %v2251
      %v2301 = vpop.f32.mrf.mxu0
      %v2302 = vadd.f32 0.0, %v2301
      %v2303 = vpop.f32.mrf.mxu0
      %v2304 = vpop.f32.mrf.mxu0
      %v2305 = vadd.f32 0.0, %v2304
      %v2306 = vpop.f32.mrf.mxu0
      %2307 = vmatprep.mubr.bf16.mxu0 0
      %2308 = vmatmul.mubr.bf16.gmra.mxu0 %v2254
      %v2309 = vpop.f32.mrf.mxu0
      %v2310 = vadd.f32 0.0, %v2309
      %v2311 = vpop.f32.mrf.mxu0
      %v2312 = vpop.f32.mrf.mxu0
      %v2313 = vadd.f32 0.0, %v2312
      %v2314 = vpop.f32.mrf.mxu0
      %2315 = vmatprep.mubr.bf16.mxu0 0
      %2316 = vmatmul.mubr.bf16.gmra.mxu0 %v2257
      %v2317 = vpop.f32.mrf.mxu0
      %v2318 = vadd.f32 0.0, %v2317
      %v2319 = vpop.f32.mrf.mxu0
      %v2320 = vpop.f32.mrf.mxu0
      %v2321 = vadd.f32 0.0, %v2320
      %v2322 = vpop.f32.mrf.mxu0
      %2323 = vdwg.mxu0
      %v2324 = vadd.f32 %v2082, %v2294
      %v2325 = vadd.f32 %v2083, %v2297
      %v2326 = vadd.f32 %v2084, %v2302
      %v2327 = vadd.f32 %v2085, %v2305
      %v2328 = vadd.f32 %v2086, %v2310
      %v2329 = vadd.f32 %v2087, %v2313
      %v2330 = vadd.f32 %v2088, %v2318
      %v2331 = vadd.f32 %v2089, %v2321
      %s2332 = scalar_lea.vmem %s308, 432
      %v2333 = vld [vmem:[%s2332] sm:$0xf]
      %v2334 = vld [vmem:[%s2332 + $0x8] sm:$0xf]
      %v2335 = vld [vmem:[%s2332 + $0x10] sm:$0xf]
      %v2336 = vld [vmem:[%s2332 + $0x18] sm:$0xf]
      %v2337 = vld [vmem:[%s2332 + $0x20] sm:$0xf]
      %v2338 = vld [vmem:[%s2332 + $0x28] sm:$0xf]
      %v2339 = vld [vmem:[%s2332 + $0x30] sm:$0xf]
      %v2340 = vld [vmem:[%s2332 + $0x38] sm:$0xf]
      %s2341 = scalar_lea.vmem %s2, 192
      %v2342 = vld [vmem:[%s2341] sm:$0xf]
      %v2343 = vld [vmem:[%s2341 + $0x4] sm:$0xf]
      %v2344 = vld [vmem:[%s2341 + $0x8] sm:$0xf]
      %v2345 = vld [vmem:[%s2341 + $0xc] sm:$0xf]
      %v2354 = vunpack.c.l.b16 %v2333
      %v2355 = vunpack.c.l.b16 %v2334
      %v2356 = vunpack.c.l.b16 %v2335
      %v2357 = vunpack.c.l.b16 %v2336
      %v2358 = vunpack.c.l.b16 %v2337
      %v2359 = vunpack.c.l.b16 %v2338
      %v2360 = vunpack.c.l.b16 %v2339
      %v2361 = vunpack.c.l.b16 %v2340
      %v2362 = vpack.c.b16 %v2355, %v2354
      %v2363 = vpack.c.b16 %v2357, %v2356
      %v2364 = vpack.c.b16 %v2359, %v2358
      %v2365 = vpack.c.b16 %v2361, %v2360
      %v2370 = vunpack.c.l.b16 %v2342
      %v2371 = vunpack.c.l.b16 %v2343
      %v2372 = vunpack.c.l.b16 %v2344
      %v2373 = vunpack.c.l.b16 %v2345
      %v2374 = vpack.c.b16 %v2371, %v2370
      %v2375 = vpack.c.b16 %v2373, %v2372
      %v2379 = vsel %vm388, %v2362, 0
      %v2382 = vsel %vm388, %v2363, 0
      %v2385 = vsel %vm388, %v2364, 0
      %v2388 = vsel %vm388, %v2365, 0
      %2390 = vmatprep.subr.bf16.mxu0 0
      %2391 = vmatpush1.bf16.msra.mxu0 0
      %2392 = vmatprep.subr.bf16.mxu0 0
      %2393 = vmatpush1.bf16.msra.mxu0 0
      %2394 = vmatprep.subr.bf16.mxu0 0
      %2395 = vmatpush1.bf16.msra.mxu0 0
      %2396 = vmatprep.subr.bf16.mxu0 0
      %2397 = vmatpush1.bf16.msra.mxu0 0
      %2398 = vmatprep.subr.bf16.mxu0 0
      %2399 = vmatpush1.bf16.msra.mxu0 0
      %2400 = vmatprep.subr.bf16.mxu0 0
      %2401 = vmatpush1.bf16.msra.mxu0 0
      %2402 = vmatprep.subr.bf16.mxu0 0
      %2403 = vmatpush1.bf16.msra.mxu0 %v2375
      %2404 = vmatprep.subr.bf16.mxu0 0
      %2405 = vmatpush1.bf16.msra.mxu0 %v2374
      %2406 = vmatprep.subr.bf16.mxu0 0
      %2407 = vmatpush2.bf16.msra.mxu0 0
      %2408 = vmatprep.subr.bf16.mxu0 0
      %2409 = vmatpush2.bf16.msra.mxu0 0
      %2410 = vmatprep.subr.bf16.mxu0 0
      %2411 = vmatpush2.bf16.msra.mxu0 0
      %2412 = vmatprep.subr.bf16.mxu0 0
      %2413 = vmatpush2.bf16.msra.mxu0 0
      %2414 = vmatprep.subr.bf16.mxu0 0
      %2415 = vmatpush2.bf16.msra.mxu0 0
      %2416 = vmatprep.subr.bf16.mxu0 0
      %2417 = vmatpush2.bf16.msra.mxu0 0
      %2418 = vmatprep.subr.bf16.mxu0 0
      %2419 = vmatpush2.bf16.msra.mxu0 0
      %2420 = vmatprep.subr.bf16.mxu0 0
      %2421 = vmatpush2.bf16.msra.mxu0 0
      %2422 = vmatprep.mubr.bf16.mxu0 0
      %2423 = vmatmul.mubr.bf16.gmra.mxu0 %v2379
      %v2424 = vpop.f32.mrf.mxu0
      %v2425 = vadd.f32 0.0, %v2424
      %v2426 = vpop.f32.mrf.mxu0
      %v2427 = vpop.f32.mrf.mxu0
      %v2428 = vadd.f32 0.0, %v2427
      %v2429 = vpop.f32.mrf.mxu0
      %2430 = vmatprep.mubr.bf16.mxu0 0
      %2431 = vmatmul.mubr.bf16.gmra.mxu0 %v2382
      %v2432 = vpop.f32.mrf.mxu0
      %v2433 = vadd.f32 0.0, %v2432
      %v2434 = vpop.f32.mrf.mxu0
      %v2435 = vpop.f32.mrf.mxu0
      %v2436 = vadd.f32 0.0, %v2435
      %v2437 = vpop.f32.mrf.mxu0
      %2438 = vmatprep.mubr.bf16.mxu0 0
      %2439 = vmatmul.mubr.bf16.gmra.mxu0 %v2385
      %v2440 = vpop.f32.mrf.mxu0
      %v2441 = vadd.f32 0.0, %v2440
      %v2442 = vpop.f32.mrf.mxu0
      %v2443 = vpop.f32.mrf.mxu0
      %v2444 = vadd.f32 0.0, %v2443
      %v2445 = vpop.f32.mrf.mxu0
      %2446 = vmatprep.mubr.bf16.mxu0 0
      %2447 = vmatmul.mubr.bf16.gmra.mxu0 %v2388
      %v2448 = vpop.f32.mrf.mxu0
      %v2449 = vadd.f32 0.0, %v2448
      %v2450 = vpop.f32.mrf.mxu0
      %v2451 = vpop.f32.mrf.mxu0
      %v2452 = vadd.f32 0.0, %v2451
      %v2453 = vpop.f32.mrf.mxu0
      %2454 = vdwg.mxu0
      %v2455 = vadd.f32 %v2324, %v2425
      %v2456 = vadd.f32 %v2325, %v2428
      %v2457 = vadd.f32 %v2326, %v2433
      %v2458 = vadd.f32 %v2327, %v2436
      %v2459 = vadd.f32 %v2328, %v2441
      %v2460 = vadd.f32 %v2329, %v2444
      %v2461 = vadd.f32 %v2330, %v2449
      %v2462 = vadd.f32 %v2331, %v2452
      %s2463 = scalar_lea.vmem %s308, 504
      %v2464 = vld [vmem:[%s2463] sm:$0xf]
      %v2465 = vld [vmem:[%s2463 + $0x8] sm:$0xf]
      %v2466 = vld [vmem:[%s2463 + $0x10] sm:$0xf]
      %v2467 = vld [vmem:[%s2463 + $0x18] sm:$0xf]
      %v2468 = vld [vmem:[%s2463 + $0x20] sm:$0xf]
      %v2469 = vld [vmem:[%s2463 + $0x28] sm:$0xf]
      %v2470 = vld [vmem:[%s2463 + $0x30] sm:$0xf]
      %v2471 = vld [vmem:[%s2463 + $0x38] sm:$0xf]
      %s2472 = scalar_lea.vmem %s2, 208
      %v2473 = vld [vmem:[%s2472] sm:$0xf]
      %v2474 = vld [vmem:[%s2472 + $0x4] sm:$0xf]
      %v2475 = vld [vmem:[%s2472 + $0x8] sm:$0xf]
      %v2476 = vld [vmem:[%s2472 + $0xc] sm:$0xf]
      %v2485 = vunpack.c.l.b16 %v2464
      %v2486 = vunpack.c.l.b16 %v2465
      %v2487 = vunpack.c.l.b16 %v2466
      %v2488 = vunpack.c.l.b16 %v2467
      %v2489 = vunpack.c.l.b16 %v2468
      %v2490 = vunpack.c.l.b16 %v2469
      %v2491 = vunpack.c.l.b16 %v2470
      %v2492 = vunpack.c.l.b16 %v2471
      %v2493 = vpack.c.b16 %v2486, %v2485
      %v2494 = vpack.c.b16 %v2488, %v2487
      %v2495 = vpack.c.b16 %v2490, %v2489
      %v2496 = vpack.c.b16 %v2492, %v2491
      %v2501 = vunpack.c.l.b16 %v2473
      %v2502 = vunpack.c.l.b16 %v2474
      %v2503 = vunpack.c.l.b16 %v2475
      %v2504 = vunpack.c.l.b16 %v2476
      %v2505 = vpack.c.b16 %v2502, %v2501
      %v2506 = vpack.c.b16 %v2504, %v2503
      %v2510 = vsel %vm388, %v2493, 0
      %v2513 = vsel %vm388, %v2494, 0
      %v2516 = vsel %vm388, %v2495, 0
      %v2519 = vsel %vm388, %v2496, 0
      %2521 = vmatprep.subr.bf16.mxu0 0
      %2522 = vmatpush1.bf16.msra.mxu0 0
      %2523 = vmatprep.subr.bf16.mxu0 0
      %2524 = vmatpush1.bf16.msra.mxu0 0
      %2525 = vmatprep.subr.bf16.mxu0 0
      %2526 = vmatpush1.bf16.msra.mxu0 0
      %2527 = vmatprep.subr.bf16.mxu0 0
      %2528 = vmatpush1.bf16.msra.mxu0 0
      %2529 = vmatprep.subr.bf16.mxu0 0
      %2530 = vmatpush1.bf16.msra.mxu0 0
      %2531 = vmatprep.subr.bf16.mxu0 0
      %2532 = vmatpush1.bf16.msra.mxu0 0
      %2533 = vmatprep.subr.bf16.mxu0 0
      %2534 = vmatpush1.bf16.msra.mxu0 %v2506
      %2535 = vmatprep.subr.bf16.mxu0 0
      %2536 = vmatpush1.bf16.msra.mxu0 %v2505
      %2537 = vmatprep.subr.bf16.mxu0 0
      %2538 = vmatpush2.bf16.msra.mxu0 0
      %2539 = vmatprep.subr.bf16.mxu0 0
      %2540 = vmatpush2.bf16.msra.mxu0 0
      %2541 = vmatprep.subr.bf16.mxu0 0
      %2542 = vmatpush2.bf16.msra.mxu0 0
      %2543 = vmatprep.subr.bf16.mxu0 0
      %2544 = vmatpush2.bf16.msra.mxu0 0
      %2545 = vmatprep.subr.bf16.mxu0 0
      %2546 = vmatpush2.bf16.msra.mxu0 0
      %2547 = vmatprep.subr.bf16.mxu0 0
      %2548 = vmatpush2.bf16.msra.mxu0 0
      %2549 = vmatprep.subr.bf16.mxu0 0
      %2550 = vmatpush2.bf16.msra.mxu0 0
      %2551 = vmatprep.subr.bf16.mxu0 0
      %2552 = vmatpush2.bf16.msra.mxu0 0
      %2553 = vmatprep.mubr.bf16.mxu0 0
      %2554 = vmatmul.mubr.bf16.gmra.mxu0 %v2510
      %v2555 = vpop.f32.mrf.mxu0
      %v2556 = vadd.f32 0.0, %v2555
      %v2557 = vpop.f32.mrf.mxu0
      %v2558 = vpop.f32.mrf.mxu0
      %v2559 = vadd.f32 0.0, %v2558
      %v2560 = vpop.f32.mrf.mxu0
      %2561 = vmatprep.mubr.bf16.mxu0 0
      %2562 = vmatmul.mubr.bf16.gmra.mxu0 %v2513
      %v2563 = vpop.f32.mrf.mxu0
      %v2564 = vadd.f32 0.0, %v2563
      %v2565 = vpop.f32.mrf.mxu0
      %v2566 = vpop.f32.mrf.mxu0
      %v2567 = vadd.f32 0.0, %v2566
      %v2568 = vpop.f32.mrf.mxu0
      %2569 = vmatprep.mubr.bf16.mxu0 0
      %2570 = vmatmul.mubr.bf16.gmra.mxu0 %v2516
      %v2571 = vpop.f32.mrf.mxu0
      %v2572 = vadd.f32 0.0, %v2571
      %v2573 = vpop.f32.mrf.mxu0
      %v2574 = vpop.f32.mrf.mxu0
      %v2575 = vadd.f32 0.0, %v2574
      %v2576 = vpop.f32.mrf.mxu0
      %2577 = vmatprep.mubr.bf16.mxu0 0
      %2578 = vmatmul.mubr.bf16.gmra.mxu0 %v2519
      %v2579 = vpop.f32.mrf.mxu0
      %v2580 = vadd.f32 0.0, %v2579
      %v2581 = vpop.f32.mrf.mxu0
      %v2582 = vpop.f32.mrf.mxu0
      %v2583 = vadd.f32 0.0, %v2582
      %v2584 = vpop.f32.mrf.mxu0
      %2585 = vdwg.mxu0
      %v2586 = vadd.f32 %v2455, %v2556
      %v2587 = vadd.f32 %v2456, %v2559
      %v2588 = vadd.f32 %v2457, %v2564
      %v2589 = vadd.f32 %v2458, %v2567
      %v2590 = vadd.f32 %v2459, %v2572
      %v2591 = vadd.f32 %v2460, %v2575
      %v2592 = vadd.f32 %v2461, %v2580
      %v2593 = vadd.f32 %v2462, %v2583
      %v2594 = vld [vmem:[%s2332] sm:$0xf]
      %v2595 = vld [vmem:[%s2332 + $0x4] sm:$0x1]
      %v2596 = vld [vmem:[%s2332 + $0x8] sm:$0xf]
      %v2597 = vld [vmem:[%s2332 + $0xc] sm:$0x1]
      %v2598 = vld [vmem:[%s2332 + $0x10] sm:$0xf]
      %v2599 = vld [vmem:[%s2332 + $0x14] sm:$0x1]
      %v2600 = vld [vmem:[%s2332 + $0x18] sm:$0xf]
      %v2601 = vld [vmem:[%s2332 + $0x1c] sm:$0x1]
      %v2602 = vld [vmem:[%s2332 + $0x20] sm:$0xf]
      %v2603 = vld [vmem:[%s2332 + $0x24] sm:$0x1]
      %v2604 = vld [vmem:[%s2332 + $0x28] sm:$0xf]
      %v2605 = vld [vmem:[%s2332 + $0x2c] sm:$0x1]
      %v2606 = vld [vmem:[%s2332 + $0x30] sm:$0xf]
      %v2607 = vld [vmem:[%s2332 + $0x34] sm:$0x1]
      %v2608 = vld [vmem:[%s2332 + $0x38] sm:$0xf]
      %v2609 = vld [vmem:[%s2332 + $0x3c] sm:$0x1]
      %v2611 = vshrl.u32 %v2594, 16
      %v2613 = vrot.slane %v2611, 4
      %v2614 = vshll.u32 %v2594, 16
      %v2616 = vrot.slane %v2614, 5
      %v2617 = vor.u32 %v2613, %v2616
      %v2618 = vrot.slane %v2617, 4
      %v2620 = vshll.u32 %v2595, 16
      %v2622 = vrot.slane %v2620, 5
      %v2623 = vsel %vm593, %v2618, %v2622
      %v2625 = vshrl.u32 %v2596, 16
      %v2627 = vrot.slane %v2625, 4
      %v2628 = vshll.u32 %v2596, 16
      %v2630 = vrot.slane %v2628, 5
      %v2631 = vor.u32 %v2627, %v2630
      %v2632 = vrot.slane %v2631, 4
      %v2634 = vshll.u32 %v2597, 16
      %v2636 = vrot.slane %v2634, 5
      %v2637 = vsel %vm593, %v2632, %v2636
      %v2639 = vshrl.u32 %v2598, 16
      %v2641 = vrot.slane %v2639, 4
      %v2642 = vshll.u32 %v2598, 16
      %v2644 = vrot.slane %v2642, 5
      %v2645 = vor.u32 %v2641, %v2644
      %v2646 = vrot.slane %v2645, 4
      %v2648 = vshll.u32 %v2599, 16
      %v2650 = vrot.slane %v2648, 5
      %v2651 = vsel %vm593, %v2646, %v2650
      %v2653 = vshrl.u32 %v2600, 16
      %v2655 = vrot.slane %v2653, 4
      %v2656 = vshll.u32 %v2600, 16
      %v2658 = vrot.slane %v2656, 5
      %v2659 = vor.u32 %v2655, %v2658
      %v2660 = vrot.slane %v2659, 4
      %v2662 = vshll.u32 %v2601, 16
      %v2664 = vrot.slane %v2662, 5
      %v2665 = vsel %vm593, %v2660, %v2664
      %v2667 = vshrl.u32 %v2602, 16
      %v2669 = vrot.slane %v2667, 4
      %v2670 = vshll.u32 %v2602, 16
      %v2672 = vrot.slane %v2670, 5
      %v2673 = vor.u32 %v2669, %v2672
      %v2674 = vrot.slane %v2673, 4
      %v2676 = vshll.u32 %v2603, 16
      %v2678 = vrot.slane %v2676, 5
      %v2679 = vsel %vm593, %v2674, %v2678
      %v2681 = vshrl.u32 %v2604, 16
      %v2683 = vrot.slane %v2681, 4
      %v2684 = vshll.u32 %v2604, 16
      %v2686 = vrot.slane %v2684, 5
      %v2687 = vor.u32 %v2683, %v2686
      %v2688 = vrot.slane %v2687, 4
      %v2690 = vshll.u32 %v2605, 16
      %v2692 = vrot.slane %v2690, 5
      %v2693 = vsel %vm593, %v2688, %v2692
      %v2695 = vshrl.u32 %v2606, 16
      %v2697 = vrot.slane %v2695, 4
      %v2698 = vshll.u32 %v2606, 16
      %v2700 = vrot.slane %v2698, 5
      %v2701 = vor.u32 %v2697, %v2700
      %v2702 = vrot.slane %v2701, 4
      %v2704 = vshll.u32 %v2607, 16
      %v2706 = vrot.slane %v2704, 5
      %v2707 = vsel %vm593, %v2702, %v2706
      %v2709 = vshrl.u32 %v2608, 16
      %v2711 = vrot.slane %v2709, 4
      %v2712 = vshll.u32 %v2608, 16
      %v2714 = vrot.slane %v2712, 5
      %v2715 = vor.u32 %v2711, %v2714
      %v2716 = vrot.slane %v2715, 4
      %v2718 = vshll.u32 %v2609, 16
      %v2720 = vrot.slane %v2718, 5
      %v2721 = vsel %vm593, %v2716, %v2720
      %s2722 = scalar_lea.vmem %s2, 224
      %v2723 = vld [vmem:[%s2722] sm:$0xf]
      %v2724 = vld [vmem:[%s2722 + $0x4] sm:$0xf]
      %v2725 = vld [vmem:[%s2722 + $0x8] sm:$0xf]
      %v2726 = vld [vmem:[%s2722 + $0xc] sm:$0xf]
      %v2727 = vunpack.c.l.b16 %v2623
      %v2728 = vunpack.c.l.b16 %v2637
      %v2729 = vunpack.c.l.b16 %v2651
      %v2730 = vunpack.c.l.b16 %v2665
      %v2731 = vunpack.c.l.b16 %v2679
      %v2732 = vunpack.c.l.b16 %v2693
      %v2733 = vunpack.c.l.b16 %v2707
      %v2734 = vunpack.c.l.b16 %v2721
      %v2735 = vpack.c.b16 %v2728, %v2727
      %v2736 = vpack.c.b16 %v2730, %v2729
      %v2737 = vpack.c.b16 %v2732, %v2731
      %v2738 = vpack.c.b16 %v2734, %v2733
      %v2743 = vunpack.c.l.b16 %v2723
      %v2744 = vunpack.c.l.b16 %v2724
      %v2745 = vunpack.c.l.b16 %v2725
      %v2746 = vunpack.c.l.b16 %v2726
      %v2747 = vpack.c.b16 %v2744, %v2743
      %v2748 = vpack.c.b16 %v2746, %v2745
      %v2752 = vsel %vm388, %v2735, 0
      %v2755 = vsel %vm388, %v2736, 0
      %v2758 = vsel %vm388, %v2737, 0
      %v2761 = vsel %vm388, %v2738, 0
      %2763 = vmatprep.subr.bf16.mxu0 0
      %2764 = vmatpush1.bf16.msra.mxu0 0
      %2765 = vmatprep.subr.bf16.mxu0 0
      %2766 = vmatpush1.bf16.msra.mxu0 0
      %2767 = vmatprep.subr.bf16.mxu0 0
      %2768 = vmatpush1.bf16.msra.mxu0 0
      %2769 = vmatprep.subr.bf16.mxu0 0
      %2770 = vmatpush1.bf16.msra.mxu0 0
      %2771 = vmatprep.subr.bf16.mxu0 0
      %2772 = vmatpush1.bf16.msra.mxu0 0
      %2773 = vmatprep.subr.bf16.mxu0 0
      %2774 = vmatpush1.bf16.msra.mxu0 0
      %2775 = vmatprep.subr.bf16.mxu0 0
      %2776 = vmatpush1.bf16.msra.mxu0 %v2748
      %2777 = vmatprep.subr.bf16.mxu0 0
      %2778 = vmatpush1.bf16.msra.mxu0 %v2747
      %2779 = vmatprep.subr.bf16.mxu0 0
      %2780 = vmatpush2.bf16.msra.mxu0 0
      %2781 = vmatprep.subr.bf16.mxu0 0
      %2782 = vmatpush2.bf16.msra.mxu0 0
      %2783 = vmatprep.subr.bf16.mxu0 0
      %2784 = vmatpush2.bf16.msra.mxu0 0
      %2785 = vmatprep.subr.bf16.mxu0 0
      %2786 = vmatpush2.bf16.msra.mxu0 0
      %2787 = vmatprep.subr.bf16.mxu0 0
      %2788 = vmatpush2.bf16.msra.mxu0 0
      %2789 = vmatprep.subr.bf16.mxu0 0
      %2790 = vmatpush2.bf16.msra.mxu0 0
      %2791 = vmatprep.subr.bf16.mxu0 0
      %2792 = vmatpush2.bf16.msra.mxu0 0
      %2793 = vmatprep.subr.bf16.mxu0 0
      %2794 = vmatpush2.bf16.msra.mxu0 0
      %2795 = vmatprep.mubr.bf16.mxu0 0
      %2796 = vmatmul.mubr.bf16.gmra.mxu0 %v2752
      %v2797 = vpop.f32.mrf.mxu0
      %v2798 = vadd.f32 0.0, %v2797
      %v2799 = vpop.f32.mrf.mxu0
      %v2800 = vpop.f32.mrf.mxu0
      %v2801 = vadd.f32 0.0, %v2800
      %v2802 = vpop.f32.mrf.mxu0
      %2803 = vmatprep.mubr.bf16.mxu0 0
      %2804 = vmatmul.mubr.bf16.gmra.mxu0 %v2755
      %v2805 = vpop.f32.mrf.mxu0
      %v2806 = vadd.f32 0.0, %v2805
      %v2807 = vpop.f32.mrf.mxu0
      %v2808 = vpop.f32.mrf.mxu0
      %v2809 = vadd.f32 0.0, %v2808
      %v2810 = vpop.f32.mrf.mxu0
      %2811 = vmatprep.mubr.bf16.mxu0 0
      %2812 = vmatmul.mubr.bf16.gmra.mxu0 %v2758
      %v2813 = vpop.f32.mrf.mxu0
      %v2814 = vadd.f32 0.0, %v2813
      %v2815 = vpop.f32.mrf.mxu0
      %v2816 = vpop.f32.mrf.mxu0
      %v2817 = vadd.f32 0.0, %v2816
      %v2818 = vpop.f32.mrf.mxu0
      %2819 = vmatprep.mubr.bf16.mxu0 0
      %2820 = vmatmul.mubr.bf16.gmra.mxu0 %v2761
      %v2821 = vpop.f32.mrf.mxu0
      %v2822 = vadd.f32 0.0, %v2821
      %v2823 = vpop.f32.mrf.mxu0
      %v2824 = vpop.f32.mrf.mxu0
      %v2825 = vadd.f32 0.0, %v2824
      %v2826 = vpop.f32.mrf.mxu0
      %2827 = vdwg.mxu0
      %v2828 = vadd.f32 %v2586, %v2798
      %v2829 = vadd.f32 %v2587, %v2801
      %v2830 = vadd.f32 %v2588, %v2806
      %v2831 = vadd.f32 %v2589, %v2809
      %v2832 = vadd.f32 %v2590, %v2814
      %v2833 = vadd.f32 %v2591, %v2817
      %v2834 = vadd.f32 %v2592, %v2822
      %v2835 = vadd.f32 %v2593, %v2825
      %s2836 = scalar_lea.vmem %s308, 296
      %v2837 = vld [vmem:[%s2836] sm:$0xf]
      %v2838 = vld [vmem:[%s2836 + $0x8] sm:$0xf]
      %v2839 = vld [vmem:[%s2836 + $0x10] sm:$0xf]
      %v2840 = vld [vmem:[%s2836 + $0x18] sm:$0xf]
      %v2841 = vld [vmem:[%s2836 + $0x20] sm:$0xf]
      %v2842 = vld [vmem:[%s2836 + $0x28] sm:$0xf]
      %v2843 = vld [vmem:[%s2836 + $0x30] sm:$0xf]
      %v2844 = vld [vmem:[%s2836 + $0x38] sm:$0xf]
      %s2845 = scalar_lea.vmem %s2, 240
      %v2846 = vld [vmem:[%s2845] sm:$0xf]
      %v2847 = vld [vmem:[%s2845 + $0x4] sm:$0xf]
      %v2848 = vld [vmem:[%s2845 + $0x8] sm:$0xf]
      %v2849 = vld [vmem:[%s2845 + $0xc] sm:$0xf]
      %v2858 = vunpack.c.l.b16 %v2837
      %v2859 = vunpack.c.l.b16 %v2838
      %v2860 = vunpack.c.l.b16 %v2839
      %v2861 = vunpack.c.l.b16 %v2840
      %v2862 = vunpack.c.l.b16 %v2841
      %v2863 = vunpack.c.l.b16 %v2842
      %v2864 = vunpack.c.l.b16 %v2843
      %v2865 = vunpack.c.l.b16 %v2844
      %v2866 = vpack.c.b16 %v2859, %v2858
      %v2867 = vpack.c.b16 %v2861, %v2860
      %v2868 = vpack.c.b16 %v2863, %v2862
      %v2869 = vpack.c.b16 %v2865, %v2864
      %v2874 = vunpack.c.l.b16 %v2846
      %v2875 = vunpack.c.l.b16 %v2847
      %v2876 = vunpack.c.l.b16 %v2848
      %v2877 = vunpack.c.l.b16 %v2849
      %v2878 = vpack.c.b16 %v2875, %v2874
      %v2879 = vpack.c.b16 %v2877, %v2876
      %v2883 = vsel %vm388, %v2866, 0
      %v2886 = vsel %vm388, %v2867, 0
      %v2889 = vsel %vm388, %v2868, 0
      %v2892 = vsel %vm388, %v2869, 0
      %2894 = vmatprep.subr.bf16.mxu0 0
      %2895 = vmatpush1.bf16.msra.mxu0 0
      %2896 = vmatprep.subr.bf16.mxu0 0
      %2897 = vmatpush1.bf16.msra.mxu0 0
      %2898 = vmatprep.subr.bf16.mxu0 0
      %2899 = vmatpush1.bf16.msra.mxu0 0
      %2900 = vmatprep.subr.bf16.mxu0 0
      %2901 = vmatpush1.bf16.msra.mxu0 0
      %2902 = vmatprep.subr.bf16.mxu0 0
      %2903 = vmatpush1.bf16.msra.mxu0 0
      %2904 = vmatprep.subr.bf16.mxu0 0
      %2905 = vmatpush1.bf16.msra.mxu0 0
      %2906 = vmatprep.subr.bf16.mxu0 0
      %2907 = vmatpush1.bf16.msra.mxu0 %v2879
      %2908 = vmatprep.subr.bf16.mxu0 0
      %2909 = vmatpush1.bf16.msra.mxu0 %v2878
      %2910 = vmatprep.subr.bf16.mxu0 0
      %2911 = vmatpush2.bf16.msra.mxu0 0
      %2912 = vmatprep.subr.bf16.mxu0 0
      %2913 = vmatpush2.bf16.msra.mxu0 0
      %2914 = vmatprep.subr.bf16.mxu0 0
      %2915 = vmatpush2.bf16.msra.mxu0 0
      %2916 = vmatprep.subr.bf16.mxu0 0
      %2917 = vmatpush2.bf16.msra.mxu0 0
      %2918 = vmatprep.subr.bf16.mxu0 0
      %2919 = vmatpush2.bf16.msra.mxu0 0
      %2920 = vmatprep.subr.bf16.mxu0 0
      %2921 = vmatpush2.bf16.msra.mxu0 0
      %2922 = vmatprep.subr.bf16.mxu0 0
      %2923 = vmatpush2.bf16.msra.mxu0 0
      %2924 = vmatprep.subr.bf16.mxu0 0
      %2925 = vmatpush2.bf16.msra.mxu0 0
      %2926 = vmatprep.mubr.bf16.mxu0 0
      %2927 = vmatmul.mubr.bf16.gmra.mxu0 %v2883
      %v2928 = vpop.f32.mrf.mxu0
      %v2929 = vadd.f32 0.0, %v2928
      %v2930 = vpop.f32.mrf.mxu0
      %v2931 = vpop.f32.mrf.mxu0
      %v2932 = vadd.f32 0.0, %v2931
      %v2933 = vpop.f32.mrf.mxu0
      %2934 = vmatprep.mubr.bf16.mxu0 0
      %2935 = vmatmul.mubr.bf16.gmra.mxu0 %v2886
      %v2936 = vpop.f32.mrf.mxu0
      %v2937 = vadd.f32 0.0, %v2936
      %v2938 = vpop.f32.mrf.mxu0
      %v2939 = vpop.f32.mrf.mxu0
      %v2940 = vadd.f32 0.0, %v2939
      %v2941 = vpop.f32.mrf.mxu0
      %2942 = vmatprep.mubr.bf16.mxu0 0
      %2943 = vmatmul.mubr.bf16.gmra.mxu0 %v2889
      %v2944 = vpop.f32.mrf.mxu0
      %v2945 = vadd.f32 0.0, %v2944
      %v2946 = vpop.f32.mrf.mxu0
      %v2947 = vpop.f32.mrf.mxu0
      %v2948 = vadd.f32 0.0, %v2947
      %v2949 = vpop.f32.mrf.mxu0
      %2950 = vmatprep.mubr.bf16.mxu0 0
      %2951 = vmatmul.mubr.bf16.gmra.mxu0 %v2892
      %v2952 = vpop.f32.mrf.mxu0
      %v2953 = vadd.f32 0.0, %v2952
      %v2954 = vpop.f32.mrf.mxu0
      %v2955 = vpop.f32.mrf.mxu0
      %v2956 = vadd.f32 0.0, %v2955
      %v2957 = vpop.f32.mrf.mxu0
      %2958 = vdwg.mxu0
      %v2959 = vadd.f32 %v2828, %v2929
      %v2960 = vadd.f32 %v2829, %v2932
      %v2961 = vadd.f32 %v2830, %v2937
      %v2962 = vadd.f32 %v2831, %v2940
      %v2963 = vadd.f32 %v2832, %v2945
      %v2964 = vadd.f32 %v2833, %v2948
      %v2965 = vadd.f32 %v2834, %v2953
      %v2966 = vadd.f32 %v2835, %v2956
      %s2967 = scalar_lea.vmem %s308, 368
      %v2968 = vld [vmem:[%s2967] sm:$0xf]
      %v2969 = vld [vmem:[%s2967 + $0x8] sm:$0xf]
      %v2970 = vld [vmem:[%s2967 + $0x10] sm:$0xf]
      %v2971 = vld [vmem:[%s2967 + $0x18] sm:$0xf]
      %v2972 = vld [vmem:[%s2967 + $0x20] sm:$0xf]
      %v2973 = vld [vmem:[%s2967 + $0x28] sm:$0xf]
      %v2974 = vld [vmem:[%s2967 + $0x30] sm:$0xf]
      %v2975 = vld [vmem:[%s2967 + $0x38] sm:$0xf]
      %s2976 = scalar_lea.vmem %s2, 256
      %v2977 = vld [vmem:[%s2976] sm:$0xf]
      %v2978 = vld [vmem:[%s2976 + $0x4] sm:$0xf]
      %v2979 = vld [vmem:[%s2976 + $0x8] sm:$0xf]
      %v2980 = vld [vmem:[%s2976 + $0xc] sm:$0xf]
      %v2989 = vunpack.c.l.b16 %v2968
      %v2990 = vunpack.c.l.b16 %v2969
      %v2991 = vunpack.c.l.b16 %v2970
      %v2992 = vunpack.c.l.b16 %v2971
      %v2993 = vunpack.c.l.b16 %v2972
      %v2994 = vunpack.c.l.b16 %v2973
      %v2995 = vunpack.c.l.b16 %v2974
      %v2996 = vunpack.c.l.b16 %v2975
      %v2997 = vpack.c.b16 %v2990, %v2989
      %v2998 = vpack.c.b16 %v2992, %v2991
      %v2999 = vpack.c.b16 %v2994, %v2993
      %v3000 = vpack.c.b16 %v2996, %v2995
      %v3005 = vunpack.c.l.b16 %v2977
      %v3006 = vunpack.c.l.b16 %v2978
      %v3007 = vunpack.c.l.b16 %v2979
      %v3008 = vunpack.c.l.b16 %v2980
      %v3009 = vpack.c.b16 %v3006, %v3005
      %v3010 = vpack.c.b16 %v3008, %v3007
      %v3014 = vsel %vm388, %v2997, 0
      %v3017 = vsel %vm388, %v2998, 0
      %v3020 = vsel %vm388, %v2999, 0
      %v3023 = vsel %vm388, %v3000, 0
      %3025 = vmatprep.subr.bf16.mxu0 0
      %3026 = vmatpush1.bf16.msra.mxu0 0
      %3027 = vmatprep.subr.bf16.mxu0 0
      %3028 = vmatpush1.bf16.msra.mxu0 0
      %3029 = vmatprep.subr.bf16.mxu0 0
      %3030 = vmatpush1.bf16.msra.mxu0 0
      %3031 = vmatprep.subr.bf16.mxu0 0
      %3032 = vmatpush1.bf16.msra.mxu0 0
      %3033 = vmatprep.subr.bf16.mxu0 0
      %3034 = vmatpush1.bf16.msra.mxu0 0
      %3035 = vmatprep.subr.bf16.mxu0 0
      %3036 = vmatpush1.bf16.msra.mxu0 0
      %3037 = vmatprep.subr.bf16.mxu0 0
      %3038 = vmatpush1.bf16.msra.mxu0 %v3010
      %3039 = vmatprep.subr.bf16.mxu0 0
      %3040 = vmatpush1.bf16.msra.mxu0 %v3009
      %3041 = vmatprep.subr.bf16.mxu0 0
      %3042 = vmatpush2.bf16.msra.mxu0 0
      %3043 = vmatprep.subr.bf16.mxu0 0
      %3044 = vmatpush2.bf16.msra.mxu0 0
      %3045 = vmatprep.subr.bf16.mxu0 0
      %3046 = vmatpush2.bf16.msra.mxu0 0
      %3047 = vmatprep.subr.bf16.mxu0 0
      %3048 = vmatpush2.bf16.msra.mxu0 0
      %3049 = vmatprep.subr.bf16.mxu0 0
      %3050 = vmatpush2.bf16.msra.mxu0 0
      %3051 = vmatprep.subr.bf16.mxu0 0
      %3052 = vmatpush2.bf16.msra.mxu0 0
      %3053 = vmatprep.subr.bf16.mxu0 0
      %3054 = vmatpush2.bf16.msra.mxu0 0
      %3055 = vmatprep.subr.bf16.mxu0 0
      %3056 = vmatpush2.bf16.msra.mxu0 0
      %3057 = vmatprep.mubr.bf16.mxu0 0
      %3058 = vmatmul.mubr.bf16.gmra.mxu0 %v3014
      %v3059 = vpop.f32.mrf.mxu0
      %v3060 = vadd.f32 0.0, %v3059
      %v3061 = vpop.f32.mrf.mxu0
      %v3062 = vpop.f32.mrf.mxu0
      %v3063 = vadd.f32 0.0, %v3062
      %v3064 = vpop.f32.mrf.mxu0
      %3065 = vmatprep.mubr.bf16.mxu0 0
      %3066 = vmatmul.mubr.bf16.gmra.mxu0 %v3017
      %v3067 = vpop.f32.mrf.mxu0
      %v3068 = vadd.f32 0.0, %v3067
      %v3069 = vpop.f32.mrf.mxu0
      %v3070 = vpop.f32.mrf.mxu0
      %v3071 = vadd.f32 0.0, %v3070
      %v3072 = vpop.f32.mrf.mxu0
      %3073 = vmatprep.mubr.bf16.mxu0 0
      %3074 = vmatmul.mubr.bf16.gmra.mxu0 %v3020
      %v3075 = vpop.f32.mrf.mxu0
      %v3076 = vadd.f32 0.0, %v3075
      %v3077 = vpop.f32.mrf.mxu0
      %v3078 = vpop.f32.mrf.mxu0
      %v3079 = vadd.f32 0.0, %v3078
      %v3080 = vpop.f32.mrf.mxu0
      %3081 = vmatprep.mubr.bf16.mxu0 0
      %3082 = vmatmul.mubr.bf16.gmra.mxu0 %v3023
      %v3083 = vpop.f32.mrf.mxu0
      %v3084 = vadd.f32 0.0, %v3083
      %v3085 = vpop.f32.mrf.mxu0
      %v3086 = vpop.f32.mrf.mxu0
      %v3087 = vadd.f32 0.0, %v3086
      %v3088 = vpop.f32.mrf.mxu0
      %3089 = vdwg.mxu0
      %v3090 = vadd.f32 %v2959, %v3060
      %v3091 = vadd.f32 %v2960, %v3063
      %v3092 = vadd.f32 %v2961, %v3068
      %v3093 = vadd.f32 %v2962, %v3071
      %v3094 = vadd.f32 %v2963, %v3076
      %v3095 = vadd.f32 %v2964, %v3079
      %v3096 = vadd.f32 %v2965, %v3084
      %v3097 = vadd.f32 %v2966, %v3087
      %v3098 = vld [vmem:[%s2836] sm:$0xf]
      %v3099 = vld [vmem:[%s2836 + $0x4] sm:$0x1]
      %v3100 = vld [vmem:[%s2836 + $0x8] sm:$0xf]
      %v3101 = vld [vmem:[%s2836 + $0xc] sm:$0x1]
      %v3102 = vld [vmem:[%s2836 + $0x10] sm:$0xf]
      %v3103 = vld [vmem:[%s2836 + $0x14] sm:$0x1]
      %v3104 = vld [vmem:[%s2836 + $0x18] sm:$0xf]
      %v3105 = vld [vmem:[%s2836 + $0x1c] sm:$0x1]
      %v3106 = vld [vmem:[%s2836 + $0x20] sm:$0xf]
      %v3107 = vld [vmem:[%s2836 + $0x24] sm:$0x1]
      %v3108 = vld [vmem:[%s2836 + $0x28] sm:$0xf]
      %v3109 = vld [vmem:[%s2836 + $0x2c] sm:$0x1]
      %v3110 = vld [vmem:[%s2836 + $0x30] sm:$0xf]
      %v3111 = vld [vmem:[%s2836 + $0x34] sm:$0x1]
      %v3112 = vld [vmem:[%s2836 + $0x38] sm:$0xf]
      %v3113 = vld [vmem:[%s2836 + $0x3c] sm:$0x1]
      %v3115 = vshrl.u32 %v3098, 16
      %v3117 = vrot.slane %v3115, 4
      %v3118 = vshll.u32 %v3098, 16
      %v3120 = vrot.slane %v3118, 5
      %v3121 = vor.u32 %v3117, %v3120
      %v3122 = vrot.slane %v3121, 4
      %v3124 = vshll.u32 %v3099, 16
      %v3126 = vrot.slane %v3124, 5
      %v3127 = vsel %vm593, %v3122, %v3126
      %v3129 = vshrl.u32 %v3100, 16
      %v3131 = vrot.slane %v3129, 4
      %v3132 = vshll.u32 %v3100, 16
      %v3134 = vrot.slane %v3132, 5
      %v3135 = vor.u32 %v3131, %v3134
      %v3136 = vrot.slane %v3135, 4
      %v3138 = vshll.u32 %v3101, 16
      %v3140 = vrot.slane %v3138, 5
      %v3141 = vsel %vm593, %v3136, %v3140
      %v3143 = vshrl.u32 %v3102, 16
      %v3145 = vrot.slane %v3143, 4
      %v3146 = vshll.u32 %v3102, 16
      %v3148 = vrot.slane %v3146, 5
      %v3149 = vor.u32 %v3145, %v3148
      %v3150 = vrot.slane %v3149, 4
      %v3152 = vshll.u32 %v3103, 16
      %v3154 = vrot.slane %v3152, 5
      %v3155 = vsel %vm593, %v3150, %v3154
      %v3157 = vshrl.u32 %v3104, 16
      %v3159 = vrot.slane %v3157, 4
      %v3160 = vshll.u32 %v3104, 16
      %v3162 = vrot.slane %v3160, 5
      %v3163 = vor.u32 %v3159, %v3162
      %v3164 = vrot.slane %v3163, 4
      %v3166 = vshll.u32 %v3105, 16
      %v3168 = vrot.slane %v3166, 5
      %v3169 = vsel %vm593, %v3164, %v3168
      %v3171 = vshrl.u32 %v3106, 16
      %v3173 = vrot.slane %v3171, 4
      %v3174 = vshll.u32 %v3106, 16
      %v3176 = vrot.slane %v3174, 5
      %v3177 = vor.u32 %v3173, %v3176
      %v3178 = vrot.slane %v3177, 4
      %v3180 = vshll.u32 %v3107, 16
      %v3182 = vrot.slane %v3180, 5
      %v3183 = vsel %vm593, %v3178, %v3182
      %v3185 = vshrl.u32 %v3108, 16
      %v3187 = vrot.slane %v3185, 4
      %v3188 = vshll.u32 %v3108, 16
      %v3190 = vrot.slane %v3188, 5
      %v3191 = vor.u32 %v3187, %v3190
      %v3192 = vrot.slane %v3191, 4
      %v3194 = vshll.u32 %v3109, 16
      %v3196 = vrot.slane %v3194, 5
      %v3197 = vsel %vm593, %v3192, %v3196
      %v3199 = vshrl.u32 %v3110, 16
      %v3201 = vrot.slane %v3199, 4
      %v3202 = vshll.u32 %v3110, 16
      %v3204 = vrot.slane %v3202, 5
      %v3205 = vor.u32 %v3201, %v3204
      %v3206 = vrot.slane %v3205, 4
      %v3208 = vshll.u32 %v3111, 16
      %v3210 = vrot.slane %v3208, 5
      %v3211 = vsel %vm593, %v3206, %v3210
      %v3213 = vshrl.u32 %v3112, 16
      %v3215 = vrot.slane %v3213, 4
      %v3216 = vshll.u32 %v3112, 16
      %v3218 = vrot.slane %v3216, 5
      %v3219 = vor.u32 %v3215, %v3218
      %v3220 = vrot.slane %v3219, 4
      %v3222 = vshll.u32 %v3113, 16
      %v3224 = vrot.slane %v3222, 5
      %v3225 = vsel %vm593, %v3220, %v3224
      %s3226 = scalar_lea.vmem %s2, 272
      %v3227 = vld [vmem:[%s3226] sm:$0xf]
      %v3228 = vld [vmem:[%s3226 + $0x4] sm:$0xf]
      %v3229 = vld [vmem:[%s3226 + $0x8] sm:$0xf]
      %v3230 = vld [vmem:[%s3226 + $0xc] sm:$0xf]
      %v3231 = vunpack.c.l.b16 %v3127
      %v3232 = vunpack.c.l.b16 %v3141
      %v3233 = vunpack.c.l.b16 %v3155
      %v3234 = vunpack.c.l.b16 %v3169
      %v3235 = vunpack.c.l.b16 %v3183
      %v3236 = vunpack.c.l.b16 %v3197
      %v3237 = vunpack.c.l.b16 %v3211
      %v3238 = vunpack.c.l.b16 %v3225
      %v3239 = vpack.c.b16 %v3232, %v3231
      %v3240 = vpack.c.b16 %v3234, %v3233
      %v3241 = vpack.c.b16 %v3236, %v3235
      %v3242 = vpack.c.b16 %v3238, %v3237
      %v3247 = vunpack.c.l.b16 %v3227
      %v3248 = vunpack.c.l.b16 %v3228
      %v3249 = vunpack.c.l.b16 %v3229
      %v3250 = vunpack.c.l.b16 %v3230
      %v3251 = vpack.c.b16 %v3248, %v3247
      %v3252 = vpack.c.b16 %v3250, %v3249
      %v3256 = vsel %vm388, %v3239, 0
      %v3259 = vsel %vm388, %v3240, 0
      %v3262 = vsel %vm388, %v3241, 0
      %v3265 = vsel %vm388, %v3242, 0
      %3267 = vmatprep.subr.bf16.mxu0 0
      %3268 = vmatpush1.bf16.msra.mxu0 0
      %3269 = vmatprep.subr.bf16.mxu0 0
      %3270 = vmatpush1.bf16.msra.mxu0 0
      %3271 = vmatprep.subr.bf16.mxu0 0
      %3272 = vmatpush1.bf16.msra.mxu0 0
      %3273 = vmatprep.subr.bf16.mxu0 0
      %3274 = vmatpush1.bf16.msra.mxu0 0
      %3275 = vmatprep.subr.bf16.mxu0 0
      %3276 = vmatpush1.bf16.msra.mxu0 0
      %3277 = vmatprep.subr.bf16.mxu0 0
      %3278 = vmatpush1.bf16.msra.mxu0 0
      %3279 = vmatprep.subr.bf16.mxu0 0
      %3280 = vmatpush1.bf16.msra.mxu0 %v3252
      %3281 = vmatprep.subr.bf16.mxu0 0
      %3282 = vmatpush1.bf16.msra.mxu0 %v3251
      %3283 = vmatprep.subr.bf16.mxu0 0
      %3284 = vmatpush2.bf16.msra.mxu0 0
      %3285 = vmatprep.subr.bf16.mxu0 0
      %3286 = vmatpush2.bf16.msra.mxu0 0
      %3287 = vmatprep.subr.bf16.mxu0 0
      %3288 = vmatpush2.bf16.msra.mxu0 0
      %3289 = vmatprep.subr.bf16.mxu0 0
      %3290 = vmatpush2.bf16.msra.mxu0 0
      %3291 = vmatprep.subr.bf16.mxu0 0
      %3292 = vmatpush2.bf16.msra.mxu0 0
      %3293 = vmatprep.subr.bf16.mxu0 0
      %3294 = vmatpush2.bf16.msra.mxu0 0
      %3295 = vmatprep.subr.bf16.mxu0 0
      %3296 = vmatpush2.bf16.msra.mxu0 0
      %3297 = vmatprep.subr.bf16.mxu0 0
      %3298 = vmatpush2.bf16.msra.mxu0 0
      %3299 = vmatprep.mubr.bf16.mxu0 0
      %3300 = vmatmul.mubr.bf16.gmra.mxu0 %v3256
      %v3301 = vpop.f32.mrf.mxu0
      %v3302 = vadd.f32 0.0, %v3301
      %v3303 = vpop.f32.mrf.mxu0
      %v3304 = vpop.f32.mrf.mxu0
      %v3305 = vadd.f32 0.0, %v3304
      %v3306 = vpop.f32.mrf.mxu0
      %3307 = vmatprep.mubr.bf16.mxu0 0
      %3308 = vmatmul.mubr.bf16.gmra.mxu0 %v3259
      %v3309 = vpop.f32.mrf.mxu0
      %v3310 = vadd.f32 0.0, %v3309
      %v3311 = vpop.f32.mrf.mxu0
      %v3312 = vpop.f32.mrf.mxu0
      %v3313 = vadd.f32 0.0, %v3312
      %v3314 = vpop.f32.mrf.mxu0
      %3315 = vmatprep.mubr.bf16.mxu0 0
      %3316 = vmatmul.mubr.bf16.gmra.mxu0 %v3262
      %v3317 = vpop.f32.mrf.mxu0
      %v3318 = vadd.f32 0.0, %v3317
      %v3319 = vpop.f32.mrf.mxu0
      %v3320 = vpop.f32.mrf.mxu0
      %v3321 = vadd.f32 0.0, %v3320
      %v3322 = vpop.f32.mrf.mxu0
      %3323 = vmatprep.mubr.bf16.mxu0 0
      %3324 = vmatmul.mubr.bf16.gmra.mxu0 %v3265
      %v3325 = vpop.f32.mrf.mxu0
      %v3326 = vadd.f32 0.0, %v3325
      %v3327 = vpop.f32.mrf.mxu0
      %v3328 = vpop.f32.mrf.mxu0
      %v3329 = vadd.f32 0.0, %v3328
      %v3330 = vpop.f32.mrf.mxu0
      %3331 = vdwg.mxu0
      %v3332 = vadd.f32 %v3090, %v3302
      %v3333 = vadd.f32 %v3091, %v3305
      %v3334 = vadd.f32 %v3092, %v3310
      %v3335 = vadd.f32 %v3093, %v3313
      %v3336 = vadd.f32 %v3094, %v3318
      %v3337 = vadd.f32 %v3095, %v3321
      %v3338 = vadd.f32 %v3096, %v3326
      %v3339 = vadd.f32 %v3097, %v3329
      %v3340 = vld [vmem:[%s318] sm:$0xf]
      %v3341 = vld [vmem:[%s318 + $0x8] sm:$0xf]
      %v3342 = vld [vmem:[%s318 + $0x10] sm:$0xf]
      %v3343 = vld [vmem:[%s318 + $0x18] sm:$0xf]
      %v3344 = vld [vmem:[%s318 + $0x20] sm:$0xf]
      %v3345 = vld [vmem:[%s318 + $0x28] sm:$0xf]
      %v3346 = vld [vmem:[%s318 + $0x30] sm:$0xf]
      %v3347 = vld [vmem:[%s318 + $0x38] sm:$0xf]
      %s3348 = scalar_lea.vmem %s2, 288
      %v3349 = vld [vmem:[%s3348] sm:$0xf]
      %v3350 = vld [vmem:[%s3348 + $0x4] sm:$0xf]
      %v3351 = vld [vmem:[%s3348 + $0x8] sm:$0xf]
      %v3352 = vld [vmem:[%s3348 + $0xc] sm:$0xf]
      %v3361 = vunpack.c.l.b16 %v3340
      %v3362 = vunpack.c.l.b16 %v3341
      %v3363 = vunpack.c.l.b16 %v3342
      %v3364 = vunpack.c.l.b16 %v3343
      %v3365 = vunpack.c.l.b16 %v3344
      %v3366 = vunpack.c.l.b16 %v3345
      %v3367 = vunpack.c.l.b16 %v3346
      %v3368 = vunpack.c.l.b16 %v3347
      %v3369 = vpack.c.b16 %v3362, %v3361
      %v3370 = vpack.c.b16 %v3364, %v3363
      %v3371 = vpack.c.b16 %v3366, %v3365
      %v3372 = vpack.c.b16 %v3368, %v3367
      %v3377 = vunpack.c.l.b16 %v3349
      %v3378 = vunpack.c.l.b16 %v3350
      %v3379 = vunpack.c.l.b16 %v3351
      %v3380 = vunpack.c.l.b16 %v3352
      %v3381 = vpack.c.b16 %v3378, %v3377
      %v3382 = vpack.c.b16 %v3380, %v3379
      %v3386 = vsel %vm388, %v3369, 0
      %v3389 = vsel %vm388, %v3370, 0
      %v3392 = vsel %vm388, %v3371, 0
      %v3395 = vsel %vm388, %v3372, 0
      %3397 = vmatprep.subr.bf16.mxu0 0
      %3398 = vmatpush1.bf16.msra.mxu0 0
      %3399 = vmatprep.subr.bf16.mxu0 0
      %3400 = vmatpush1.bf16.msra.mxu0 0
      %3401 = vmatprep.subr.bf16.mxu0 0
      %3402 = vmatpush1.bf16.msra.mxu0 0
      %3403 = vmatprep.subr.bf16.mxu0 0
      %3404 = vmatpush1.bf16.msra.mxu0 0
      %3405 = vmatprep.subr.bf16.mxu0 0
      %3406 = vmatpush1.bf16.msra.mxu0 0
      %3407 = vmatprep.subr.bf16.mxu0 0
      %3408 = vmatpush1.bf16.msra.mxu0 0
      %3409 = vmatprep.subr.bf16.mxu0 0
      %3410 = vmatpush1.bf16.msra.mxu0 %v3382
      %3411 = vmatprep.subr.bf16.mxu0 0
      %3412 = vmatpush1.bf16.msra.mxu0 %v3381
      %3413 = vmatprep.subr.bf16.mxu0 0
      %3414 = vmatpush2.bf16.msra.mxu0 0
      %3415 = vmatprep.subr.bf16.mxu0 0
      %3416 = vmatpush2.bf16.msra.mxu0 0
      %3417 = vmatprep.subr.bf16.mxu0 0
      %3418 = vmatpush2.bf16.msra.mxu0 0
      %3419 = vmatprep.subr.bf16.mxu0 0
      %3420 = vmatpush2.bf16.msra.mxu0 0
      %3421 = vmatprep.subr.bf16.mxu0 0
      %3422 = vmatpush2.bf16.msra.mxu0 0
      %3423 = vmatprep.subr.bf16.mxu0 0
      %3424 = vmatpush2.bf16.msra.mxu0 0
      %3425 = vmatprep.subr.bf16.mxu0 0
      %3426 = vmatpush2.bf16.msra.mxu0 0
      %3427 = vmatprep.subr.bf16.mxu0 0
      %3428 = vmatpush2.bf16.msra.mxu0 0
      %3429 = vmatprep.mubr.bf16.mxu0 0
      %3430 = vmatmul.mubr.bf16.gmra.mxu0 %v3386
      %v3431 = vpop.f32.mrf.mxu0
      %v3432 = vadd.f32 0.0, %v3431
      %v3433 = vpop.f32.mrf.mxu0
      %v3434 = vpop.f32.mrf.mxu0
      %v3435 = vadd.f32 0.0, %v3434
      %v3436 = vpop.f32.mrf.mxu0
      %3437 = vmatprep.mubr.bf16.mxu0 0
      %3438 = vmatmul.mubr.bf16.gmra.mxu0 %v3389
      %v3439 = vpop.f32.mrf.mxu0
      %v3440 = vadd.f32 0.0, %v3439
      %v3441 = vpop.f32.mrf.mxu0
      %v3442 = vpop.f32.mrf.mxu0
      %v3443 = vadd.f32 0.0, %v3442
      %v3444 = vpop.f32.mrf.mxu0
      %3445 = vmatprep.mubr.bf16.mxu0 0
      %3446 = vmatmul.mubr.bf16.gmra.mxu0 %v3392
      %v3447 = vpop.f32.mrf.mxu0
      %v3448 = vadd.f32 0.0, %v3447
      %v3449 = vpop.f32.mrf.mxu0
      %v3450 = vpop.f32.mrf.mxu0
      %v3451 = vadd.f32 0.0, %v3450
      %v3452 = vpop.f32.mrf.mxu0
      %3453 = vmatprep.mubr.bf16.mxu0 0
      %3454 = vmatmul.mubr.bf16.gmra.mxu0 %v3395
      %v3455 = vpop.f32.mrf.mxu0
      %v3456 = vadd.f32 0.0, %v3455
      %v3457 = vpop.f32.mrf.mxu0
      %v3458 = vpop.f32.mrf.mxu0
      %v3459 = vadd.f32 0.0, %v3458
      %v3460 = vpop.f32.mrf.mxu0
      %3461 = vdwg.mxu0
      %v3462 = vadd.f32 %v3332, %v3432
      %v3463 = vadd.f32 %v3333, %v3435
      %v3464 = vadd.f32 %v3334, %v3440
      %v3465 = vadd.f32 %v3335, %v3443
      %v3466 = vadd.f32 %v3336, %v3448
      %v3467 = vadd.f32 %v3337, %v3451
      %v3468 = vadd.f32 %v3338, %v3456
      %v3469 = vadd.f32 %v3339, %v3459
      %s3470 = scalar_lea.vmem %s318, 72
      %v3471 = vld [vmem:[%s3470] sm:$0xf]
      %v3472 = vld [vmem:[%s3470 + $0x8] sm:$0xf]
      %v3473 = vld [vmem:[%s3470 + $0x10] sm:$0xf]
      %v3474 = vld [vmem:[%s3470 + $0x18] sm:$0xf]
      %v3475 = vld [vmem:[%s3470 + $0x20] sm:$0xf]
      %v3476 = vld [vmem:[%s3470 + $0x28] sm:$0xf]
      %v3477 = vld [vmem:[%s3470 + $0x30] sm:$0xf]
      %v3478 = vld [vmem:[%s3470 + $0x38] sm:$0xf]
      %s3479 = scalar_lea.vmem %s2, 304
      %v3480 = vld [vmem:[%s3479] sm:$0xf]
      %v3481 = vld [vmem:[%s3479 + $0x4] sm:$0xf]
      %v3482 = vld [vmem:[%s3479 + $0x8] sm:$0xf]
      %v3483 = vld [vmem:[%s3479 + $0xc] sm:$0xf]
      %v3492 = vunpack.c.l.b16 %v3471
      %v3493 = vunpack.c.l.b16 %v3472
      %v3494 = vunpack.c.l.b16 %v3473
      %v3495 = vunpack.c.l.b16 %v3474
      %v3496 = vunpack.c.l.b16 %v3475
      %v3497 = vunpack.c.l.b16 %v3476
      %v3498 = vunpack.c.l.b16 %v3477
      %v3499 = vunpack.c.l.b16 %v3478
      %v3500 = vpack.c.b16 %v3493, %v3492
      %v3501 = vpack.c.b16 %v3495, %v3494
      %v3502 = vpack.c.b16 %v3497, %v3496
      %v3503 = vpack.c.b16 %v3499, %v3498
      %v3508 = vunpack.c.l.b16 %v3480
      %v3509 = vunpack.c.l.b16 %v3481
      %v3510 = vunpack.c.l.b16 %v3482
      %v3511 = vunpack.c.l.b16 %v3483
      %v3512 = vpack.c.b16 %v3509, %v3508
      %v3513 = vpack.c.b16 %v3511, %v3510
      %v3517 = vsel %vm388, %v3500, 0
      %v3520 = vsel %vm388, %v3501, 0
      %v3523 = vsel %vm388, %v3502, 0
      %v3526 = vsel %vm388, %v3503, 0
      %3528 = vmatprep.subr.bf16.mxu0 0
      %3529 = vmatpush1.bf16.msra.mxu0 0
      %3530 = vmatprep.subr.bf16.mxu0 0
      %3531 = vmatpush1.bf16.msra.mxu0 0
      %3532 = vmatprep.subr.bf16.mxu0 0
      %3533 = vmatpush1.bf16.msra.mxu0 0
      %3534 = vmatprep.subr.bf16.mxu0 0
      %3535 = vmatpush1.bf16.msra.mxu0 0
      %3536 = vmatprep.subr.bf16.mxu0 0
      %3537 = vmatpush1.bf16.msra.mxu0 0
      %3538 = vmatprep.subr.bf16.mxu0 0
      %3539 = vmatpush1.bf16.msra.mxu0 0
      %3540 = vmatprep.subr.bf16.mxu0 0
      %3541 = vmatpush1.bf16.msra.mxu0 %v3513
      %3542 = vmatprep.subr.bf16.mxu0 0
      %3543 = vmatpush1.bf16.msra.mxu0 %v3512
      %3544 = vmatprep.subr.bf16.mxu0 0
      %3545 = vmatpush2.bf16.msra.mxu0 0
      %3546 = vmatprep.subr.bf16.mxu0 0
      %3547 = vmatpush2.bf16.msra.mxu0 0
      %3548 = vmatprep.subr.bf16.mxu0 0
      %3549 = vmatpush2.bf16.msra.mxu0 0
      %3550 = vmatprep.subr.bf16.mxu0 0
      %3551 = vmatpush2.bf16.msra.mxu0 0
      %3552 = vmatprep.subr.bf16.mxu0 0
      %3553 = vmatpush2.bf16.msra.mxu0 0
      %3554 = vmatprep.subr.bf16.mxu0 0
      %3555 = vmatpush2.bf16.msra.mxu0 0
      %3556 = vmatprep.subr.bf16.mxu0 0
      %3557 = vmatpush2.bf16.msra.mxu0 0
      %3558 = vmatprep.subr.bf16.mxu0 0
      %3559 = vmatpush2.bf16.msra.mxu0 0
      %3560 = vmatprep.mubr.bf16.mxu0 0
      %3561 = vmatmul.mubr.bf16.gmra.mxu0 %v3517
      %v3562 = vpop.f32.mrf.mxu0
      %v3563 = vadd.f32 0.0, %v3562
      %v3564 = vpop.f32.mrf.mxu0
      %v3565 = vpop.f32.mrf.mxu0
      %v3566 = vadd.f32 0.0, %v3565
      %v3567 = vpop.f32.mrf.mxu0
      %3568 = vmatprep.mubr.bf16.mxu0 0
      %3569 = vmatmul.mubr.bf16.gmra.mxu0 %v3520
      %v3570 = vpop.f32.mrf.mxu0
      %v3571 = vadd.f32 0.0, %v3570
      %v3572 = vpop.f32.mrf.mxu0
      %v3573 = vpop.f32.mrf.mxu0
      %v3574 = vadd.f32 0.0, %v3573
      %v3575 = vpop.f32.mrf.mxu0
      %3576 = vmatprep.mubr.bf16.mxu0 0
      %3577 = vmatmul.mubr.bf16.gmra.mxu0 %v3523
      %v3578 = vpop.f32.mrf.mxu0
      %v3579 = vadd.f32 0.0, %v3578
      %v3580 = vpop.f32.mrf.mxu0
      %v3581 = vpop.f32.mrf.mxu0
      %v3582 = vadd.f32 0.0, %v3581
      %v3583 = vpop.f32.mrf.mxu0
      %3584 = vmatprep.mubr.bf16.mxu0 0
      %3585 = vmatmul.mubr.bf16.gmra.mxu0 %v3526
      %v3586 = vpop.f32.mrf.mxu0
      %v3587 = vadd.f32 0.0, %v3586
      %v3588 = vpop.f32.mrf.mxu0
      %v3589 = vpop.f32.mrf.mxu0
      %v3590 = vadd.f32 0.0, %v3589
      %v3591 = vpop.f32.mrf.mxu0
      %3592 = vdwg.mxu0
      %v3593 = vadd.f32 %v3462, %v3563
      %v3594 = vadd.f32 %v3463, %v3566
      %v3595 = vadd.f32 %v3464, %v3571
      %v3596 = vadd.f32 %v3465, %v3574
      %v3597 = vadd.f32 %v3466, %v3579
      %v3598 = vadd.f32 %v3467, %v3582
      %v3599 = vadd.f32 %v3468, %v3587
      %v3600 = vadd.f32 %v3469, %v3590
      %v3601 = vld [vmem:[%s318] sm:$0xf]
      %v3602 = vld [vmem:[%s318 + $0x4] sm:$0x1]
      %v3603 = vld [vmem:[%s318 + $0x8] sm:$0xf]
      %v3604 = vld [vmem:[%s318 + $0xc] sm:$0x1]
      %v3605 = vld [vmem:[%s318 + $0x10] sm:$0xf]
      %v3606 = vld [vmem:[%s318 + $0x14] sm:$0x1]
      %v3607 = vld [vmem:[%s318 + $0x18] sm:$0xf]
      %v3608 = vld [vmem:[%s318 + $0x1c] sm:$0x1]
      %v3609 = vld [vmem:[%s318 + $0x20] sm:$0xf]
      %v3610 = vld [vmem:[%s318 + $0x24] sm:$0x1]
      %v3611 = vld [vmem:[%s318 + $0x28] sm:$0xf]
      %v3612 = vld [vmem:[%s318 + $0x2c] sm:$0x1]
      %v3613 = vld [vmem:[%s318 + $0x30] sm:$0xf]
      %v3614 = vld [vmem:[%s318 + $0x34] sm:$0x1]
      %v3615 = vld [vmem:[%s318 + $0x38] sm:$0xf]
      %v3616 = vld [vmem:[%s318 + $0x3c] sm:$0x1]
      %v3618 = vshrl.u32 %v3601, 16
      %v3620 = vrot.slane %v3618, 4
      %v3621 = vshll.u32 %v3601, 16
      %v3623 = vrot.slane %v3621, 5
      %v3624 = vor.u32 %v3620, %v3623
      %v3625 = vrot.slane %v3624, 4
      %v3627 = vshll.u32 %v3602, 16
      %v3629 = vrot.slane %v3627, 5
      %v3630 = vsel %vm593, %v3625, %v3629
      %v3632 = vshrl.u32 %v3603, 16
      %v3634 = vrot.slane %v3632, 4
      %v3635 = vshll.u32 %v3603, 16
      %v3637 = vrot.slane %v3635, 5
      %v3638 = vor.u32 %v3634, %v3637
      %v3639 = vrot.slane %v3638, 4
      %v3641 = vshll.u32 %v3604, 16
      %v3643 = vrot.slane %v3641, 5
      %v3644 = vsel %vm593, %v3639, %v3643
      %v3646 = vshrl.u32 %v3605, 16
      %v3648 = vrot.slane %v3646, 4
      %v3649 = vshll.u32 %v3605, 16
      %v3651 = vrot.slane %v3649, 5
      %v3652 = vor.u32 %v3648, %v3651
      %v3653 = vrot.slane %v3652, 4
      %v3655 = vshll.u32 %v3606, 16
      %v3657 = vrot.slane %v3655, 5
      %v3658 = vsel %vm593, %v3653, %v3657
      %v3660 = vshrl.u32 %v3607, 16
      %v3662 = vrot.slane %v3660, 4
      %v3663 = vshll.u32 %v3607, 16
      %v3665 = vrot.slane %v3663, 5
      %v3666 = vor.u32 %v3662, %v3665
      %v3667 = vrot.slane %v3666, 4
      %v3669 = vshll.u32 %v3608, 16
      %v3671 = vrot.slane %v3669, 5
      %v3672 = vsel %vm593, %v3667, %v3671
      %v3674 = vshrl.u32 %v3609, 16
      %v3676 = vrot.slane %v3674, 4
      %v3677 = vshll.u32 %v3609, 16
      %v3679 = vrot.slane %v3677, 5
      %v3680 = vor.u32 %v3676, %v3679
      %v3681 = vrot.slane %v3680, 4
      %v3683 = vshll.u32 %v3610, 16
      %v3685 = vrot.slane %v3683, 5
      %v3686 = vsel %vm593, %v3681, %v3685
      %v3688 = vshrl.u32 %v3611, 16
      %v3690 = vrot.slane %v3688, 4
      %v3691 = vshll.u32 %v3611, 16
      %v3693 = vrot.slane %v3691, 5
      %v3694 = vor.u32 %v3690, %v3693
      %v3695 = vrot.slane %v3694, 4
      %v3697 = vshll.u32 %v3612, 16
      %v3699 = vrot.slane %v3697, 5
      %v3700 = vsel %vm593, %v3695, %v3699
      %v3702 = vshrl.u32 %v3613, 16
      %v3704 = vrot.slane %v3702, 4
      %v3705 = vshll.u32 %v3613, 16
      %v3707 = vrot.slane %v3705, 5
      %v3708 = vor.u32 %v3704, %v3707
      %v3709 = vrot.slane %v3708, 4
      %v3711 = vshll.u32 %v3614, 16
      %v3713 = vrot.slane %v3711, 5
      %v3714 = vsel %vm593, %v3709, %v3713
      %v3716 = vshrl.u32 %v3615, 16
      %v3718 = vrot.slane %v3716, 4
      %v3719 = vshll.u32 %v3615, 16
      %v3721 = vrot.slane %v3719, 5
      %v3722 = vor.u32 %v3718, %v3721
      %v3723 = vrot.slane %v3722, 4
      %v3725 = vshll.u32 %v3616, 16
      %v3727 = vrot.slane %v3725, 5
      %v3728 = vsel %vm593, %v3723, %v3727
      %s3729 = scalar_lea.vmem %s2, 320
      %v3730 = vld [vmem:[%s3729] sm:$0xf]
      %v3731 = vld [vmem:[%s3729 + $0x4] sm:$0xf]
      %v3732 = vld [vmem:[%s3729 + $0x8] sm:$0xf]
      %v3733 = vld [vmem:[%s3729 + $0xc] sm:$0xf]
      %v3734 = vunpack.c.l.b16 %v3630
      %v3735 = vunpack.c.l.b16 %v3644
      %v3736 = vunpack.c.l.b16 %v3658
      %v3737 = vunpack.c.l.b16 %v3672
      %v3738 = vunpack.c.l.b16 %v3686
      %v3739 = vunpack.c.l.b16 %v3700
      %v3740 = vunpack.c.l.b16 %v3714
      %v3741 = vunpack.c.l.b16 %v3728
      %v3742 = vpack.c.b16 %v3735, %v3734
      %v3743 = vpack.c.b16 %v3737, %v3736
      %v3744 = vpack.c.b16 %v3739, %v3738
      %v3745 = vpack.c.b16 %v3741, %v3740
      %v3750 = vunpack.c.l.b16 %v3730
      %v3751 = vunpack.c.l.b16 %v3731
      %v3752 = vunpack.c.l.b16 %v3732
      %v3753 = vunpack.c.l.b16 %v3733
      %v3754 = vpack.c.b16 %v3751, %v3750
      %v3755 = vpack.c.b16 %v3753, %v3752
      %v3759 = vsel %vm388, %v3742, 0
      %v3762 = vsel %vm388, %v3743, 0
      %v3765 = vsel %vm388, %v3744, 0
      %v3768 = vsel %vm388, %v3745, 0
      %3770 = vmatprep.subr.bf16.mxu0 0
      %3771 = vmatpush1.bf16.msra.mxu0 0
      %3772 = vmatprep.subr.bf16.mxu0 0
      %3773 = vmatpush1.bf16.msra.mxu0 0
      %3774 = vmatprep.subr.bf16.mxu0 0
      %3775 = vmatpush1.bf16.msra.mxu0 0
      %3776 = vmatprep.subr.bf16.mxu0 0
      %3777 = vmatpush1.bf16.msra.mxu0 0
      %3778 = vmatprep.subr.bf16.mxu0 0
      %3779 = vmatpush1.bf16.msra.mxu0 0
      %3780 = vmatprep.subr.bf16.mxu0 0
      %3781 = vmatpush1.bf16.msra.mxu0 0
      %3782 = vmatprep.subr.bf16.mxu0 0
      %3783 = vmatpush1.bf16.msra.mxu0 %v3755
      %3784 = vmatprep.subr.bf16.mxu0 0
      %3785 = vmatpush1.bf16.msra.mxu0 %v3754
      %3786 = vmatprep.subr.bf16.mxu0 0
      %3787 = vmatpush2.bf16.msra.mxu0 0
      %3788 = vmatprep.subr.bf16.mxu0 0
      %3789 = vmatpush2.bf16.msra.mxu0 0
      %3790 = vmatprep.subr.bf16.mxu0 0
      %3791 = vmatpush2.bf16.msra.mxu0 0
      %3792 = vmatprep.subr.bf16.mxu0 0
      %3793 = vmatpush2.bf16.msra.mxu0 0
      %3794 = vmatprep.subr.bf16.mxu0 0
      %3795 = vmatpush2.bf16.msra.mxu0 0
      %3796 = vmatprep.subr.bf16.mxu0 0
      %3797 = vmatpush2.bf16.msra.mxu0 0
      %3798 = vmatprep.subr.bf16.mxu0 0
      %3799 = vmatpush2.bf16.msra.mxu0 0
      %3800 = vmatprep.subr.bf16.mxu0 0
      %3801 = vmatpush2.bf16.msra.mxu0 0
      %3802 = vmatprep.mubr.bf16.mxu0 0
      %3803 = vmatmul.mubr.bf16.gmra.mxu0 %v3759
      %v3804 = vpop.f32.mrf.mxu0
      %v3805 = vadd.f32 0.0, %v3804
      %v3806 = vpop.f32.mrf.mxu0
      %v3807 = vpop.f32.mrf.mxu0
      %v3808 = vadd.f32 0.0, %v3807
      %v3809 = vpop.f32.mrf.mxu0
      %3810 = vmatprep.mubr.bf16.mxu0 0
      %3811 = vmatmul.mubr.bf16.gmra.mxu0 %v3762
      %v3812 = vpop.f32.mrf.mxu0
      %v3813 = vadd.f32 0.0, %v3812
      %v3814 = vpop.f32.mrf.mxu0
      %v3815 = vpop.f32.mrf.mxu0
      %v3816 = vadd.f32 0.0, %v3815
      %v3817 = vpop.f32.mrf.mxu0
      %3818 = vmatprep.mubr.bf16.mxu0 0
      %3819 = vmatmul.mubr.bf16.gmra.mxu0 %v3765
      %v3820 = vpop.f32.mrf.mxu0
      %v3821 = vadd.f32 0.0, %v3820
      %v3822 = vpop.f32.mrf.mxu0
      %v3823 = vpop.f32.mrf.mxu0
      %v3824 = vadd.f32 0.0, %v3823
      %v3825 = vpop.f32.mrf.mxu0
      %3826 = vmatprep.mubr.bf16.mxu0 0
      %3827 = vmatmul.mubr.bf16.gmra.mxu0 %v3768
      %v3828 = vpop.f32.mrf.mxu0
      %v3829 = vadd.f32 0.0, %v3828
      %v3830 = vpop.f32.mrf.mxu0
      %v3831 = vpop.f32.mrf.mxu0
      %v3832 = vadd.f32 0.0, %v3831
      %v3833 = vpop.f32.mrf.mxu0
      %3834 = vdwg.mxu0
      %v3835 = vadd.f32 %v3593, %v3805
      %v3836 = vadd.f32 %v3594, %v3808
      %v3837 = vadd.f32 %v3595, %v3813
      %v3838 = vadd.f32 %v3596, %v3816
      %v3839 = vadd.f32 %v3597, %v3821
      %v3840 = vadd.f32 %v3598, %v3824
      %v3841 = vadd.f32 %v3599, %v3829
      %v3842 = vadd.f32 %v3600, %v3832
      %s3843 = scalar_lea.vmem %s318, 144
      %v3844 = vld [vmem:[%s3843] sm:$0xf]
      %v3845 = vld [vmem:[%s3843 + $0x8] sm:$0xf]
      %v3846 = vld [vmem:[%s3843 + $0x10] sm:$0xf]
      %v3847 = vld [vmem:[%s3843 + $0x18] sm:$0xf]
      %v3848 = vld [vmem:[%s3843 + $0x20] sm:$0xf]
      %v3849 = vld [vmem:[%s3843 + $0x28] sm:$0xf]
      %v3850 = vld [vmem:[%s3843 + $0x30] sm:$0xf]
      %v3851 = vld [vmem:[%s3843 + $0x38] sm:$0xf]
      %s3852 = scalar_lea.vmem %s2, 336
      %v3853 = vld [vmem:[%s3852] sm:$0xf]
      %v3854 = vld [vmem:[%s3852 + $0x4] sm:$0xf]
      %v3855 = vld [vmem:[%s3852 + $0x8] sm:$0xf]
      %v3856 = vld [vmem:[%s3852 + $0xc] sm:$0xf]
      %v3865 = vunpack.c.l.b16 %v3844
      %v3866 = vunpack.c.l.b16 %v3845
      %v3867 = vunpack.c.l.b16 %v3846
      %v3868 = vunpack.c.l.b16 %v3847
      %v3869 = vunpack.c.l.b16 %v3848
      %v3870 = vunpack.c.l.b16 %v3849
      %v3871 = vunpack.c.l.b16 %v3850
      %v3872 = vunpack.c.l.b16 %v3851
      %v3873 = vpack.c.b16 %v3866, %v3865
      %v3874 = vpack.c.b16 %v3868, %v3867
      %v3875 = vpack.c.b16 %v3870, %v3869
      %v3876 = vpack.c.b16 %v3872, %v3871
      %v3881 = vunpack.c.l.b16 %v3853
      %v3882 = vunpack.c.l.b16 %v3854
      %v3883 = vunpack.c.l.b16 %v3855
      %v3884 = vunpack.c.l.b16 %v3856
      %v3885 = vpack.c.b16 %v3882, %v3881
      %v3886 = vpack.c.b16 %v3884, %v3883
      %v3890 = vsel %vm388, %v3873, 0
      %v3893 = vsel %vm388, %v3874, 0
      %v3896 = vsel %vm388, %v3875, 0
      %v3899 = vsel %vm388, %v3876, 0
      %3901 = vmatprep.subr.bf16.mxu0 0
      %3902 = vmatpush1.bf16.msra.mxu0 0
      %3903 = vmatprep.subr.bf16.mxu0 0
      %3904 = vmatpush1.bf16.msra.mxu0 0
      %3905 = vmatprep.subr.bf16.mxu0 0
      %3906 = vmatpush1.bf16.msra.mxu0 0
      %3907 = vmatprep.subr.bf16.mxu0 0
      %3908 = vmatpush1.bf16.msra.mxu0 0
      %3909 = vmatprep.subr.bf16.mxu0 0
      %3910 = vmatpush1.bf16.msra.mxu0 0
      %3911 = vmatprep.subr.bf16.mxu0 0
      %3912 = vmatpush1.bf16.msra.mxu0 0
      %3913 = vmatprep.subr.bf16.mxu0 0
      %3914 = vmatpush1.bf16.msra.mxu0 %v3886
      %3915 = vmatprep.subr.bf16.mxu0 0
      %3916 = vmatpush1.bf16.msra.mxu0 %v3885
      %3917 = vmatprep.subr.bf16.mxu0 0
      %3918 = vmatpush2.bf16.msra.mxu0 0
      %3919 = vmatprep.subr.bf16.mxu0 0
      %3920 = vmatpush2.bf16.msra.mxu0 0
      %3921 = vmatprep.subr.bf16.mxu0 0
      %3922 = vmatpush2.bf16.msra.mxu0 0
      %3923 = vmatprep.subr.bf16.mxu0 0
      %3924 = vmatpush2.bf16.msra.mxu0 0
      %3925 = vmatprep.subr.bf16.mxu0 0
      %3926 = vmatpush2.bf16.msra.mxu0 0
      %3927 = vmatprep.subr.bf16.mxu0 0
      %3928 = vmatpush2.bf16.msra.mxu0 0
      %3929 = vmatprep.subr.bf16.mxu0 0
      %3930 = vmatpush2.bf16.msra.mxu0 0
      %3931 = vmatprep.subr.bf16.mxu0 0
      %3932 = vmatpush2.bf16.msra.mxu0 0
      %3933 = vmatprep.mubr.bf16.mxu0 0
      %3934 = vmatmul.mubr.bf16.gmra.mxu0 %v3890
      %v3935 = vpop.f32.mrf.mxu0
      %v3936 = vadd.f32 0.0, %v3935
      %v3937 = vpop.f32.mrf.mxu0
      %v3938 = vpop.f32.mrf.mxu0
      %v3939 = vadd.f32 0.0, %v3938
      %v3940 = vpop.f32.mrf.mxu0
      %3941 = vmatprep.mubr.bf16.mxu0 0
      %3942 = vmatmul.mubr.bf16.gmra.mxu0 %v3893
      %v3943 = vpop.f32.mrf.mxu0
      %v3944 = vadd.f32 0.0, %v3943
      %v3945 = vpop.f32.mrf.mxu0
      %v3946 = vpop.f32.mrf.mxu0
      %v3947 = vadd.f32 0.0, %v3946
      %v3948 = vpop.f32.mrf.mxu0
      %3949 = vmatprep.mubr.bf16.mxu0 0
      %3950 = vmatmul.mubr.bf16.gmra.mxu0 %v3896
      %v3951 = vpop.f32.mrf.mxu0
      %v3952 = vadd.f32 0.0, %v3951
      %v3953 = vpop.f32.mrf.mxu0
      %v3954 = vpop.f32.mrf.mxu0
      %v3955 = vadd.f32 0.0, %v3954
      %v3956 = vpop.f32.mrf.mxu0
      %3957 = vmatprep.mubr.bf16.mxu0 0
      %3958 = vmatmul.mubr.bf16.gmra.mxu0 %v3899
      %v3959 = vpop.f32.mrf.mxu0
      %v3960 = vadd.f32 0.0, %v3959
      %v3961 = vpop.f32.mrf.mxu0
      %v3962 = vpop.f32.mrf.mxu0
      %v3963 = vadd.f32 0.0, %v3962
      %v3964 = vpop.f32.mrf.mxu0
      %3965 = vdwg.mxu0
      %v3966 = vadd.f32 %v3835, %v3936
      %v3967 = vadd.f32 %v3836, %v3939
      %v3968 = vadd.f32 %v3837, %v3944
      %v3969 = vadd.f32 %v3838, %v3947
      %v3970 = vadd.f32 %v3839, %v3952
      %v3971 = vadd.f32 %v3840, %v3955
      %v3972 = vadd.f32 %v3841, %v3960
      %v3973 = vadd.f32 %v3842, %v3963
      %s3974 = scalar_lea.vmem %s318, 216
      %v3975 = vld [vmem:[%s3974] sm:$0xf]
      %v3976 = vld [vmem:[%s3974 + $0x8] sm:$0xf]
      %v3977 = vld [vmem:[%s3974 + $0x10] sm:$0xf]
      %v3978 = vld [vmem:[%s3974 + $0x18] sm:$0xf]
      %v3979 = vld [vmem:[%s3974 + $0x20] sm:$0xf]
      %v3980 = vld [vmem:[%s3974 + $0x28] sm:$0xf]
      %v3981 = vld [vmem:[%s3974 + $0x30] sm:$0xf]
      %v3982 = vld [vmem:[%s3974 + $0x38] sm:$0xf]
      %s3983 = scalar_lea.vmem %s2, 352
      %v3984 = vld [vmem:[%s3983] sm:$0xf]
      %v3985 = vld [vmem:[%s3983 + $0x4] sm:$0xf]
      %v3986 = vld [vmem:[%s3983 + $0x8] sm:$0xf]
      %v3987 = vld [vmem:[%s3983 + $0xc] sm:$0xf]
      %v3996 = vunpack.c.l.b16 %v3975
      %v3997 = vunpack.c.l.b16 %v3976
      %v3998 = vunpack.c.l.b16 %v3977
      %v3999 = vunpack.c.l.b16 %v3978
      %v4000 = vunpack.c.l.b16 %v3979
      %v4001 = vunpack.c.l.b16 %v3980
      %v4002 = vunpack.c.l.b16 %v3981
      %v4003 = vunpack.c.l.b16 %v3982
      %v4004 = vpack.c.b16 %v3997, %v3996
      %v4005 = vpack.c.b16 %v3999, %v3998
      %v4006 = vpack.c.b16 %v4001, %v4000
      %v4007 = vpack.c.b16 %v4003, %v4002
      %v4012 = vunpack.c.l.b16 %v3984
      %v4013 = vunpack.c.l.b16 %v3985
      %v4014 = vunpack.c.l.b16 %v3986
      %v4015 = vunpack.c.l.b16 %v3987
      %v4016 = vpack.c.b16 %v4013, %v4012
      %v4017 = vpack.c.b16 %v4015, %v4014
      %v4021 = vsel %vm388, %v4004, 0
      %v4024 = vsel %vm388, %v4005, 0
      %v4027 = vsel %vm388, %v4006, 0
      %v4030 = vsel %vm388, %v4007, 0
      %4032 = vmatprep.subr.bf16.mxu0 0
      %4033 = vmatpush1.bf16.msra.mxu0 0
      %4034 = vmatprep.subr.bf16.mxu0 0
      %4035 = vmatpush1.bf16.msra.mxu0 0
      %4036 = vmatprep.subr.bf16.mxu0 0
      %4037 = vmatpush1.bf16.msra.mxu0 0
      %4038 = vmatprep.subr.bf16.mxu0 0
      %4039 = vmatpush1.bf16.msra.mxu0 0
      %4040 = vmatprep.subr.bf16.mxu0 0
      %4041 = vmatpush1.bf16.msra.mxu0 0
      %4042 = vmatprep.subr.bf16.mxu0 0
      %4043 = vmatpush1.bf16.msra.mxu0 0
      %4044 = vmatprep.subr.bf16.mxu0 0
      %4045 = vmatpush1.bf16.msra.mxu0 %v4017
      %4046 = vmatprep.subr.bf16.mxu0 0
      %4047 = vmatpush1.bf16.msra.mxu0 %v4016
      %4048 = vmatprep.subr.bf16.mxu0 0
      %4049 = vmatpush2.bf16.msra.mxu0 0
      %4050 = vmatprep.subr.bf16.mxu0 0
      %4051 = vmatpush2.bf16.msra.mxu0 0
      %4052 = vmatprep.subr.bf16.mxu0 0
      %4053 = vmatpush2.bf16.msra.mxu0 0
      %4054 = vmatprep.subr.bf16.mxu0 0
      %4055 = vmatpush2.bf16.msra.mxu0 0
      %4056 = vmatprep.subr.bf16.mxu0 0
      %4057 = vmatpush2.bf16.msra.mxu0 0
      %4058 = vmatprep.subr.bf16.mxu0 0
      %4059 = vmatpush2.bf16.msra.mxu0 0
      %4060 = vmatprep.subr.bf16.mxu0 0
      %4061 = vmatpush2.bf16.msra.mxu0 0
      %4062 = vmatprep.subr.bf16.mxu0 0
      %4063 = vmatpush2.bf16.msra.mxu0 0
      %4064 = vmatprep.mubr.bf16.mxu0 0
      %4065 = vmatmul.mubr.bf16.gmra.mxu0 %v4021
      %v4066 = vpop.f32.mrf.mxu0
      %v4067 = vadd.f32 0.0, %v4066
      %v4068 = vpop.f32.mrf.mxu0
      %v4069 = vpop.f32.mrf.mxu0
      %v4070 = vadd.f32 0.0, %v4069
      %v4071 = vpop.f32.mrf.mxu0
      %4072 = vmatprep.mubr.bf16.mxu0 0
      %4073 = vmatmul.mubr.bf16.gmra.mxu0 %v4024
      %v4074 = vpop.f32.mrf.mxu0
      %v4075 = vadd.f32 0.0, %v4074
      %v4076 = vpop.f32.mrf.mxu0
      %v4077 = vpop.f32.mrf.mxu0
      %v4078 = vadd.f32 0.0, %v4077
      %v4079 = vpop.f32.mrf.mxu0
      %4080 = vmatprep.mubr.bf16.mxu0 0
      %4081 = vmatmul.mubr.bf16.gmra.mxu0 %v4027
      %v4082 = vpop.f32.mrf.mxu0
      %v4083 = vadd.f32 0.0, %v4082
      %v4084 = vpop.f32.mrf.mxu0
      %v4085 = vpop.f32.mrf.mxu0
      %v4086 = vadd.f32 0.0, %v4085
      %v4087 = vpop.f32.mrf.mxu0
      %4088 = vmatprep.mubr.bf16.mxu0 0
      %4089 = vmatmul.mubr.bf16.gmra.mxu0 %v4030
      %v4090 = vpop.f32.mrf.mxu0
      %v4091 = vadd.f32 0.0, %v4090
      %v4092 = vpop.f32.mrf.mxu0
      %v4093 = vpop.f32.mrf.mxu0
      %v4094 = vadd.f32 0.0, %v4093
      %v4095 = vpop.f32.mrf.mxu0
      %4096 = vdwg.mxu0
      %v4097 = vadd.f32 %v3966, %v4067
      %v4098 = vadd.f32 %v3967, %v4070
      %v4099 = vadd.f32 %v3968, %v4075
      %v4100 = vadd.f32 %v3969, %v4078
      %v4101 = vadd.f32 %v3970, %v4083
      %v4102 = vadd.f32 %v3971, %v4086
      %v4103 = vadd.f32 %v3972, %v4091
      %v4104 = vadd.f32 %v3973, %v4094
      %v4105 = vld [vmem:[%s3843] sm:$0xf]
      %v4106 = vld [vmem:[%s3843 + $0x4] sm:$0x1]
      %v4107 = vld [vmem:[%s3843 + $0x8] sm:$0xf]
      %v4108 = vld [vmem:[%s3843 + $0xc] sm:$0x1]
      %v4109 = vld [vmem:[%s3843 + $0x10] sm:$0xf]
      %v4110 = vld [vmem:[%s3843 + $0x14] sm:$0x1]
      %v4111 = vld [vmem:[%s3843 + $0x18] sm:$0xf]
      %v4112 = vld [vmem:[%s3843 + $0x1c] sm:$0x1]
      %v4113 = vld [vmem:[%s3843 + $0x20] sm:$0xf]
      %v4114 = vld [vmem:[%s3843 + $0x24] sm:$0x1]
      %v4115 = vld [vmem:[%s3843 + $0x28] sm:$0xf]
      %v4116 = vld [vmem:[%s3843 + $0x2c] sm:$0x1]
      %v4117 = vld [vmem:[%s3843 + $0x30] sm:$0xf]
      %v4118 = vld [vmem:[%s3843 + $0x34] sm:$0x1]
      %v4119 = vld [vmem:[%s3843 + $0x38] sm:$0xf]
      %v4120 = vld [vmem:[%s3843 + $0x3c] sm:$0x1]
      %v4122 = vshrl.u32 %v4105, 16
      %v4124 = vrot.slane %v4122, 4
      %v4125 = vshll.u32 %v4105, 16
      %v4127 = vrot.slane %v4125, 5
      %v4128 = vor.u32 %v4124, %v4127
      %v4129 = vrot.slane %v4128, 4
      %v4131 = vshll.u32 %v4106, 16
      %v4133 = vrot.slane %v4131, 5
      %v4134 = vsel %vm593, %v4129, %v4133
      %v4136 = vshrl.u32 %v4107, 16
      %v4138 = vrot.slane %v4136, 4
      %v4139 = vshll.u32 %v4107, 16
      %v4141 = vrot.slane %v4139, 5
      %v4142 = vor.u32 %v4138, %v4141
      %v4143 = vrot.slane %v4142, 4
      %v4145 = vshll.u32 %v4108, 16
      %v4147 = vrot.slane %v4145, 5
      %v4148 = vsel %vm593, %v4143, %v4147
      %v4150 = vshrl.u32 %v4109, 16
      %v4152 = vrot.slane %v4150, 4
      %v4153 = vshll.u32 %v4109, 16
      %v4155 = vrot.slane %v4153, 5
      %v4156 = vor.u32 %v4152, %v4155
      %v4157 = vrot.slane %v4156, 4
      %v4159 = vshll.u32 %v4110, 16
      %v4161 = vrot.slane %v4159, 5
      %v4162 = vsel %vm593, %v4157, %v4161
      %v4164 = vshrl.u32 %v4111, 16
      %v4166 = vrot.slane %v4164, 4
      %v4167 = vshll.u32 %v4111, 16
      %v4169 = vrot.slane %v4167, 5
      %v4170 = vor.u32 %v4166, %v4169
      %v4171 = vrot.slane %v4170, 4
      %v4173 = vshll.u32 %v4112, 16
      %v4175 = vrot.slane %v4173, 5
      %v4176 = vsel %vm593, %v4171, %v4175
      %v4178 = vshrl.u32 %v4113, 16
      %v4180 = vrot.slane %v4178, 4
      %v4181 = vshll.u32 %v4113, 16
      %v4183 = vrot.slane %v4181, 5
      %v4184 = vor.u32 %v4180, %v4183
      %v4185 = vrot.slane %v4184, 4
      %v4187 = vshll.u32 %v4114, 16
      %v4189 = vrot.slane %v4187, 5
      %v4190 = vsel %vm593, %v4185, %v4189
      %v4192 = vshrl.u32 %v4115, 16
      %v4194 = vrot.slane %v4192, 4
      %v4195 = vshll.u32 %v4115, 16
      %v4197 = vrot.slane %v4195, 5
      %v4198 = vor.u32 %v4194, %v4197
      %v4199 = vrot.slane %v4198, 4
      %v4201 = vshll.u32 %v4116, 16
      %v4203 = vrot.slane %v4201, 5
      %v4204 = vsel %vm593, %v4199, %v4203
      %v4206 = vshrl.u32 %v4117, 16
      %v4208 = vrot.slane %v4206, 4
      %v4209 = vshll.u32 %v4117, 16
      %v4211 = vrot.slane %v4209, 5
      %v4212 = vor.u32 %v4208, %v4211
      %v4213 = vrot.slane %v4212, 4
      %v4215 = vshll.u32 %v4118, 16
      %v4217 = vrot.slane %v4215, 5
      %v4218 = vsel %vm593, %v4213, %v4217
      %v4220 = vshrl.u32 %v4119, 16
      %v4222 = vrot.slane %v4220, 4
      %v4223 = vshll.u32 %v4119, 16
      %v4225 = vrot.slane %v4223, 5
      %v4226 = vor.u32 %v4222, %v4225
      %v4227 = vrot.slane %v4226, 4
      %v4229 = vshll.u32 %v4120, 16
      %v4231 = vrot.slane %v4229, 5
      %v4232 = vsel %vm593, %v4227, %v4231
      %s4233 = scalar_lea.vmem %s2, 368
      %v4234 = vld [vmem:[%s4233] sm:$0xf]
      %v4235 = vld [vmem:[%s4233 + $0x4] sm:$0xf]
      %v4236 = vld [vmem:[%s4233 + $0x8] sm:$0xf]
      %v4237 = vld [vmem:[%s4233 + $0xc] sm:$0xf]
      %v4238 = vunpack.c.l.b16 %v4134
      %v4239 = vunpack.c.l.b16 %v4148
      %v4240 = vunpack.c.l.b16 %v4162
      %v4241 = vunpack.c.l.b16 %v4176
      %v4242 = vunpack.c.l.b16 %v4190
      %v4243 = vunpack.c.l.b16 %v4204
      %v4244 = vunpack.c.l.b16 %v4218
      %v4245 = vunpack.c.l.b16 %v4232
      %v4246 = vpack.c.b16 %v4239, %v4238
      %v4247 = vpack.c.b16 %v4241, %v4240
      %v4248 = vpack.c.b16 %v4243, %v4242
      %v4249 = vpack.c.b16 %v4245, %v4244
      %v4254 = vunpack.c.l.b16 %v4234
      %v4255 = vunpack.c.l.b16 %v4235
      %v4256 = vunpack.c.l.b16 %v4236
      %v4257 = vunpack.c.l.b16 %v4237
      %v4258 = vpack.c.b16 %v4255, %v4254
      %v4259 = vpack.c.b16 %v4257, %v4256
      %v4263 = vsel %vm388, %v4246, 0
      %v4266 = vsel %vm388, %v4247, 0
      %v4269 = vsel %vm388, %v4248, 0
      %v4272 = vsel %vm388, %v4249, 0
      %4274 = vmatprep.subr.bf16.mxu0 0
      %4275 = vmatpush1.bf16.msra.mxu0 0
      %4276 = vmatprep.subr.bf16.mxu0 0
      %4277 = vmatpush1.bf16.msra.mxu0 0
      %4278 = vmatprep.subr.bf16.mxu0 0
      %4279 = vmatpush1.bf16.msra.mxu0 0
      %4280 = vmatprep.subr.bf16.mxu0 0
      %4281 = vmatpush1.bf16.msra.mxu0 0
      %4282 = vmatprep.subr.bf16.mxu0 0
      %4283 = vmatpush1.bf16.msra.mxu0 0
      %4284 = vmatprep.subr.bf16.mxu0 0
      %4285 = vmatpush1.bf16.msra.mxu0 0
      %4286 = vmatprep.subr.bf16.mxu0 0
      %4287 = vmatpush1.bf16.msra.mxu0 %v4259
      %4288 = vmatprep.subr.bf16.mxu0 0
      %4289 = vmatpush1.bf16.msra.mxu0 %v4258
      %4290 = vmatprep.subr.bf16.mxu0 0
      %4291 = vmatpush2.bf16.msra.mxu0 0
      %4292 = vmatprep.subr.bf16.mxu0 0
      %4293 = vmatpush2.bf16.msra.mxu0 0
      %4294 = vmatprep.subr.bf16.mxu0 0
      %4295 = vmatpush2.bf16.msra.mxu0 0
      %4296 = vmatprep.subr.bf16.mxu0 0
      %4297 = vmatpush2.bf16.msra.mxu0 0
      %4298 = vmatprep.subr.bf16.mxu0 0
      %4299 = vmatpush2.bf16.msra.mxu0 0
      %4300 = vmatprep.subr.bf16.mxu0 0
      %4301 = vmatpush2.bf16.msra.mxu0 0
      %4302 = vmatprep.subr.bf16.mxu0 0
      %4303 = vmatpush2.bf16.msra.mxu0 0
      %4304 = vmatprep.subr.bf16.mxu0 0
      %4305 = vmatpush2.bf16.msra.mxu0 0
      %4306 = vmatprep.mubr.bf16.mxu0 0
      %4307 = vmatmul.mubr.bf16.gmra.mxu0 %v4263
      %v4308 = vpop.f32.mrf.mxu0
      %v4309 = vadd.f32 0.0, %v4308
      %v4310 = vpop.f32.mrf.mxu0
      %v4311 = vpop.f32.mrf.mxu0
      %v4312 = vadd.f32 0.0, %v4311
      %v4313 = vpop.f32.mrf.mxu0
      %4314 = vmatprep.mubr.bf16.mxu0 0
      %4315 = vmatmul.mubr.bf16.gmra.mxu0 %v4266
      %v4316 = vpop.f32.mrf.mxu0
      %v4317 = vadd.f32 0.0, %v4316
      %v4318 = vpop.f32.mrf.mxu0
      %v4319 = vpop.f32.mrf.mxu0
      %v4320 = vadd.f32 0.0, %v4319
      %v4321 = vpop.f32.mrf.mxu0
      %4322 = vmatprep.mubr.bf16.mxu0 0
      %4323 = vmatmul.mubr.bf16.gmra.mxu0 %v4269
      %v4324 = vpop.f32.mrf.mxu0
      %v4325 = vadd.f32 0.0, %v4324
      %v4326 = vpop.f32.mrf.mxu0
      %v4327 = vpop.f32.mrf.mxu0
      %v4328 = vadd.f32 0.0, %v4327
      %v4329 = vpop.f32.mrf.mxu0
      %4330 = vmatprep.mubr.bf16.mxu0 0
      %4331 = vmatmul.mubr.bf16.gmra.mxu0 %v4272
      %v4332 = vpop.f32.mrf.mxu0
      %v4333 = vadd.f32 0.0, %v4332
      %v4334 = vpop.f32.mrf.mxu0
      %v4335 = vpop.f32.mrf.mxu0
      %v4336 = vadd.f32 0.0, %v4335
      %v4337 = vpop.f32.mrf.mxu0
      %4338 = vdwg.mxu0
      %v4339 = vadd.f32 %v4097, %v4309
      %v4340 = vadd.f32 %v4098, %v4312
      %v4341 = vadd.f32 %v4099, %v4317
      %v4342 = vadd.f32 %v4100, %v4320
      %v4343 = vadd.f32 %v4101, %v4325
      %v4344 = vadd.f32 %v4102, %v4328
      %v4345 = vadd.f32 %v4103, %v4333
      %v4346 = vadd.f32 %v4104, %v4336
      %s4347 = scalar_lea.vmem %s318, 8
      %v4348 = vld [vmem:[%s4347] sm:$0xf]
      %v4349 = vld [vmem:[%s4347 + $0x8] sm:$0xf]
      %v4350 = vld [vmem:[%s4347 + $0x10] sm:$0xf]
      %v4351 = vld [vmem:[%s4347 + $0x18] sm:$0xf]
      %v4352 = vld [vmem:[%s4347 + $0x20] sm:$0xf]
      %v4353 = vld [vmem:[%s4347 + $0x28] sm:$0xf]
      %v4354 = vld [vmem:[%s4347 + $0x30] sm:$0xf]
      %v4355 = vld [vmem:[%s4347 + $0x38] sm:$0xf]
      %s4356 = scalar_lea.vmem %s2, 384
      %v4357 = vld [vmem:[%s4356] sm:$0xf]
      %v4358 = vld [vmem:[%s4356 + $0x4] sm:$0xf]
      %v4359 = vld [vmem:[%s4356 + $0x8] sm:$0xf]
      %v4360 = vld [vmem:[%s4356 + $0xc] sm:$0xf]
      %v4369 = vunpack.c.l.b16 %v4348
      %v4370 = vunpack.c.l.b16 %v4349
      %v4371 = vunpack.c.l.b16 %v4350
      %v4372 = vunpack.c.l.b16 %v4351
      %v4373 = vunpack.c.l.b16 %v4352
      %v4374 = vunpack.c.l.b16 %v4353
      %v4375 = vunpack.c.l.b16 %v4354
      %v4376 = vunpack.c.l.b16 %v4355
      %v4377 = vpack.c.b16 %v4370, %v4369
      %v4378 = vpack.c.b16 %v4372, %v4371
      %v4379 = vpack.c.b16 %v4374, %v4373
      %v4380 = vpack.c.b16 %v4376, %v4375
      %v4385 = vunpack.c.l.b16 %v4357
      %v4386 = vunpack.c.l.b16 %v4358
      %v4387 = vunpack.c.l.b16 %v4359
      %v4388 = vunpack.c.l.b16 %v4360
      %v4389 = vpack.c.b16 %v4386, %v4385
      %v4390 = vpack.c.b16 %v4388, %v4387
      %v4394 = vsel %vm388, %v4377, 0
      %v4397 = vsel %vm388, %v4378, 0
      %v4400 = vsel %vm388, %v4379, 0
      %v4403 = vsel %vm388, %v4380, 0
      %4405 = vmatprep.subr.bf16.mxu0 0
      %4406 = vmatpush1.bf16.msra.mxu0 0
      %4407 = vmatprep.subr.bf16.mxu0 0
      %4408 = vmatpush1.bf16.msra.mxu0 0
      %4409 = vmatprep.subr.bf16.mxu0 0
      %4410 = vmatpush1.bf16.msra.mxu0 0
      %4411 = vmatprep.subr.bf16.mxu0 0
      %4412 = vmatpush1.bf16.msra.mxu0 0
      %4413 = vmatprep.subr.bf16.mxu0 0
      %4414 = vmatpush1.bf16.msra.mxu0 0
      %4415 = vmatprep.subr.bf16.mxu0 0
      %4416 = vmatpush1.bf16.msra.mxu0 0
      %4417 = vmatprep.subr.bf16.mxu0 0
      %4418 = vmatpush1.bf16.msra.mxu0 %v4390
      %4419 = vmatprep.subr.bf16.mxu0 0
      %4420 = vmatpush1.bf16.msra.mxu0 %v4389
      %4421 = vmatprep.subr.bf16.mxu0 0
      %4422 = vmatpush2.bf16.msra.mxu0 0
      %4423 = vmatprep.subr.bf16.mxu0 0
      %4424 = vmatpush2.bf16.msra.mxu0 0
      %4425 = vmatprep.subr.bf16.mxu0 0
      %4426 = vmatpush2.bf16.msra.mxu0 0
      %4427 = vmatprep.subr.bf16.mxu0 0
      %4428 = vmatpush2.bf16.msra.mxu0 0
      %4429 = vmatprep.subr.bf16.mxu0 0
      %4430 = vmatpush2.bf16.msra.mxu0 0
      %4431 = vmatprep.subr.bf16.mxu0 0
      %4432 = vmatpush2.bf16.msra.mxu0 0
      %4433 = vmatprep.subr.bf16.mxu0 0
      %4434 = vmatpush2.bf16.msra.mxu0 0
      %4435 = vmatprep.subr.bf16.mxu0 0
      %4436 = vmatpush2.bf16.msra.mxu0 0
      %4437 = vmatprep.mubr.bf16.mxu0 0
      %4438 = vmatmul.mubr.bf16.gmra.mxu0 %v4394
      %v4439 = vpop.f32.mrf.mxu0
      %v4440 = vadd.f32 0.0, %v4439
      %v4441 = vpop.f32.mrf.mxu0
      %v4442 = vpop.f32.mrf.mxu0
      %v4443 = vadd.f32 0.0, %v4442
      %v4444 = vpop.f32.mrf.mxu0
      %4445 = vmatprep.mubr.bf16.mxu0 0
      %4446 = vmatmul.mubr.bf16.gmra.mxu0 %v4397
      %v4447 = vpop.f32.mrf.mxu0
      %v4448 = vadd.f32 0.0, %v4447
      %v4449 = vpop.f32.mrf.mxu0
      %v4450 = vpop.f32.mrf.mxu0
      %v4451 = vadd.f32 0.0, %v4450
      %v4452 = vpop.f32.mrf.mxu0
      %4453 = vmatprep.mubr.bf16.mxu0 0
      %4454 = vmatmul.mubr.bf16.gmra.mxu0 %v4400
      %v4455 = vpop.f32.mrf.mxu0
      %v4456 = vadd.f32 0.0, %v4455
      %v4457 = vpop.f32.mrf.mxu0
      %v4458 = vpop.f32.mrf.mxu0
      %v4459 = vadd.f32 0.0, %v4458
      %v4460 = vpop.f32.mrf.mxu0
      %4461 = vmatprep.mubr.bf16.mxu0 0
      %4462 = vmatmul.mubr.bf16.gmra.mxu0 %v4403
      %v4463 = vpop.f32.mrf.mxu0
      %v4464 = vadd.f32 0.0, %v4463
      %v4465 = vpop.f32.mrf.mxu0
      %v4466 = vpop.f32.mrf.mxu0
      %v4467 = vadd.f32 0.0, %v4466
      %v4468 = vpop.f32.mrf.mxu0
      %4469 = vdwg.mxu0
      %v4470 = vadd.f32 %v4339, %v4440
      %v4471 = vadd.f32 %v4340, %v4443
      %v4472 = vadd.f32 %v4341, %v4448
      %v4473 = vadd.f32 %v4342, %v4451
      %v4474 = vadd.f32 %v4343, %v4456
      %v4475 = vadd.f32 %v4344, %v4459
      %v4476 = vadd.f32 %v4345, %v4464
      %v4477 = vadd.f32 %v4346, %v4467
      %s4478 = scalar_lea.vmem %s318, 80
      %v4479 = vld [vmem:[%s4478] sm:$0xf]
      %v4480 = vld [vmem:[%s4478 + $0x8] sm:$0xf]
      %v4481 = vld [vmem:[%s4478 + $0x10] sm:$0xf]
      %v4482 = vld [vmem:[%s4478 + $0x18] sm:$0xf]
      %v4483 = vld [vmem:[%s4478 + $0x20] sm:$0xf]
      %v4484 = vld [vmem:[%s4478 + $0x28] sm:$0xf]
      %v4485 = vld [vmem:[%s4478 + $0x30] sm:$0xf]
      %v4486 = vld [vmem:[%s4478 + $0x38] sm:$0xf]
      %s4487 = scalar_lea.vmem %s2, 400
      %v4488 = vld [vmem:[%s4487] sm:$0xf]
      %v4489 = vld [vmem:[%s4487 + $0x4] sm:$0xf]
      %v4490 = vld [vmem:[%s4487 + $0x8] sm:$0xf]
      %v4491 = vld [vmem:[%s4487 + $0xc] sm:$0xf]
      %v4500 = vunpack.c.l.b16 %v4479
      %v4501 = vunpack.c.l.b16 %v4480
      %v4502 = vunpack.c.l.b16 %v4481
      %v4503 = vunpack.c.l.b16 %v4482
      %v4504 = vunpack.c.l.b16 %v4483
      %v4505 = vunpack.c.l.b16 %v4484
      %v4506 = vunpack.c.l.b16 %v4485
      %v4507 = vunpack.c.l.b16 %v4486
      %v4508 = vpack.c.b16 %v4501, %v4500
      %v4509 = vpack.c.b16 %v4503, %v4502
      %v4510 = vpack.c.b16 %v4505, %v4504
      %v4511 = vpack.c.b16 %v4507, %v4506
      %v4516 = vunpack.c.l.b16 %v4488
      %v4517 = vunpack.c.l.b16 %v4489
      %v4518 = vunpack.c.l.b16 %v4490
      %v4519 = vunpack.c.l.b16 %v4491
      %v4520 = vpack.c.b16 %v4517, %v4516
      %v4521 = vpack.c.b16 %v4519, %v4518
      %v4525 = vsel %vm388, %v4508, 0
      %v4528 = vsel %vm388, %v4509, 0
      %v4531 = vsel %vm388, %v4510, 0
      %v4534 = vsel %vm388, %v4511, 0
      %4536 = vmatprep.subr.bf16.mxu0 0
      %4537 = vmatpush1.bf16.msra.mxu0 0
      %4538 = vmatprep.subr.bf16.mxu0 0
      %4539 = vmatpush1.bf16.msra.mxu0 0
      %4540 = vmatprep.subr.bf16.mxu0 0
      %4541 = vmatpush1.bf16.msra.mxu0 0
      %4542 = vmatprep.subr.bf16.mxu0 0
      %4543 = vmatpush1.bf16.msra.mxu0 0
      %4544 = vmatprep.subr.bf16.mxu0 0
      %4545 = vmatpush1.bf16.msra.mxu0 0
      %4546 = vmatprep.subr.bf16.mxu0 0
      %4547 = vmatpush1.bf16.msra.mxu0 0
      %4548 = vmatprep.subr.bf16.mxu0 0
      %4549 = vmatpush1.bf16.msra.mxu0 %v4521
      %4550 = vmatprep.subr.bf16.mxu0 0
      %4551 = vmatpush1.bf16.msra.mxu0 %v4520
      %4552 = vmatprep.subr.bf16.mxu0 0
      %4553 = vmatpush2.bf16.msra.mxu0 0
      %4554 = vmatprep.subr.bf16.mxu0 0
      %4555 = vmatpush2.bf16.msra.mxu0 0
      %4556 = vmatprep.subr.bf16.mxu0 0
      %4557 = vmatpush2.bf16.msra.mxu0 0
      %4558 = vmatprep.subr.bf16.mxu0 0
      %4559 = vmatpush2.bf16.msra.mxu0 0
      %4560 = vmatprep.subr.bf16.mxu0 0
      %4561 = vmatpush2.bf16.msra.mxu0 0
      %4562 = vmatprep.subr.bf16.mxu0 0
      %4563 = vmatpush2.bf16.msra.mxu0 0
      %4564 = vmatprep.subr.bf16.mxu0 0
      %4565 = vmatpush2.bf16.msra.mxu0 0
      %4566 = vmatprep.subr.bf16.mxu0 0
      %4567 = vmatpush2.bf16.msra.mxu0 0
      %4568 = vmatprep.mubr.bf16.mxu0 0
      %4569 = vmatmul.mubr.bf16.gmra.mxu0 %v4525
      %v4570 = vpop.f32.mrf.mxu0
      %v4571 = vadd.f32 0.0, %v4570
      %v4572 = vpop.f32.mrf.mxu0
      %v4573 = vpop.f32.mrf.mxu0
      %v4574 = vadd.f32 0.0, %v4573
      %v4575 = vpop.f32.mrf.mxu0
      %4576 = vmatprep.mubr.bf16.mxu0 0
      %4577 = vmatmul.mubr.bf16.gmra.mxu0 %v4528
      %v4578 = vpop.f32.mrf.mxu0
      %v4579 = vadd.f32 0.0, %v4578
      %v4580 = vpop.f32.mrf.mxu0
      %v4581 = vpop.f32.mrf.mxu0
      %v4582 = vadd.f32 0.0, %v4581
      %v4583 = vpop.f32.mrf.mxu0
      %4584 = vmatprep.mubr.bf16.mxu0 0
      %4585 = vmatmul.mubr.bf16.gmra.mxu0 %v4531
      %v4586 = vpop.f32.mrf.mxu0
      %v4587 = vadd.f32 0.0, %v4586
      %v4588 = vpop.f32.mrf.mxu0
      %v4589 = vpop.f32.mrf.mxu0
      %v4590 = vadd.f32 0.0, %v4589
      %v4591 = vpop.f32.mrf.mxu0
      %4592 = vmatprep.mubr.bf16.mxu0 0
      %4593 = vmatmul.mubr.bf16.gmra.mxu0 %v4534
      %v4594 = vpop.f32.mrf.mxu0
      %v4595 = vadd.f32 0.0, %v4594
      %v4596 = vpop.f32.mrf.mxu0
      %v4597 = vpop.f32.mrf.mxu0
      %v4598 = vadd.f32 0.0, %v4597
      %v4599 = vpop.f32.mrf.mxu0
      %4600 = vdwg.mxu0
      %v4601 = vadd.f32 %v4470, %v4571
      %v4602 = vadd.f32 %v4471, %v4574
      %v4603 = vadd.f32 %v4472, %v4579
      %v4604 = vadd.f32 %v4473, %v4582
      %v4605 = vadd.f32 %v4474, %v4587
      %v4606 = vadd.f32 %v4475, %v4590
      %v4607 = vadd.f32 %v4476, %v4595
      %v4608 = vadd.f32 %v4477, %v4598
      %v4609 = vld [vmem:[%s4347] sm:$0xf]
      %v4610 = vld [vmem:[%s4347 + $0x4] sm:$0x1]
      %v4611 = vld [vmem:[%s4347 + $0x8] sm:$0xf]
      %v4612 = vld [vmem:[%s4347 + $0xc] sm:$0x1]
      %v4613 = vld [vmem:[%s4347 + $0x10] sm:$0xf]
      %v4614 = vld [vmem:[%s4347 + $0x14] sm:$0x1]
      %v4615 = vld [vmem:[%s4347 + $0x18] sm:$0xf]
      %v4616 = vld [vmem:[%s4347 + $0x1c] sm:$0x1]
      %v4617 = vld [vmem:[%s4347 + $0x20] sm:$0xf]
      %v4618 = vld [vmem:[%s4347 + $0x24] sm:$0x1]
      %v4619 = vld [vmem:[%s4347 + $0x28] sm:$0xf]
      %v4620 = vld [vmem:[%s4347 + $0x2c] sm:$0x1]
      %v4621 = vld [vmem:[%s4347 + $0x30] sm:$0xf]
      %v4622 = vld [vmem:[%s4347 + $0x34] sm:$0x1]
      %v4623 = vld [vmem:[%s4347 + $0x38] sm:$0xf]
      %v4624 = vld [vmem:[%s4347 + $0x3c] sm:$0x1]
      %v4626 = vshrl.u32 %v4609, 16
      %v4628 = vrot.slane %v4626, 4
      %v4629 = vshll.u32 %v4609, 16
      %v4631 = vrot.slane %v4629, 5
      %v4632 = vor.u32 %v4628, %v4631
      %v4633 = vrot.slane %v4632, 4
      %v4635 = vshll.u32 %v4610, 16
      %v4637 = vrot.slane %v4635, 5
      %v4638 = vsel %vm593, %v4633, %v4637
      %v4640 = vshrl.u32 %v4611, 16
      %v4642 = vrot.slane %v4640, 4
      %v4643 = vshll.u32 %v4611, 16
      %v4645 = vrot.slane %v4643, 5
      %v4646 = vor.u32 %v4642, %v4645
      %v4647 = vrot.slane %v4646, 4
      %v4649 = vshll.u32 %v4612, 16
      %v4651 = vrot.slane %v4649, 5
      %v4652 = vsel %vm593, %v4647, %v4651
      %v4654 = vshrl.u32 %v4613, 16
      %v4656 = vrot.slane %v4654, 4
      %v4657 = vshll.u32 %v4613, 16
      %v4659 = vrot.slane %v4657, 5
      %v4660 = vor.u32 %v4656, %v4659
      %v4661 = vrot.slane %v4660, 4
      %v4663 = vshll.u32 %v4614, 16
      %v4665 = vrot.slane %v4663, 5
      %v4666 = vsel %vm593, %v4661, %v4665
      %v4668 = vshrl.u32 %v4615, 16
      %v4670 = vrot.slane %v4668, 4
      %v4671 = vshll.u32 %v4615, 16
      %v4673 = vrot.slane %v4671, 5
      %v4674 = vor.u32 %v4670, %v4673
      %v4675 = vrot.slane %v4674, 4
      %v4677 = vshll.u32 %v4616, 16
      %v4679 = vrot.slane %v4677, 5
      %v4680 = vsel %vm593, %v4675, %v4679
      %v4682 = vshrl.u32 %v4617, 16
      %v4684 = vrot.slane %v4682, 4
      %v4685 = vshll.u32 %v4617, 16
      %v4687 = vrot.slane %v4685, 5
      %v4688 = vor.u32 %v4684, %v4687
      %v4689 = vrot.slane %v4688, 4
      %v4691 = vshll.u32 %v4618, 16
      %v4693 = vrot.slane %v4691, 5
      %v4694 = vsel %vm593, %v4689, %v4693
      %v4696 = vshrl.u32 %v4619, 16
      %v4698 = vrot.slane %v4696, 4
      %v4699 = vshll.u32 %v4619, 16
      %v4701 = vrot.slane %v4699, 5
      %v4702 = vor.u32 %v4698, %v4701
      %v4703 = vrot.slane %v4702, 4
      %v4705 = vshll.u32 %v4620, 16
      %v4707 = vrot.slane %v4705, 5
      %v4708 = vsel %vm593, %v4703, %v4707
      %v4710 = vshrl.u32 %v4621, 16
      %v4712 = vrot.slane %v4710, 4
      %v4713 = vshll.u32 %v4621, 16
      %v4715 = vrot.slane %v4713, 5
      %v4716 = vor.u32 %v4712, %v4715
      %v4717 = vrot.slane %v4716, 4
      %v4719 = vshll.u32 %v4622, 16
      %v4721 = vrot.slane %v4719, 5
      %v4722 = vsel %vm593, %v4717, %v4721
      %v4724 = vshrl.u32 %v4623, 16
      %v4726 = vrot.slane %v4724, 4
      %v4727 = vshll.u32 %v4623, 16
      %v4729 = vrot.slane %v4727, 5
      %v4730 = vor.u32 %v4726, %v4729
      %v4731 = vrot.slane %v4730, 4
      %v4733 = vshll.u32 %v4624, 16
      %v4735 = vrot.slane %v4733, 5
      %v4736 = vsel %vm593, %v4731, %v4735
      %s4737 = scalar_lea.vmem %s2, 416
      %v4738 = vld [vmem:[%s4737] sm:$0xf]
      %v4739 = vld [vmem:[%s4737 + $0x4] sm:$0xf]
      %v4740 = vld [vmem:[%s4737 + $0x8] sm:$0xf]
      %v4741 = vld [vmem:[%s4737 + $0xc] sm:$0xf]
      %v4742 = vunpack.c.l.b16 %v4638
      %v4743 = vunpack.c.l.b16 %v4652
      %v4744 = vunpack.c.l.b16 %v4666
      %v4745 = vunpack.c.l.b16 %v4680
      %v4746 = vunpack.c.l.b16 %v4694
      %v4747 = vunpack.c.l.b16 %v4708
      %v4748 = vunpack.c.l.b16 %v4722
      %v4749 = vunpack.c.l.b16 %v4736
      %v4750 = vpack.c.b16 %v4743, %v4742
      %v4751 = vpack.c.b16 %v4745, %v4744
      %v4752 = vpack.c.b16 %v4747, %v4746
      %v4753 = vpack.c.b16 %v4749, %v4748
      %v4758 = vunpack.c.l.b16 %v4738
      %v4759 = vunpack.c.l.b16 %v4739
      %v4760 = vunpack.c.l.b16 %v4740
      %v4761 = vunpack.c.l.b16 %v4741
      %v4762 = vpack.c.b16 %v4759, %v4758
      %v4763 = vpack.c.b16 %v4761, %v4760
      %v4767 = vsel %vm388, %v4750, 0
      %v4770 = vsel %vm388, %v4751, 0
      %v4773 = vsel %vm388, %v4752, 0
      %v4776 = vsel %vm388, %v4753, 0
      %4778 = vmatprep.subr.bf16.mxu0 0
      %4779 = vmatpush1.bf16.msra.mxu0 0
      %4780 = vmatprep.subr.bf16.mxu0 0
      %4781 = vmatpush1.bf16.msra.mxu0 0
      %4782 = vmatprep.subr.bf16.mxu0 0
      %4783 = vmatpush1.bf16.msra.mxu0 0
      %4784 = vmatprep.subr.bf16.mxu0 0
      %4785 = vmatpush1.bf16.msra.mxu0 0
      %4786 = vmatprep.subr.bf16.mxu0 0
      %4787 = vmatpush1.bf16.msra.mxu0 0
      %4788 = vmatprep.subr.bf16.mxu0 0
      %4789 = vmatpush1.bf16.msra.mxu0 0
      %4790 = vmatprep.subr.bf16.mxu0 0
      %4791 = vmatpush1.bf16.msra.mxu0 %v4763
      %4792 = vmatprep.subr.bf16.mxu0 0
      %4793 = vmatpush1.bf16.msra.mxu0 %v4762
      %4794 = vmatprep.subr.bf16.mxu0 0
      %4795 = vmatpush2.bf16.msra.mxu0 0
      %4796 = vmatprep.subr.bf16.mxu0 0
      %4797 = vmatpush2.bf16.msra.mxu0 0
      %4798 = vmatprep.subr.bf16.mxu0 0
      %4799 = vmatpush2.bf16.msra.mxu0 0
      %4800 = vmatprep.subr.bf16.mxu0 0
      %4801 = vmatpush2.bf16.msra.mxu0 0
      %4802 = vmatprep.subr.bf16.mxu0 0
      %4803 = vmatpush2.bf16.msra.mxu0 0
      %4804 = vmatprep.subr.bf16.mxu0 0
      %4805 = vmatpush2.bf16.msra.mxu0 0
      %4806 = vmatprep.subr.bf16.mxu0 0
      %4807 = vmatpush2.bf16.msra.mxu0 0
      %4808 = vmatprep.subr.bf16.mxu0 0
      %4809 = vmatpush2.bf16.msra.mxu0 0
      %4810 = vmatprep.mubr.bf16.mxu0 0
      %4811 = vmatmul.mubr.bf16.gmra.mxu0 %v4767
      %v4812 = vpop.f32.mrf.mxu0
      %v4813 = vadd.f32 0.0, %v4812
      %v4814 = vpop.f32.mrf.mxu0
      %v4815 = vpop.f32.mrf.mxu0
      %v4816 = vadd.f32 0.0, %v4815
      %v4817 = vpop.f32.mrf.mxu0
      %4818 = vmatprep.mubr.bf16.mxu0 0
      %4819 = vmatmul.mubr.bf16.gmra.mxu0 %v4770
      %v4820 = vpop.f32.mrf.mxu0
      %v4821 = vadd.f32 0.0, %v4820
      %v4822 = vpop.f32.mrf.mxu0
      %v4823 = vpop.f32.mrf.mxu0
      %v4824 = vadd.f32 0.0, %v4823
      %v4825 = vpop.f32.mrf.mxu0
      %4826 = vmatprep.mubr.bf16.mxu0 0
      %4827 = vmatmul.mubr.bf16.gmra.mxu0 %v4773
      %v4828 = vpop.f32.mrf.mxu0
      %v4829 = vadd.f32 0.0, %v4828
      %v4830 = vpop.f32.mrf.mxu0
      %v4831 = vpop.f32.mrf.mxu0
      %v4832 = vadd.f32 0.0, %v4831
      %v4833 = vpop.f32.mrf.mxu0
      %4834 = vmatprep.mubr.bf16.mxu0 0
      %4835 = vmatmul.mubr.bf16.gmra.mxu0 %v4776
      %v4836 = vpop.f32.mrf.mxu0
      %v4837 = vadd.f32 0.0, %v4836
      %v4838 = vpop.f32.mrf.mxu0
      %v4839 = vpop.f32.mrf.mxu0
      %v4840 = vadd.f32 0.0, %v4839
      %v4841 = vpop.f32.mrf.mxu0
      %4842 = vdwg.mxu0
      %v4843 = vadd.f32 %v4601, %v4813
      %v4844 = vadd.f32 %v4602, %v4816
      %v4845 = vadd.f32 %v4603, %v4821
      %v4846 = vadd.f32 %v4604, %v4824
      %v4847 = vadd.f32 %v4605, %v4829
      %v4848 = vadd.f32 %v4606, %v4832
      %v4849 = vadd.f32 %v4607, %v4837
      %v4850 = vadd.f32 %v4608, %v4840
      %v4851 = vld [vmem:[%s3] sm:$0x1]
      %v4853 = vlaneseq
      %v4854 = vshrl.u32 %v4853, 7
      %v4855 = vsub.s32 0, %v4854
      %v4856 = vrot.slane %v4851, %v4855
      %v4858 = vadd.f32 %v4843, %v4856
      %v4859 = vadd.f32 %v4844, %v4856
      %v4860 = vadd.f32 %v4845, %v4856
      %v4861 = vadd.f32 %v4846, %v4856
      %v4862 = vadd.f32 %v4847, %v4856
      %v4863 = vadd.f32 %v4848, %v4856
      %v4864 = vadd.f32 %v4849, %v4856
      %v4865 = vadd.f32 %v4850, %v4856
      %4866 = vadd.xlane.f32.xlu0 %v4858
      %v4867 = vpop.xlane.xlu0 %4866
      %4868 = vadd.xlane.f32.xlu0 %v4859
      %v4869 = vpop.xlane.xlu0 %4868
      %4870 = vadd.xlane.f32.xlu0 %v4860
      %v4871 = vpop.xlane.xlu0 %4870
      %4872 = vadd.xlane.f32.xlu0 %v4861
      %v4873 = vpop.xlane.xlu0 %4872
      %4874 = vadd.xlane.f32.xlu0 %v4862
      %v4875 = vpop.xlane.xlu0 %4874
      %4876 = vadd.xlane.f32.xlu0 %v4863
      %v4877 = vpop.xlane.xlu0 %4876
      %4878 = vadd.xlane.f32.xlu0 %v4864
      %v4879 = vpop.xlane.xlu0 %4878
      %4880 = vadd.xlane.f32.xlu0 %v4865
      %v4881 = vpop.xlane.xlu0 %4880
      %v4882 = vmul.f32 %v4867, 0.020833334
      %v4883 = vmul.f32 %v4869, 0.020833334
      %v4884 = vmul.f32 %v4871, 0.020833334
      %v4885 = vmul.f32 %v4873, 0.020833334
      %v4886 = vmul.f32 %v4875, 0.020833334
      %v4887 = vmul.f32 %v4877, 0.020833334
      %v4888 = vmul.f32 %v4879, 0.020833334
      %v4889 = vmul.f32 %v4881, 0.020833334
      %v4890 = vmul.f32 %v4858, %v4858
      %v4891 = vmul.f32 %v4859, %v4859
      %v4892 = vmul.f32 %v4860, %v4860
      %v4893 = vmul.f32 %v4861, %v4861
      %v4894 = vmul.f32 %v4862, %v4862
      %v4895 = vmul.f32 %v4863, %v4863
      %v4896 = vmul.f32 %v4864, %v4864
      %v4897 = vmul.f32 %v4865, %v4865
      %4898 = vadd.xlane.f32.xlu0 %v4890
      %v4899 = vpop.xlane.xlu0 %4898
      %4900 = vadd.xlane.f32.xlu0 %v4891
      %v4901 = vpop.xlane.xlu0 %4900
      %4902 = vadd.xlane.f32.xlu0 %v4892
      %v4903 = vpop.xlane.xlu0 %4902
      %4904 = vadd.xlane.f32.xlu0 %v4893
      %v4905 = vpop.xlane.xlu0 %4904
      %4906 = vadd.xlane.f32.xlu0 %v4894
      %v4907 = vpop.xlane.xlu0 %4906
      %4908 = vadd.xlane.f32.xlu0 %v4895
      %v4909 = vpop.xlane.xlu0 %4908
      %4910 = vadd.xlane.f32.xlu0 %v4896
      %v4911 = vpop.xlane.xlu0 %4910
      %4912 = vadd.xlane.f32.xlu0 %v4897
      %v4913 = vpop.xlane.xlu0 %4912
      %v4914 = vmul.f32 %v4899, 0.020833334
      %v4915 = vmul.f32 %v4901, 0.020833334
      %v4916 = vmul.f32 %v4903, 0.020833334
      %v4917 = vmul.f32 %v4905, 0.020833334
      %v4918 = vmul.f32 %v4907, 0.020833334
      %v4919 = vmul.f32 %v4909, 0.020833334
      %v4920 = vmul.f32 %v4911, 0.020833334
      %v4921 = vmul.f32 %v4913, 0.020833334
      %v4922 = vmul.f32 %v4882, %v4882
      %v4923 = vmul.f32 %v4883, %v4883
      %v4924 = vmul.f32 %v4884, %v4884
      %v4925 = vmul.f32 %v4885, %v4885
      %v4926 = vmul.f32 %v4886, %v4886
      %v4927 = vmul.f32 %v4887, %v4887
      %v4928 = vmul.f32 %v4888, %v4888
      %v4929 = vmul.f32 %v4889, %v4889
      %v4930 = vsub.f32 %v4914, %v4922
      %v4931 = vsub.f32 %v4915, %v4923
      %v4932 = vsub.f32 %v4916, %v4924
      %v4933 = vsub.f32 %v4917, %v4925
      %v4934 = vsub.f32 %v4918, %v4926
      %v4935 = vsub.f32 %v4919, %v4927
      %v4936 = vsub.f32 %v4920, %v4928
      %v4937 = vsub.f32 %v4921, %v4929
      %v4938 = vmax.f32 %v4930, 0.0
      %v4939 = vmax.f32 %v4931, 0.0
      %v4940 = vmax.f32 %v4932, 0.0
      %v4941 = vmax.f32 %v4933, 0.0
      %v4942 = vmax.f32 %v4934, 0.0
      %v4943 = vmax.f32 %v4935, 0.0
      %v4944 = vmax.f32 %v4936, 0.0
      %v4945 = vmax.f32 %v4937, 0.0
      %v4946 = vsub.f32 %v4858, %v4882
      %v4947 = vsub.f32 %v4859, %v4883
      %v4948 = vsub.f32 %v4860, %v4884
      %v4949 = vsub.f32 %v4861, %v4885
      %v4950 = vsub.f32 %v4862, %v4886
      %v4951 = vsub.f32 %v4863, %v4887
      %v4952 = vsub.f32 %v4864, %v4888
      %v4953 = vsub.f32 %v4865, %v4889
      %v4954 = vadd.f32 %v4938, 1e-05
      %v4955 = vadd.f32 %v4939, 1e-05
      %v4956 = vadd.f32 %v4940, 1e-05
      %v4957 = vadd.f32 %v4941, 1e-05
      %v4958 = vadd.f32 %v4942, 1e-05
      %v4959 = vadd.f32 %v4943, 1e-05
      %v4960 = vadd.f32 %v4944, 1e-05
      %v4961 = vadd.f32 %v4945, 1e-05
      %v4962 = vrsqrt.pop %v4954
      %v4963 = vrsqrt.pop %v4955
      %v4964 = vrsqrt.pop %v4956
      %v4965 = vrsqrt.pop %v4957
      %v4966 = vrsqrt.pop %v4958
      %v4967 = vrsqrt.pop %v4959
      %v4968 = vrsqrt.pop %v4960
      %v4969 = vrsqrt.pop %v4961
      %v4970 = vmul.f32 %v4946, %v4962
      %v4971 = vmul.f32 %v4947, %v4963
      %v4972 = vmul.f32 %v4948, %v4964
      %v4973 = vmul.f32 %v4949, %v4965
      %v4974 = vmul.f32 %v4950, %v4966
      %v4975 = vmul.f32 %v4951, %v4967
      %v4976 = vmul.f32 %v4952, %v4968
      %v4977 = vmul.f32 %v4953, %v4969
      %v4978 = vld [vmem:[%s4] sm:$0x1]
      %v4980 = vlaneseq
      %v4981 = vshrl.u32 %v4980, 7
      %v4982 = vsub.s32 0, %v4981
      %v4983 = vrot.slane %v4978, %v4982
      %v4985 = vmul.f32 %v4970, %v4983
      %v4986 = vmul.f32 %v4971, %v4983
      %v4987 = vmul.f32 %v4972, %v4983
      %v4988 = vmul.f32 %v4973, %v4983
      %v4989 = vmul.f32 %v4974, %v4983
      %v4990 = vmul.f32 %v4975, %v4983
      %v4991 = vmul.f32 %v4976, %v4983
      %v4992 = vmul.f32 %v4977, %v4983
      %v4993 = vld [vmem:[%s5] sm:$0x1]
      %v4995 = vlaneseq
      %v4996 = vshrl.u32 %v4995, 7
      %v4997 = vsub.s32 0, %v4996
      %v4998 = vrot.slane %v4993, %v4997
      %v5000 = vadd.f32 %v4985, %v4998
      %v5001 = vadd.f32 %v4986, %v4998
      %v5002 = vadd.f32 %v4987, %v4998
      %v5003 = vadd.f32 %v4988, %v4998
      %v5004 = vadd.f32 %v4989, %v4998
      %v5005 = vadd.f32 %v4990, %v4998
      %v5006 = vadd.f32 %v4991, %v4998
      %v5007 = vadd.f32 %v4992, %v4998
      %v5008 = vpack.c.bf16 %v5001, %v5000
      %v5009 = vpack.c.bf16 %v5003, %v5002
      %v5010 = vpack.c.bf16 %v5005, %v5004
      %v5011 = vpack.c.bf16 %v5007, %v5006
      %v5016 = vunpack.c.l.b16 %v5008
      %v5017 = vunpack.c.h.b16 %v5008
      %v5018 = vunpack.c.l.b16 %v5009
      %v5019 = vunpack.c.h.b16 %v5009
      %v5020 = vunpack.c.l.b16 %v5010
      %v5021 = vunpack.c.h.b16 %v5010
      %v5022 = vunpack.c.l.b16 %v5011
      %v5023 = vunpack.c.h.b16 %v5011
      %v5024 = vpack.c.b16 %v5016, %v5016
      %v5025 = vpack.c.b16 %v5017, %v5017
      %v5026 = vpack.c.b16 %v5018, %v5018
      %v5027 = vpack.c.b16 %v5019, %v5019
      %v5028 = vpack.c.b16 %v5020, %v5020
      %v5029 = vpack.c.b16 %v5021, %v5021
      %v5030 = vpack.c.b16 %v5022, %v5022
      %v5031 = vpack.c.b16 %v5023, %v5023
      %vm5040 = vcmask 388096
      %5041 = vst.msk [vmem:[%s328] sm:$0xf] %vm5040, %v5024
      %5042 = vst.msk [vmem:[%s328 + $0x4] sm:$0xf] %vm5040, %v5025
      %5043 = vst.msk [vmem:[%s328 + $0x8] sm:$0xf] %vm5040, %v5026
      %5044 = vst.msk [vmem:[%s328 + $0xc] sm:$0xf] %vm5040, %v5027
      %5045 = vst.msk [vmem:[%s328 + $0x10] sm:$0xf] %vm5040, %v5028
      %5046 = vst.msk [vmem:[%s328 + $0x14] sm:$0xf] %vm5040, %v5029
      %5047 = vst.msk [vmem:[%s328 + $0x18] sm:$0xf] %vm5040, %v5030
      %5048 = vst.msk [vmem:[%s328 + $0x1c] sm:$0xf] %vm5040, %v5031
      %p5049 = scmp.lt.s32.totalorder %s21, 1
      %s5050 = scalar_select %p5049, %s21, 1
      %p5051 = scmp.lt.s32.totalorder %s22, 7
      %s5052 = scalar_select %p5051, %s22, 7
      %s5053 = smul.addr %s5052, 8
      %s5054 = smul.addr %s5050, 64
      %s5055 = sadd.s32 %s5053, %s5054
      %s5056 = smul.addr %s5055, 4
      %s5057 = scalar_lea.vmem %s6, %s5056
      // Predicated region
      $region45: #{a_call__.1} parent=43 // pred_check
        %p5058 = pneg %p191
      $region46: #{a_call__.1} parent=43 // pred_check_branch
        %5060 = sbr.rel (%p5058) target = $region48
      $region47: #{a_call__.1} parent=43 // pred_region
        _
      $region48: #{a_call__.1} parent=43 // pred_fallthru
        _
    $region44: #{a_call__.1} parent=5 // pred_fallthru
      _
    %p5061 = scmp.le.s32.totalorder 2, %s12
    // Predicated region
    $region49: #{a_call__.1} parent=5 // pred_check
      %p5062 = pneg %p5061
    $region50: #{a_call__.1} parent=5 // pred_check_branch
      %5064 = sbr.rel (%p5062) target = $region52
    $region51: #{a_call__.1} parent=5 // pred_region
      %s5065 = ssub.s32 %s12, 2
      // Predicated region
      $region53: #{a_call__.1} parent=51 // pred_check
        %p5066 = pneg %p197
      $region54: #{a_call__.1} parent=51 // pred_check_branch
        %5068 = sbr.rel (%p5066) target = $region56
      $region55: #{a_call__.1} parent=51 // pred_region
        %p5069 = scmp.lt.s32.totalorder %s23, 1
        %s5070 = scalar_select %p5069, %s23, 1
        %p5071 = scmp.lt.s32.totalorder %s24, 7
        %s5072 = scalar_select %p5071, %s24, 7
        %s5073 = smul.addr %s5072, 8
        %s5074 = smul.addr %s5070, 64
        %s5075 = sadd.s32 %s5073, %s5074
        %s5076 = smul.addr %s5075, 4
        %s5077 = scalar_lea.vmem %s6, %s5076
      $region56: #{a_call__.1} parent=51 // pred_fallthru
        _
    $region52: #{a_call__.1} parent=5 // pred_fallthru
      _
  $region6: #{a_call__.1} parent=0 // loop_footer
    %s16 = sadd.s32 1, %s12
  $region7: #{a_call__.1} parent=0 // loop_footer_branch
    %11 = sbr.rel target = $region3
  $region8: #{a_call__.1} parent=0 // loop_exit
    _

</llo_original>
